<compile_context>
chip_gen: v6e
topology: v6e:2x2x1
jax: 0.10.0
libtpu: 0.0.40
codegen_flags: <defaults>
</compile_context>

<pallas_src>
import functools
import math

import jax
import jax.numpy as jnp
from jax.experimental import pallas as pl
from jax.experimental.pallas import tpu as pltpu


# ---------------------------------------------------------------------------
# Helpers
# ---------------------------------------------------------------------------
def _layernorm(x, g, b, eps):
    mean = jnp.mean(x, axis=-1, keepdims=True)
    var = jnp.mean(jnp.square(x - mean), axis=-1, keepdims=True)
    return (x - mean) * jax.lax.rsqrt(var + eps) * g + b


# ---------------------------------------------------------------------------
# Kernel 1: patch embedding (conv folded into proj1) + cls token + pos embed
# ---------------------------------------------------------------------------
def _patch_embed_kernel(x_ref, w1_ref, b1_ref, w2_ref, b2_ref, addin_ref,
                        o_ref):
    B, S, E = o_ref.shape
    bf16 = jnp.bfloat16

    # proj MLP (conv is already folded into w1/b1). bf16 MXU, f32 accumulate.
    h1 = jnp.maximum(
        jnp.dot(x_ref[...].astype(bf16), w1_ref[...],
                preferred_element_type=jnp.float32) + b1_ref[...], 0.0)
    emb = jnp.dot(h1.astype(bf16), w2_ref[...],
                  preferred_element_type=jnp.float32) + b2_ref[...]   # (B*S, E)

    # Row b*S is a dummy (zero-input) row: mask it out and add
    # addin = [cls_token + pos[0] ; pos[1..T]] in one shot -> single dense store.
    row = jax.lax.broadcasted_iota(jnp.int32, (B * S, 1), 0)
    keep = (row % S != 0).astype(jnp.float32)
    o_ref[...] = (emb * keep).reshape(B, S, E) + addin_ref[...]


def patch_embed_pos(x, prep):
    B, n_inputs, T, ch, hh, ww = x.shape
    D = ch * hh * ww
    K = n_inputs * D
    S = T + 1
    Hd = prep["pe_w1"].shape[1]
    E = prep["pe_w2"].shape[1]

    # One XLA-side transpose + zero cls-row insertion so the kernel sees
    # exactly S rows per batch element (tile-aligned reshapes, dense store).
    xr = jnp.transpose(x, (0, 2, 1, 3, 4, 5)).reshape(B, T, K).astype(jnp.float32)
    xp = jnp.concatenate([jnp.zeros((B, 1, K), jnp.float32), xr],
                         axis=1).reshape(B * S, K)

    def full(shape):
        n = len(shape)
        return pl.BlockSpec(shape, lambda i: (0,) * n)

    return pl.pallas_call(
        _patch_embed_kernel,
        grid=(1,),
        in_specs=[
            full((B * S, K)),      # x rows (with dummy cls rows)
            full((K, Hd)),         # conv-folded proj1 weight (bf16)
            full((1, Hd)),         # conv-folded proj1 bias
            full((Hd, E)),         # proj2 weight (bf16)
            full((1, E)),          # proj2 bias
            full((1, S, E)),       # [cls+pos0 ; pos_1..T]
        ],
        out_specs=full((B, S, E)),
        out_shape=jax.ShapeDtypeStruct((B, S, E), jnp.float32),
    )(xp, prep["pe_w1"], prep["pe_b1"], prep["pe_w2"], prep["pe_b2"],
      prep["addin"])


# ---------------------------------------------------------------------------
# Kernel 2: fused encoder stack (all layers on one grid axis) + classifier
# ---------------------------------------------------------------------------
def _encoder_stack_kernel(seq_ref, wqkv_ref, bqkv_ref, wo_ref, bo_ref,
                          ln1g_ref, ln1b_ref, w1_ref, b1_ref, w2_ref, b2_ref,
                          ln2g_ref, ln2b_ref, clsw_ref, clsb_ref,
                          o_ref, x_scr, *, B, S, nhead, num_layers, eps):
    l = pl.program_id(0)
    E = seq_ref.shape[-1]
    Dh = E // nhead
    scale = 1.0 / math.sqrt(Dh)
    bf16 = jnp.bfloat16

    # Load the initial sequence into the VMEM-resident activation once.
    @pl.when(l == 0)
    def _():
        x_scr[...] = seq_ref[...].reshape(B * S, E)

    xf = x_scr[...]                                       # (B*S, E) f32

    # --- QKV projection (bf16 MXU, f32 accumulate) ---------------------------
    qkv = jnp.dot(xf.astype(bf16), wqkv_ref[...],
                  preferred_element_type=jnp.float32) + bqkv_ref[...]   # (B*S, 3E)

    # --- multi-head attention (per-head unroll, single-batch-dim einsums) ----
    head_outs = []
    for h in range(nhead):
        qh = qkv[:, h * Dh:(h + 1) * Dh].reshape(B, S, Dh)
        kh = qkv[:, E + h * Dh:E + (h + 1) * Dh].reshape(B, S, Dh)
        vh = qkv[:, 2 * E + h * Dh:2 * E + (h + 1) * Dh].reshape(B, S, Dh)

        s = jnp.einsum('bqd,bkd->bqk', qh.astype(bf16), kh.astype(bf16),
                       preferred_element_type=jnp.float32) * scale      # (B,S,S)
        s = s - jnp.max(s, axis=-1, keepdims=True)
        p = jnp.exp(s)
        p = p / jnp.sum(p, axis=-1, keepdims=True)        # exact division (f32)
        head_outs.append(
            jnp.einsum('bqk,bkd->bqd', p.astype(bf16), vh.astype(bf16),
                       preferred_element_type=jnp.float32))
    attn = jnp.concatenate(head_outs, axis=-1).reshape(B * S, E)

    # --- output projection + residual + LN1 ----------------------------------
    attn = jnp.dot(attn.astype(bf16), wo_ref[...],
                   preferred_element_type=jnp.float32) + bo_ref[...]
    x1 = _layernorm(xf + attn, ln1g_ref[...], ln1b_ref[...], eps)

    # --- FFN (intermediate stays in VMEM) -------------------------------------
    ff = jnp.maximum(
        jnp.dot(x1.astype(bf16), w1_ref[...],
                preferred_element_type=jnp.float32) + b1_ref[...], 0.0)
    ff = jnp.dot(ff.astype(bf16), w2_ref[...],
                 preferred_element_type=jnp.float32) + b2_ref[...]
    x2 = _layernorm(x1 + ff, ln2g_ref[...], ln2b_ref[...], eps)

    # Carry the activation to the next layer entirely in VMEM.
    x_scr[...] = x2

    # --- classifier head folded into the last layer's epilogue ---------------
    @pl.when(l == num_layers - 1)
    def _():
        cls_rows = x2.reshape(B, S, E)[:, 0, :]           # (B, E)
        o_ref[...] = jnp.dot(cls_rows.astype(bf16), clsw_ref[...],
                             preferred_element_type=jnp.float32) + clsb_ref[...]


def transformer_encoder_and_head(seq, prep, *, nhead, eps=1e-5):
    B, S, E = seq.shape
    L = prep["wqkv"].shape[0]
    F = prep["w1"].shape[-1]
    C = prep["cls_w"].shape[-1]

    def resident(shape):
        n = len(shape)
        return pl.BlockSpec(shape, lambda l: (0,) * n)

    def per_layer(shape):          # leading L dim squeezed, indexed by layer
        n = len(shape)
        return pl.BlockSpec((None,) + shape, lambda l: (l,) + (0,) * n)

    kernel = functools.partial(_encoder_stack_kernel, B=B, S=S, nhead=nhead,
                               num_layers=L, eps=eps)
    return pl.pallas_call(
        kernel,
        grid=(L,),
        in_specs=[
            resident((B, S, E)),          # initial sequence
            per_layer((E, 3 * E)),        # in_proj weight (bf16)
            per_layer((1, 3 * E)),        # in_proj bias
            per_layer((E, E)),            # out_proj weight (bf16)
            per_layer((1, E)),            # out_proj bias
            per_layer((1, E)),            # ln1 gamma
            per_layer((1, E)),            # ln1 beta
            per_layer((E, F)),            # ff1 weight (bf16)
            per_layer((1, F)),            # ff1 bias
            per_layer((F, E)),            # ff2 weight (bf16)
            per_layer((1, E)),            # ff2 bias
            per_layer((1, E)),            # ln2 gamma
            per_layer((1, E)),            # ln2 beta
            resident((E, C)),             # classifier weight (bf16)
            resident((1, C)),             # classifier bias
        ],
        out_specs=resident((B, C)),
        out_shape=jax.ShapeDtypeStruct((B, C), jnp.float32),
        scratch_shapes=[pltpu.VMEM((B * S, E), jnp.float32)],
        compiler_params=pltpu.CompilerParams(
            dimension_semantics=("arbitrary",),      # layer axis is sequential
            vmem_limit_bytes=48 * 1024 * 1024),
    )(seq, prep["wqkv"], prep["bqkv"], prep["wo"], prep["bo"],
      prep["ln1g"], prep["ln1b"], prep["w1"], prep["b1"],
      prep["w2"], prep["b2"], prep["ln2g"], prep["ln2b"],
      prep["cls_w"], prep["cls_b"])


# ---------------------------------------------------------------------------
# Model forward (EndToEnd with backbone being a type => out2 = x)
# ---------------------------------------------------------------------------
def end_to_end_forward(prep, x, *, nhead):
    seq = patch_embed_pos(x, prep)                         # (B, T+1, E)
    return transformer_encoder_and_head(seq, prep, nhead=nhead)


# ---------------------------------------------------------------------------
# Parameter preparation: conv fold, bf16 pre-cast, per-layer weight stacking.
# Done ONCE outside the jitted forward (no per-call f32->bf16 conversions).
# ---------------------------------------------------------------------------
def prepare_params(params):
    bf16 = jnp.bfloat16
    f32 = jnp.float32
    n_inputs = params["conv_w"].shape[0]
    D, Hd = params["proj1_w"].shape
    E = params["proj2_w"].shape[1]
    pos = params["pos_embed"].astype(f32)                  # (1, T+1, E)

    # Fold the 1x1x1 Conv3d (scalar per input) into the first proj matmul.
    w1_eff = (params["conv_w"].reshape(n_inputs, 1, 1) *
              params["proj1_w"][None, :, :]).reshape(n_inputs * D, Hd)
    b1_eff = params["proj1_b"] + params["conv_b"][0] * jnp.sum(params["proj1_w"],
                                                               axis=0)
    # Additive term for the full sequence: [cls_token + pos[0] ; pos[1..T]].
    addin = jnp.concatenate(
        [params["cls_token"].astype(f32) + pos[:, 0:1, :], pos[:, 1:, :]], axis=1)

    prep = {
        "pe_w1": w1_eff.astype(bf16),
        "pe_b1": b1_eff.reshape(1, Hd).astype(f32),
        "pe_w2": params["proj2_w"].astype(bf16),
        "pe_b2": params["proj2_b"].reshape(1, E).astype(f32),
        "addin": addin,
        "cls_w": params["cls_w"].astype(bf16),
        "cls_b": params["cls_b"].reshape(1, -1).astype(f32),
    }
    layers = params["layers"]
    prep["wqkv"] = jnp.stack([lp["in_proj_w"] for lp in layers]).astype(bf16)
    prep["bqkv"] = jnp.stack([lp["in_proj_b"].reshape(1, -1) for lp in layers]).astype(f32)
    prep["wo"] = jnp.stack([lp["out_proj_w"] for lp in layers]).astype(bf16)
    prep["bo"] = jnp.stack([lp["out_proj_b"].reshape(1, -1) for lp in layers]).astype(f32)
    prep["ln1g"] = jnp.stack([lp["ln1_g"].reshape(1, -1) for lp in layers]).astype(f32)
    prep["ln1b"] = jnp.stack([lp["ln1_b"].reshape(1, -1) for lp in layers]).astype(f32)
    prep["w1"] = jnp.stack([lp["ff1_w"] for lp in layers]).astype(bf16)
    prep["b1"] = jnp.stack([lp["ff1_b"].reshape(1, -1) for lp in layers]).astype(f32)
    prep["w2"] = jnp.stack([lp["ff2_w"] for lp in layers]).astype(bf16)
    prep["b2"] = jnp.stack([lp["ff2_b"].reshape(1, -1) for lp in layers]).astype(f32)
    prep["ln2g"] = jnp.stack([lp["ln2_g"].reshape(1, -1) for lp in layers]).astype(f32)
    prep["ln2b"] = jnp.stack([lp["ln2_b"].reshape(1, -1) for lp in layers]).astype(f32)
    return prep


# ---------------------------------------------------------------------------
# Deterministic synthetic parameter init (shapes follow the PyTorch __init__)
# ---------------------------------------------------------------------------
def init_params(key, *, n_inputs, input_dim, embed_dim, nhead, num_layers,
                num_classes, seq_len, dim_ff=2048):
    keys = iter(jax.random.split(key, 16 + 16 * num_layers))

    def u(shape, scale=0.05):
        return jax.random.uniform(next(keys), shape, jnp.float32, -scale, scale)

    val = math.sqrt(6.0 / float(embed_dim))
    p = {
        "conv_w": u((n_inputs,)),
        "conv_b": u((1,)),
        "proj1_w": u((input_dim, input_dim // 4)),
        "proj1_b": u((input_dim // 4,)),
        "proj2_w": u((input_dim // 4, embed_dim)),
        "proj2_b": u((embed_dim,)),
        "pos_embed": jax.random.uniform(next(keys), (1, seq_len + 1, embed_dim),
                                        jnp.float32, -val, val),
        "cls_token": jax.random.uniform(next(keys), (1, 1, embed_dim),
                                        jnp.float32, -val, val),
        "cls_w": u((embed_dim, num_classes)),
        "cls_b": u((num_classes,)),
        "layers": [],
    }
    for _ in range(num_layers):
        p["layers"].append({
            "in_proj_w": u((embed_dim, 3 * embed_dim)),
            "in_proj_b": u((3 * embed_dim,)),
            "out_proj_w": u((embed_dim, embed_dim)),
            "out_proj_b": u((embed_dim,)),
            "ln1_g": jnp.ones((embed_dim,), jnp.float32),
            "ln1_b": jnp.zeros((embed_dim,), jnp.float32),
            "ff1_w": u((embed_dim, dim_ff)),
            "ff1_b": u((dim_ff,)),
            "ff2_w": u((dim_ff, embed_dim)),
            "ff2_b": u((embed_dim,)),
            "ln2_g": jnp.ones((embed_dim,), jnp.float32),
            "ln2_b": jnp.zeros((embed_dim,), jnp.float32),
        })
    return p


# ---------------------------------------------------------------------------
# Pure-JAX (f32, XLA) reference of the same forward, for a tolerance check.
# ---------------------------------------------------------------------------
def reference_forward(params, x, *, nhead, eps=1e-5):
    B, n_inputs, T, ch, hh, ww = x.shape
    D = ch * hh * ww
    xr = jnp.transpose(x, (0, 2, 1, 3, 4, 5)).reshape(B, T, n_inputs, D)
    xc = jnp.einsum('btid,i->btd', xr, params["conv_w"]) + params["conv_b"][0]
    h1 = jax.nn.relu(xc @ params["proj1_w"] + params["proj1_b"])
    emb = h1 @ params["proj2_w"] + params["proj2_b"]                 # (B, T, E)
    E = emb.shape[-1]
    Dh = E // nhead
    cls = jnp.broadcast_to(params["cls_token"], (B, 1, E))
    seq = jnp.concatenate([cls, emb], axis=1) + params["pos_embed"][:, :T + 1, :]

    def ln(v, g, b):
        m = v.mean(-1, keepdims=True)
        va = ((v - m) ** 2).mean(-1, keepdims=True)
        return (v - m) / jnp.sqrt(va + eps) * g + b

    for lp in params["layers"]:
        qkv = seq @ lp["in_proj_w"] + lp["in_proj_b"]
        q, k, v = jnp.split(qkv, 3, axis=-1)
        q = q.reshape(B, T + 1, nhead, Dh).transpose(0, 2, 1, 3)
        k = k.reshape(B, T + 1, nhead, Dh).transpose(0, 2, 1, 3)
        v = v.reshape(B, T + 1, nhead, Dh).transpose(0, 2, 1, 3)
        s = jnp.einsum('bhqd,bhkd->bhqk', q, k) / math.sqrt(Dh)
        p = jax.nn.softmax(s, axis=-1)
        o = jnp.einsum('bhqk,bhkd->bhqd', p, v).transpose(0, 2, 1, 3)
        o = o.reshape(B, T + 1, E)
        attn = o @ lp["out_proj_w"] + lp["out_proj_b"]
        seq = ln(seq + attn, lp["ln1_g"], lp["ln1_b"])
        ffn = jax.nn.relu(seq @ lp["ff1_w"] + lp["ff1_b"]) @ lp["ff2_w"] + lp["ff2_b"]
        seq = ln(seq + ffn, lp["ln2_g"], lp["ln2_b"])
    return seq[:, 0] @ params["cls_w"] + params["cls_b"]


if __name__ == "__main__":
    # x: (batch, inputs, time, ch, h, w); input_dim = ch*h*w; seq_len = time.
    batch, n_inputs, time_len, ch, hh, ww = 2, 3, 7, 2, 4, 4
    embed_dim, nhead, num_layers, num_classes = 32, 4, 2, 5
    input_dim = ch * hh * ww                     # 32

    key = jax.random.PRNGKey(0)
    kx, kp = jax.random.split(key)
    x = jax.random.normal(kx, (batch, n_inputs, time_len, ch, hh, ww), jnp.float32)
    params = init_params(kp, n_inputs=n_inputs, input_dim=input_dim,
                         embed_dim=embed_dim, nhead=nhead, num_layers=num_layers,
                         num_classes=num_classes, seq_len=time_len, dim_ff=2048)
    prep = prepare_params(params)    # conv fold + bf16 cast + layer stacking, once

    fwd = jax.jit(functools.partial(end_to_end_forward, nhead=nhead))
    logits = fwd(prep, x)
    jax.block_until_ready(logits)

    assert logits.shape == (batch, num_classes), logits.shape
    assert bool(jnp.all(jnp.isfinite(logits)))

    ref = reference_forward(params, x, nhead=nhead)
    err = float(jnp.max(jnp.abs(logits - ref)))
    assert err < 0.15, f"max abs error vs reference: {err}"

    print("KERNEL_OK")
</pallas_src>

<mosaic_0001>
module attributes {stable_mosaic.version = 11 : i64} {
  func.func @_patch_embed_kernel(%arg0: i32, %arg1: memref<16x96xf32, #tpu.memory_space<vmem>>, %arg2: memref<96x8xbf16, #tpu.memory_space<vmem>>, %arg3: memref<1x8xf32, #tpu.memory_space<vmem>>, %arg4: memref<8x32xbf16, #tpu.memory_space<vmem>>, %arg5: memref<1x32xf32, #tpu.memory_space<vmem>>, %arg6: memref<1x8x32xf32, #tpu.memory_space<vmem>>, %arg7: memref<2x8x32xf32, #tpu.memory_space<vmem>>) attributes {dimension_semantics = [#tpu.dimension_semantics<arbitrary>], iteration_bounds = array<i64: 1>, scalar_prefetch = 0 : i64, scratch_operands = 0 : i64, tpu.core_type = #tpu.core_type<tc>, window_params = [{pipeline_mode = #tpu.pipeline_mode<synchronous>, transform_indices = @transform_0, window_bounds = array<i64: 16, 96>}, {pipeline_mode = #tpu.pipeline_mode<synchronous>, transform_indices = @transform_1, window_bounds = array<i64: 96, 8>}, {pipeline_mode = #tpu.pipeline_mode<synchronous>, transform_indices = @transform_2, window_bounds = array<i64: 1, 8>}, {pipeline_mode = #tpu.pipeline_mode<synchronous>, transform_indices = @transform_3, window_bounds = array<i64: 8, 32>}, {pipeline_mode = #tpu.pipeline_mode<synchronous>, transform_indices = @transform_4, window_bounds = array<i64: 1, 32>}, {pipeline_mode = #tpu.pipeline_mode<synchronous>, transform_indices = @transform_5, window_bounds = array<i64: 1, 8, 32>}, {pipeline_mode = #tpu.pipeline_mode<synchronous>, transform_indices = @transform_6, window_bounds = array<i64: 2, 8, 32>}]} {
    %c0 = arith.constant 0 : index
    %c0_0 = arith.constant 0 : index
    %0 = vector.load %arg1[%c0, %c0_0] : memref<16x96xf32, #tpu.memory_space<vmem>>, vector<16x96xf32>
    %1 = arith.truncf %0 : vector<16x96xf32> to vector<16x96xbf16>
    %c0_1 = arith.constant 0 : index
    %c0_2 = arith.constant 0 : index
    %2 = vector.load %arg2[%c0_1, %c0_2] : memref<96x8xbf16, #tpu.memory_space<vmem>>, vector<96x8xbf16>
    %cst = arith.constant dense<0.000000e+00> : vector<16x8xf32>
    %3 = tpu.matmul %1, %2, %cst {dimension_numbers = #tpu.dot_dimension_numbers<[1], [0], [0], [1], [0, 0, 1, 1], [], []>} : vector<16x96xbf16>, vector<96x8xbf16>, vector<16x8xf32> -> vector<16x8xf32>
    %c0_3 = arith.constant 0 : index
    %c0_4 = arith.constant 0 : index
    %4 = vector.load %arg3[%c0_3, %c0_4] : memref<1x8xf32, #tpu.memory_space<vmem>>, vector<1x8xf32>
    %5 = vector.broadcast %4 : vector<1x8xf32> to vector<16x8xf32>
    %6 = arith.addf %3, %5 : vector<16x8xf32>
    %cst_5 = arith.constant 0.000000e+00 : f32
    %7 = vector.broadcast %cst_5 : f32 to vector<16x8xf32>
    %8 = arith.maximumf %6, %7 : vector<16x8xf32>
    %9 = arith.truncf %8 : vector<16x8xf32> to vector<16x8xbf16>
    %c0_6 = arith.constant 0 : index
    %c0_7 = arith.constant 0 : index
    %10 = vector.load %arg4[%c0_6, %c0_7] : memref<8x32xbf16, #tpu.memory_space<vmem>>, vector<8x32xbf16>
    %cst_8 = arith.constant dense<0.000000e+00> : vector<16x32xf32>
    %11 = tpu.matmul %9, %10, %cst_8 {dimension_numbers = #tpu.dot_dimension_numbers<[1], [0], [0], [1], [0, 0, 1, 1], [], []>} : vector<16x8xbf16>, vector<8x32xbf16>, vector<16x32xf32> -> vector<16x32xf32>
    %c0_9 = arith.constant 0 : index
    %c0_10 = arith.constant 0 : index
    %12 = vector.load %arg5[%c0_9, %c0_10] : memref<1x32xf32, #tpu.memory_space<vmem>>, vector<1x32xf32>
    %13 = vector.broadcast %12 : vector<1x32xf32> to vector<16x32xf32>
    %14 = arith.addf %11, %13 : vector<16x32xf32>
    %15 = tpu.iota {dimensions = array<i32: 0>} : vector<16x1xi32>
    %c8_i32 = arith.constant 8 : i32
    %c0_i32 = arith.constant 0 : i32
    %16 = arith.cmpi eq, %c8_i32, %c0_i32 : i32
    %c1_i32 = arith.constant 1 : i32
    %17 = arith.select %16, %c1_i32, %c8_i32 : i32
    %18 = vector.broadcast %17 : i32 to vector<16x1xi32>
    %19 = arith.remsi %15, %18 : vector<16x1xi32>
    %c0_i32_11 = arith.constant 0 : i32
    %20 = vector.broadcast %c0_i32_11 : i32 to vector<16x1xi32>
    %21 = arith.cmpi ne, %19, %20 : vector<16x1xi32>
    %c0_i32_12 = arith.constant 0 : i32
    %22 = vector.broadcast %c0_i32_12 : i32 to vector<16x1xi32>
    %23 = arith.cmpi slt, %19, %22 : vector<16x1xi32>
    %c0_i32_13 = arith.constant 0 : i32
    %24 = arith.cmpi slt, %17, %c0_i32_13 : i32
    %25 = vector.broadcast %24 : i1 to vector<16x1xi1>
    %26 = vector.broadcast %25 : vector<16x1xi1> to vector<16x1xi1>
    %27 = arith.xori %23, %26 : vector<16x1xi1>
    %28 = arith.andi %27, %21 : vector<16x1xi1>
    %29 = vector.broadcast %17 : i32 to vector<16x1xi32>
    %30 = arith.addi %19, %29 : vector<16x1xi32>
    %31 = arith.select %28, %30, %19 : vector<16x1xi1>, vector<16x1xi32>
    %c0_i32_14 = arith.constant 0 : i32
    %32 = vector.broadcast %c0_i32_14 : i32 to vector<16x1xi32>
    %33 = arith.cmpi ne, %31, %32 : vector<16x1xi32>
    %34 = arith.extui %33 : vector<16x1xi1> to vector<16x1xi32>
    %35 = arith.sitofp %34 : vector<16x1xi32> to vector<16x1xf32>
    %36 = vector.broadcast %35 : vector<16x1xf32> to vector<16x32xf32>
    %37 = arith.mulf %14, %36 : vector<16x32xf32>
    %38 = vector.shape_cast %37 : vector<16x32xf32> to vector<2x8x32xf32>
    %c0_15 = arith.constant 0 : index
    %c0_16 = arith.constant 0 : index
    %c0_17 = arith.constant 0 : index
    %39 = vector.load %arg6[%c0_15, %c0_16, %c0_17] : memref<1x8x32xf32, #tpu.memory_space<vmem>>, vector<1x8x32xf32>
    %40 = vector.broadcast %39 : vector<1x8x32xf32> to vector<2x8x32xf32>
    %41 = arith.addf %38, %40 : vector<2x8x32xf32>
    %c0_18 = arith.constant 0 : index
    %c0_19 = arith.constant 0 : index
    %c0_20 = arith.constant 0 : index
    %42 = vector.load %arg7[%c0_18, %c0_19, %c0_20] : memref<2x8x32xf32, #tpu.memory_space<vmem>>, vector<2x8x32xf32>
    tpu.vector_store %arg7[%c0_18, %c0_19, %c0_20], %41 {strides = array<i32>} : memref<2x8x32xf32, #tpu.memory_space<vmem>>, vector<2x8x32xf32>,
    return
  }
  func.func @transform_0(%arg0: i32) -> (i32, i32) {
    %c0_i32 = arith.constant 0 : i32
    %c0_i32_0 = arith.constant 0 : i32
    %c0_i32_1 = arith.constant 0 : i32
    return %c0_i32, %c0_i32_0 : i32, i32
  }
  func.func @transform_1(%arg0: i32) -> (i32, i32) {
    %c0_i32 = arith.constant 0 : i32
    %c0_i32_0 = arith.constant 0 : i32
    %c0_i32_1 = arith.constant 0 : i32
    return %c0_i32, %c0_i32_0 : i32, i32
  }
  func.func @transform_2(%arg0: i32) -> (i32, i32) {
    %c0_i32 = arith.constant 0 : i32
    %c0_i32_0 = arith.constant 0 : i32
    %c0_i32_1 = arith.constant 0 : i32
    return %c0_i32, %c0_i32_0 : i32, i32
  }
  func.func @transform_3(%arg0: i32) -> (i32, i32) {
    %c0_i32 = arith.constant 0 : i32
    %c0_i32_0 = arith.constant 0 : i32
    %c0_i32_1 = arith.constant 0 : i32
    return %c0_i32, %c0_i32_0 : i32, i32
  }
  func.func @transform_4(%arg0: i32) -> (i32, i32) {
    %c0_i32 = arith.constant 0 : i32
    %c0_i32_0 = arith.constant 0 : i32
    %c0_i32_1 = arith.constant 0 : i32
    return %c0_i32, %c0_i32_0 : i32, i32
  }
  func.func @transform_5(%arg0: i32) -> (i32, i32, i32) {
    %c0_i32 = arith.constant 0 : i32
    %c0_i32_0 = arith.constant 0 : i32
    %c0_i32_1 = arith.constant 0 : i32
    %c0_i32_2 = arith.constant 0 : i32
    return %c0_i32, %c0_i32_0, %c0_i32_1 : i32, i32, i32
  }
  func.func @transform_6(%arg0: i32) -> (i32, i32, i32) {
    %c0_i32 = arith.constant 0 : i32
    %c0_i32_0 = arith.constant 0 : i32
    %c0_i32_1 = arith.constant 0 : i32
    %c0_i32_2 = arith.constant 0 : i32
    return %c0_i32, %c0_i32_0, %c0_i32_1 : i32, i32, i32
  }
}

module attributes {stable_mosaic.version = 11 : i64} {
  func.func @_encoder_stack_kernel(%arg0: i32, %arg1: memref<2x8x32xf32, #tpu.memory_space<vmem>>, %arg2: memref<1x32x96xbf16, #tpu.memory_space<vmem>>, %arg3: memref<1x1x96xf32, #tpu.memory_space<vmem>>, %arg4: memref<1x32x32xbf16, #tpu.memory_space<vmem>>, %arg5: memref<1x1x32xf32, #tpu.memory_space<vmem>>, %arg6: memref<1x1x32xf32, #tpu.memory_space<vmem>>, %arg7: memref<1x1x32xf32, #tpu.memory_space<vmem>>, %arg8: memref<1x32x2048xbf16, #tpu.memory_space<vmem>>, %arg9: memref<1x1x2048xf32, #tpu.memory_space<vmem>>, %arg10: memref<1x2048x32xbf16, #tpu.memory_space<vmem>>, %arg11: memref<1x1x32xf32, #tpu.memory_space<vmem>>, %arg12: memref<1x1x32xf32, #tpu.memory_space<vmem>>, %arg13: memref<1x1x32xf32, #tpu.memory_space<vmem>>, %arg14: memref<32x5xbf16, #tpu.memory_space<vmem>>, %arg15: memref<1x5xf32, #tpu.memory_space<vmem>>, %arg16: memref<2x5xf32, #tpu.memory_space<vmem>>, %arg17: memref<16x32xf32, #tpu.memory_space<vmem>>) attributes {dimension_semantics = [#tpu.dimension_semantics<arbitrary>], iteration_bounds = array<i64: 2>, scalar_prefetch = 0 : i64, scratch_operands = 1 : i64, tpu.core_type = #tpu.core_type<tc>, window_params = [{pipeline_mode = #tpu.pipeline_mode<synchronous>, transform_indices = @transform_0, window_bounds = array<i64: 2, 8, 32>}, {transform_indices = @transform_1, window_bounds = array<i64: 1, 32, 96>}, {transform_indices = @transform_2, window_bounds = array<i64: 1, 1, 96>}, {transform_indices = @transform_3, window_bounds = array<i64: 1, 32, 32>}, {transform_indices = @transform_4, window_bounds = array<i64: 1, 1, 32>}, {transform_indices = @transform_5, window_bounds = array<i64: 1, 1, 32>}, {transform_indices = @transform_6, window_bounds = array<i64: 1, 1, 32>}, {transform_indices = @transform_7, window_bounds = array<i64: 1, 32, 2048>}, {transform_indices = @transform_8, window_bounds = array<i64: 1, 1, 2048>}, {transform_indices = @transform_9, window_bounds = array<i64: 1, 2048, 32>}, {transform_indices = @transform_10, window_bounds = array<i64: 1, 1, 32>}, {transform_indices = @transform_11, window_bounds = array<i64: 1, 1, 32>}, {transform_indices = @transform_12, window_bounds = array<i64: 1, 1, 32>}, {pipeline_mode = #tpu.pipeline_mode<synchronous>, transform_indices = @transform_13, window_bounds = array<i64: 32, 5>}, {pipeline_mode = #tpu.pipeline_mode<synchronous>, transform_indices = @transform_14, window_bounds = array<i64: 1, 5>}, {pipeline_mode = #tpu.pipeline_mode<synchronous>, transform_indices = @transform_15, window_bounds = array<i64: 2, 5>}]} {
    %c0_i32 = arith.constant 0 : i32
    %0 = arith.cmpi eq, %arg0, %c0_i32 : i32
    %1 = arith.extui %0 : i1 to i32
    %c0_i32_0 = arith.constant 0 : i32
    %2 = arith.cmpi ne, %1, %c0_i32_0 : i32
    scf.if %2 {
      %c0_75 = arith.constant 0 : index
      %c0_76 = arith.constant 0 : index
      %c0_77 = arith.constant 0 : index
      %190 = vector.load %arg1[%c0_75, %c0_76, %c0_77] : memref<2x8x32xf32, #tpu.memory_space<vmem>>, vector<2x8x32xf32>
      %191 = vector.shape_cast %190 : vector<2x8x32xf32> to vector<16x32xf32>
      %c0_78 = arith.constant 0 : index
      %c0_79 = arith.constant 0 : index
      %192 = vector.load %arg17[%c0_78, %c0_79] : memref<16x32xf32, #tpu.memory_space<vmem>>, vector<16x32xf32>
      tpu.vector_store %arg17[%c0_78, %c0_79], %191 {strides = array<i32>} : memref<16x32xf32, #tpu.memory_space<vmem>>, vector<16x32xf32>,
    } else {
    }
    %c0 = arith.constant 0 : index
    %c0_1 = arith.constant 0 : index
    %3 = vector.load %arg17[%c0, %c0_1] : memref<16x32xf32, #tpu.memory_space<vmem>>, vector<16x32xf32>
    %4 = arith.truncf %3 : vector<16x32xf32> to vector<16x32xbf16>
    %c0_2 = arith.constant 0 : index
    %c0_3 = arith.constant 0 : index
    %c0_4 = arith.constant 0 : index
    %5 = vector.load %arg2[%c0_2, %c0_3, %c0_4] : memref<1x32x96xbf16, #tpu.memory_space<vmem>>, vector<1x32x96xbf16>
    %6 = vector.shape_cast %5 : vector<1x32x96xbf16> to vector<32x96xbf16>
    %cst = arith.constant dense<0.000000e+00> : vector<16x96xf32>
    %7 = tpu.matmul %4, %6, %cst {dimension_numbers = #tpu.dot_dimension_numbers<[1], [0], [0], [1], [0, 0, 1, 1], [], []>} : vector<16x32xbf16>, vector<32x96xbf16>, vector<16x96xf32> -> vector<16x96xf32>
    %c0_5 = arith.constant 0 : index
    %c0_6 = arith.constant 0 : index
    %c0_7 = arith.constant 0 : index
    %8 = vector.load %arg3[%c0_5, %c0_6, %c0_7] : memref<1x1x96xf32, #tpu.memory_space<vmem>>, vector<1x1x96xf32>
    %9 = vector.shape_cast %8 : vector<1x1x96xf32> to vector<1x96xf32>
    %10 = vector.broadcast %9 : vector<1x96xf32> to vector<16x96xf32>
    %11 = arith.addf %7, %10 : vector<16x96xf32>
    %12 = vector.extract_strided_slice %11 {offsets = [0, 0], sizes = [16, 8], strides = [1, 1]} : vector<16x96xf32> to vector<16x8xf32>
    %13 = vector.shape_cast %12 : vector<16x8xf32> to vector<2x8x8xf32>
    %14 = vector.extract_strided_slice %11 {offsets = [0, 32], sizes = [16, 8], strides = [1, 1]} : vector<16x96xf32> to vector<16x8xf32>
    %15 = vector.shape_cast %14 : vector<16x8xf32> to vector<2x8x8xf32>
    %16 = vector.extract_strided_slice %11 {offsets = [0, 64], sizes = [16, 8], strides = [1, 1]} : vector<16x96xf32> to vector<16x8xf32>
    %17 = vector.shape_cast %16 : vector<16x8xf32> to vector<2x8x8xf32>
    %18 = arith.truncf %13 : vector<2x8x8xf32> to vector<2x8x8xbf16>
    %19 = arith.truncf %15 : vector<2x8x8xf32> to vector<2x8x8xbf16>
    "tpu.trace_start"() <{level = 10 : i32, message = "bqd,bkd->bqk"}> : () -> ()
    %cst_8 = arith.constant dense<0.000000e+00> : vector<2x8x8xf32>
    %20 = tpu.matmul %18, %19, %cst_8 {dimension_numbers = #tpu.dot_dimension_numbers<[2], [2], [1], [1], [0, 0, 0, 1, 1, 1], [0], [0]>} : vector<2x8x8xbf16>, vector<2x8x8xbf16>, vector<2x8x8xf32> -> vector<2x8x8xf32>
    "tpu.trace_stop"() : () -> ()
    %cst_9 = arith.constant 0.353553385 : f32
    %21 = vector.broadcast %cst_9 : f32 to vector<2x8x8xf32>
    %22 = arith.mulf %20, %21 : vector<2x8x8xf32>
    %cst_10 = arith.constant dense<0xFF800000> : vector<2x8xf32>
    %23 = vector.multi_reduction <maximumf>, %22, %cst_10 [2] : vector<2x8x8xf32> to vector<2x8xf32>
    %24 = vector.shape_cast %23 : vector<2x8xf32> to vector<2x8x1xf32>
    %25 = vector.broadcast %24 : vector<2x8x1xf32> to vector<2x8x8xf32>
    %26 = arith.subf %22, %25 : vector<2x8x8xf32>
    %27 = math.exp %26 : vector<2x8x8xf32>
    %cst_11 = arith.constant dense<0.000000e+00> : vector<2x8xf32>
    %28 = vector.multi_reduction <add>, %27, %cst_11 [2] : vector<2x8x8xf32> to vector<2x8xf32>
    %29 = vector.shape_cast %28 : vector<2x8xf32> to vector<2x8x1xf32>
    %30 = vector.broadcast %29 : vector<2x8x1xf32> to vector<2x8x8xf32>
    %31 = arith.divf %27, %30 : vector<2x8x8xf32>
    %32 = arith.truncf %31 : vector<2x8x8xf32> to vector<2x8x8xbf16>
    %33 = arith.truncf %17 : vector<2x8x8xf32> to vector<2x8x8xbf16>
    "tpu.trace_start"() <{level = 10 : i32, message = "bqk,bkd->bqd"}> : () -> ()
    %cst_12 = arith.constant dense<0.000000e+00> : vector<2x8x8xf32>
    %34 = tpu.matmul %32, %33, %cst_12 {dimension_numbers = #tpu.dot_dimension_numbers<[2], [1], [1], [2], [0, 0, 0, 1, 1, 2], [0], [0]>} : vector<2x8x8xbf16>, vector<2x8x8xbf16>, vector<2x8x8xf32> -> vector<2x8x8xf32>
    "tpu.trace_stop"() : () -> ()
    %35 = vector.extract_strided_slice %11 {offsets = [0, 8], sizes = [16, 8], strides = [1, 1]} : vector<16x96xf32> to vector<16x8xf32>
    %36 = vector.shape_cast %35 : vector<16x8xf32> to vector<2x8x8xf32>
    %37 = vector.extract_strided_slice %11 {offsets = [0, 40], sizes = [16, 8], strides = [1, 1]} : vector<16x96xf32> to vector<16x8xf32>
    %38 = vector.shape_cast %37 : vector<16x8xf32> to vector<2x8x8xf32>
    %39 = vector.extract_strided_slice %11 {offsets = [0, 72], sizes = [16, 8], strides = [1, 1]} : vector<16x96xf32> to vector<16x8xf32>
    %40 = vector.shape_cast %39 : vector<16x8xf32> to vector<2x8x8xf32>
    %41 = arith.truncf %36 : vector<2x8x8xf32> to vector<2x8x8xbf16>
    %42 = arith.truncf %38 : vector<2x8x8xf32> to vector<2x8x8xbf16>
    "tpu.trace_start"() <{level = 10 : i32, message = "bqd,bkd->bqk"}> : () -> ()
    %cst_13 = arith.constant dense<0.000000e+00> : vector<2x8x8xf32>
    %43 = tpu.matmul %41, %42, %cst_13 {dimension_numbers = #tpu.dot_dimension_numbers<[2], [2], [1], [1], [0, 0, 0, 1, 1, 1], [0], [0]>} : vector<2x8x8xbf16>, vector<2x8x8xbf16>, vector<2x8x8xf32> -> vector<2x8x8xf32>
    "tpu.trace_stop"() : () -> ()
    %cst_14 = arith.constant 0.353553385 : f32
    %44 = vector.broadcast %cst_14 : f32 to vector<2x8x8xf32>
    %45 = arith.mulf %43, %44 : vector<2x8x8xf32>
    %cst_15 = arith.constant dense<0xFF800000> : vector<2x8xf32>
    %46 = vector.multi_reduction <maximumf>, %45, %cst_15 [2] : vector<2x8x8xf32> to vector<2x8xf32>
    %47 = vector.shape_cast %46 : vector<2x8xf32> to vector<2x8x1xf32>
    %48 = vector.broadcast %47 : vector<2x8x1xf32> to vector<2x8x8xf32>
    %49 = arith.subf %45, %48 : vector<2x8x8xf32>
    %50 = math.exp %49 : vector<2x8x8xf32>
    %cst_16 = arith.constant dense<0.000000e+00> : vector<2x8xf32>
    %51 = vector.multi_reduction <add>, %50, %cst_16 [2] : vector<2x8x8xf32> to vector<2x8xf32>
    %52 = vector.shape_cast %51 : vector<2x8xf32> to vector<2x8x1xf32>
    %53 = vector.broadcast %52 : vector<2x8x1xf32> to vector<2x8x8xf32>
    %54 = arith.divf %50, %53 : vector<2x8x8xf32>
    %55 = arith.truncf %54 : vector<2x8x8xf32> to vector<2x8x8xbf16>
    %56 = arith.truncf %40 : vector<2x8x8xf32> to vector<2x8x8xbf16>
    "tpu.trace_start"() <{level = 10 : i32, message = "bqk,bkd->bqd"}> : () -> ()
    %cst_17 = arith.constant dense<0.000000e+00> : vector<2x8x8xf32>
    %57 = tpu.matmul %55, %56, %cst_17 {dimension_numbers = #tpu.dot_dimension_numbers<[2], [1], [1], [2], [0, 0, 0, 1, 1, 2], [0], [0]>} : vector<2x8x8xbf16>, vector<2x8x8xbf16>, vector<2x8x8xf32> -> vector<2x8x8xf32>
    "tpu.trace_stop"() : () -> ()
    %58 = vector.extract_strided_slice %11 {offsets = [0, 16], sizes = [16, 8], strides = [1, 1]} : vector<16x96xf32> to vector<16x8xf32>
    %59 = vector.shape_cast %58 : vector<16x8xf32> to vector<2x8x8xf32>
    %60 = vector.extract_strided_slice %11 {offsets = [0, 48], sizes = [16, 8], strides = [1, 1]} : vector<16x96xf32> to vector<16x8xf32>
    %61 = vector.shape_cast %60 : vector<16x8xf32> to vector<2x8x8xf32>
    %62 = vector.extract_strided_slice %11 {offsets = [0, 80], sizes = [16, 8], strides = [1, 1]} : vector<16x96xf32> to vector<16x8xf32>
    %63 = vector.shape_cast %62 : vector<16x8xf32> to vector<2x8x8xf32>
    %64 = arith.truncf %59 : vector<2x8x8xf32> to vector<2x8x8xbf16>
    %65 = arith.truncf %61 : vector<2x8x8xf32> to vector<2x8x8xbf16>
    "tpu.trace_start"() <{level = 10 : i32, message = "bqd,bkd->bqk"}> : () -> ()
    %cst_18 = arith.constant dense<0.000000e+00> : vector<2x8x8xf32>
    %66 = tpu.matmul %64, %65, %cst_18 {dimension_numbers = #tpu.dot_dimension_numbers<[2], [2], [1], [1], [0, 0, 0, 1, 1, 1], [0], [0]>} : vector<2x8x8xbf16>, vector<2x8x8xbf16>, vector<2x8x8xf32> -> vector<2x8x8xf32>
    "tpu.trace_stop"() : () -> ()
    %cst_19 = arith.constant 0.353553385 : f32
    %67 = vector.broadcast %cst_19 : f32 to vector<2x8x8xf32>
    %68 = arith.mulf %66, %67 : vector<2x8x8xf32>
    %cst_20 = arith.constant dense<0xFF800000> : vector<2x8xf32>
    %69 = vector.multi_reduction <maximumf>, %68, %cst_20 [2] : vector<2x8x8xf32> to vector<2x8xf32>
    %70 = vector.shape_cast %69 : vector<2x8xf32> to vector<2x8x1xf32>
    %71 = vector.broadcast %70 : vector<2x8x1xf32> to vector<2x8x8xf32>
    %72 = arith.subf %68, %71 : vector<2x8x8xf32>
    %73 = math.exp %72 : vector<2x8x8xf32>
    %cst_21 = arith.constant dense<0.000000e+00> : vector<2x8xf32>
    %74 = vector.multi_reduction <add>, %73, %cst_21 [2] : vector<2x8x8xf32> to vector<2x8xf32>
    %75 = vector.shape_cast %74 : vector<2x8xf32> to vector<2x8x1xf32>
    %76 = vector.broadcast %75 : vector<2x8x1xf32> to vector<2x8x8xf32>
    %77 = arith.divf %73, %76 : vector<2x8x8xf32>
    %78 = arith.truncf %77 : vector<2x8x8xf32> to vector<2x8x8xbf16>
    %79 = arith.truncf %63 : vector<2x8x8xf32> to vector<2x8x8xbf16>
    "tpu.trace_start"() <{level = 10 : i32, message = "bqk,bkd->bqd"}> : () -> ()
    %cst_22 = arith.constant dense<0.000000e+00> : vector<2x8x8xf32>
    %80 = tpu.matmul %78, %79, %cst_22 {dimension_numbers = #tpu.dot_dimension_numbers<[2], [1], [1], [2], [0, 0, 0, 1, 1, 2], [0], [0]>} : vector<2x8x8xbf16>, vector<2x8x8xbf16>, vector<2x8x8xf32> -> vector<2x8x8xf32>
    "tpu.trace_stop"() : () -> ()
    %81 = vector.extract_strided_slice %11 {offsets = [0, 24], sizes = [16, 8], strides = [1, 1]} : vector<16x96xf32> to vector<16x8xf32>
    %82 = vector.shape_cast %81 : vector<16x8xf32> to vector<2x8x8xf32>
    %83 = vector.extract_strided_slice %11 {offsets = [0, 56], sizes = [16, 8], strides = [1, 1]} : vector<16x96xf32> to vector<16x8xf32>
    %84 = vector.shape_cast %83 : vector<16x8xf32> to vector<2x8x8xf32>
    %85 = vector.extract_strided_slice %11 {offsets = [0, 88], sizes = [16, 8], strides = [1, 1]} : vector<16x96xf32> to vector<16x8xf32>
    %86 = vector.shape_cast %85 : vector<16x8xf32> to vector<2x8x8xf32>
    %87 = arith.truncf %82 : vector<2x8x8xf32> to vector<2x8x8xbf16>
    %88 = arith.truncf %84 : vector<2x8x8xf32> to vector<2x8x8xbf16>
    "tpu.trace_start"() <{level = 10 : i32, message = "bqd,bkd->bqk"}> : () -> ()
    %cst_23 = arith.constant dense<0.000000e+00> : vector<2x8x8xf32>
    %89 = tpu.matmul %87, %88, %cst_23 {dimension_numbers = #tpu.dot_dimension_numbers<[2], [2], [1], [1], [0, 0, 0, 1, 1, 1], [0], [0]>} : vector<2x8x8xbf16>, vector<2x8x8xbf16>, vector<2x8x8xf32> -> vector<2x8x8xf32>
    "tpu.trace_stop"() : () -> ()
    %cst_24 = arith.constant 0.353553385 : f32
    %90 = vector.broadcast %cst_24 : f32 to vector<2x8x8xf32>
    %91 = arith.mulf %89, %90 : vector<2x8x8xf32>
    %cst_25 = arith.constant dense<0xFF800000> : vector<2x8xf32>
    %92 = vector.multi_reduction <maximumf>, %91, %cst_25 [2] : vector<2x8x8xf32> to vector<2x8xf32>
    %93 = vector.shape_cast %92 : vector<2x8xf32> to vector<2x8x1xf32>
    %94 = vector.broadcast %93 : vector<2x8x1xf32> to vector<2x8x8xf32>
    %95 = arith.subf %91, %94 : vector<2x8x8xf32>
    %96 = math.exp %95 : vector<2x8x8xf32>
    %cst_26 = arith.constant dense<0.000000e+00> : vector<2x8xf32>
    %97 = vector.multi_reduction <add>, %96, %cst_26 [2] : vector<2x8x8xf32> to vector<2x8xf32>
    %98 = vector.shape_cast %97 : vector<2x8xf32> to vector<2x8x1xf32>
    %99 = vector.broadcast %98 : vector<2x8x1xf32> to vector<2x8x8xf32>
    %100 = arith.divf %96, %99 : vector<2x8x8xf32>
    %101 = arith.truncf %100 : vector<2x8x8xf32> to vector<2x8x8xbf16>
    %102 = arith.truncf %86 : vector<2x8x8xf32> to vector<2x8x8xbf16>
    "tpu.trace_start"() <{level = 10 : i32, message = "bqk,bkd->bqd"}> : () -> ()
    %cst_27 = arith.constant dense<0.000000e+00> : vector<2x8x8xf32>
    %103 = tpu.matmul %101, %102, %cst_27 {dimension_numbers = #tpu.dot_dimension_numbers<[2], [1], [1], [2], [0, 0, 0, 1, 1, 2], [0], [0]>} : vector<2x8x8xbf16>, vector<2x8x8xbf16>, vector<2x8x8xf32> -> vector<2x8x8xf32>
    "tpu.trace_stop"() : () -> ()
    %104 = tpu.concatenate %34, %57, %80, %103 in 2 : vector<2x8x8xf32>, vector<2x8x8xf32>, vector<2x8x8xf32>, vector<2x8x8xf32> -> vector<2x8x32xf32>
    %105 = vector.shape_cast %104 : vector<2x8x32xf32> to vector<16x32xf32>
    %106 = arith.truncf %105 : vector<16x32xf32> to vector<16x32xbf16>
    %c0_28 = arith.constant 0 : index
    %c0_29 = arith.constant 0 : index
    %c0_30 = arith.constant 0 : index
    %107 = vector.load %arg4[%c0_28, %c0_29, %c0_30] : memref<1x32x32xbf16, #tpu.memory_space<vmem>>, vector<1x32x32xbf16>
    %108 = vector.shape_cast %107 : vector<1x32x32xbf16> to vector<32x32xbf16>
    %cst_31 = arith.constant dense<0.000000e+00> : vector<16x32xf32>
    %109 = tpu.matmul %106, %108, %cst_31 {dimension_numbers = #tpu.dot_dimension_numbers<[1], [0], [0], [1], [0, 0, 1, 1], [], []>} : vector<16x32xbf16>, vector<32x32xbf16>, vector<16x32xf32> -> vector<16x32xf32>
    %c0_32 = arith.constant 0 : index
    %c0_33 = arith.constant 0 : index
    %c0_34 = arith.constant 0 : index
    %110 = vector.load %arg5[%c0_32, %c0_33, %c0_34] : memref<1x1x32xf32, #tpu.memory_space<vmem>>, vector<1x1x32xf32>
    %111 = vector.shape_cast %110 : vector<1x1x32xf32> to vector<1x32xf32>
    %112 = vector.broadcast %111 : vector<1x32xf32> to vector<16x32xf32>
    %113 = arith.addf %109, %112 : vector<16x32xf32>
    %114 = arith.addf %3, %113 : vector<16x32xf32>
    %c0_35 = arith.constant 0 : index
    %c0_36 = arith.constant 0 : index
    %c0_37 = arith.constant 0 : index
    %115 = vector.load %arg6[%c0_35, %c0_36, %c0_37] : memref<1x1x32xf32, #tpu.memory_space<vmem>>, vector<1x1x32xf32>
    %116 = vector.shape_cast %115 : vector<1x1x32xf32> to vector<1x32xf32>
    %c0_38 = arith.constant 0 : index
    %c0_39 = arith.constant 0 : index
    %c0_40 = arith.constant 0 : index
    %117 = vector.load %arg7[%c0_38, %c0_39, %c0_40] : memref<1x1x32xf32, #tpu.memory_space<vmem>>, vector<1x1x32xf32>
    %118 = vector.shape_cast %117 : vector<1x1x32xf32> to vector<1x32xf32>
    %cst_41 = arith.constant dense<0.000000e+00> : vector<16xf32>
    %119 = vector.multi_reduction <add>, %114, %cst_41 [1] : vector<16x32xf32> to vector<16xf32>
    %120 = vector.shape_cast %119 : vector<16xf32> to vector<16x1xf32>
    %cst_42 = arith.constant 3.200000e+01 : f32
    %121 = vector.broadcast %cst_42 : f32 to vector<16x1xf32>
    %122 = arith.divf %120, %121 : vector<16x1xf32>
    %123 = vector.broadcast %122 : vector<16x1xf32> to vector<16x32xf32>
    %124 = arith.subf %114, %123 : vector<16x32xf32>
    %125 = arith.mulf %124, %124 : vector<16x32xf32>
    %cst_43 = arith.constant dense<0.000000e+00> : vector<16xf32>
    %126 = vector.multi_reduction <add>, %125, %cst_43 [1] : vector<16x32xf32> to vector<16xf32>
    %127 = vector.shape_cast %126 : vector<16xf32> to vector<16x1xf32>
    %cst_44 = arith.constant 3.200000e+01 : f32
    %128 = vector.broadcast %cst_44 : f32 to vector<16x1xf32>
    %129 = arith.divf %127, %128 : vector<16x1xf32>
    %130 = vector.broadcast %122 : vector<16x1xf32> to vector<16x32xf32>
    %131 = arith.subf %114, %130 : vector<16x32xf32>
    %cst_45 = arith.constant 9.99999974E-6 : f32
    %132 = vector.broadcast %cst_45 : f32 to vector<16x1xf32>
    %133 = arith.addf %129, %132 : vector<16x1xf32>
    %134 = math.rsqrt %133 : vector<16x1xf32>
    %135 = vector.broadcast %134 : vector<16x1xf32> to vector<16x32xf32>
    %136 = arith.mulf %131, %135 : vector<16x32xf32>
    %137 = vector.broadcast %116 : vector<1x32xf32> to vector<16x32xf32>
    %138 = arith.mulf %136, %137 : vector<16x32xf32>
    %139 = vector.broadcast %118 : vector<1x32xf32> to vector<16x32xf32>
    %140 = arith.addf %138, %139 : vector<16x32xf32>
    %141 = arith.truncf %140 : vector<16x32xf32> to vector<16x32xbf16>
    %c0_46 = arith.constant 0 : index
    %c0_47 = arith.constant 0 : index
    %c0_48 = arith.constant 0 : index
    %142 = vector.load %arg8[%c0_46, %c0_47, %c0_48] : memref<1x32x2048xbf16, #tpu.memory_space<vmem>>, vector<1x32x2048xbf16>
    %143 = vector.shape_cast %142 : vector<1x32x2048xbf16> to vector<32x2048xbf16>
    %cst_49 = arith.constant dense<0.000000e+00> : vector<16x2048xf32>
    %144 = tpu.matmul %141, %143, %cst_49 {dimension_numbers = #tpu.dot_dimension_numbers<[1], [0], [0], [1], [0, 0, 1, 1], [], []>} : vector<16x32xbf16>, vector<32x2048xbf16>, vector<16x2048xf32> -> vector<16x2048xf32>
    %c0_50 = arith.constant 0 : index
    %c0_51 = arith.constant 0 : index
    %c0_52 = arith.constant 0 : index
    %145 = vector.load %arg9[%c0_50, %c0_51, %c0_52] : memref<1x1x2048xf32, #tpu.memory_space<vmem>>, vector<1x1x2048xf32>
    %146 = vector.shape_cast %145 : vector<1x1x2048xf32> to vector<1x2048xf32>
    %147 = vector.broadcast %146 : vector<1x2048xf32> to vector<16x2048xf32>
    %148 = arith.addf %144, %147 : vector<16x2048xf32>
    %cst_53 = arith.constant 0.000000e+00 : f32
    %149 = vector.broadcast %cst_53 : f32 to vector<16x2048xf32>
    %150 = arith.maximumf %148, %149 : vector<16x2048xf32>
    %151 = arith.truncf %150 : vector<16x2048xf32> to vector<16x2048xbf16>
    %c0_54 = arith.constant 0 : index
    %c0_55 = arith.constant 0 : index
    %c0_56 = arith.constant 0 : index
    %152 = vector.load %arg10[%c0_54, %c0_55, %c0_56] : memref<1x2048x32xbf16, #tpu.memory_space<vmem>>, vector<1x2048x32xbf16>
    %153 = vector.shape_cast %152 : vector<1x2048x32xbf16> to vector<2048x32xbf16>
    %cst_57 = arith.constant dense<0.000000e+00> : vector<16x32xf32>
    %154 = tpu.matmul %151, %153, %cst_57 {dimension_numbers = #tpu.dot_dimension_numbers<[1], [0], [0], [1], [0, 0, 1, 1], [], []>} : vector<16x2048xbf16>, vector<2048x32xbf16>, vector<16x32xf32> -> vector<16x32xf32>
    %c0_58 = arith.constant 0 : index
    %c0_59 = arith.constant 0 : index
    %c0_60 = arith.constant 0 : index
    %155 = vector.load %arg11[%c0_58, %c0_59, %c0_60] : memref<1x1x32xf32, #tpu.memory_space<vmem>>, vector<1x1x32xf32>
    %156 = vector.shape_cast %155 : vector<1x1x32xf32> to vector<1x32xf32>
    %157 = vector.broadcast %156 : vector<1x32xf32> to vector<16x32xf32>
    %158 = arith.addf %154, %157 : vector<16x32xf32>
    %159 = arith.addf %140, %158 : vector<16x32xf32>
    %c0_61 = arith.constant 0 : index
    %c0_62 = arith.constant 0 : index
    %c0_63 = arith.constant 0 : index
    %160 = vector.load %arg12[%c0_61, %c0_62, %c0_63] : memref<1x1x32xf32, #tpu.memory_space<vmem>>, vector<1x1x32xf32>
    %161 = vector.shape_cast %160 : vector<1x1x32xf32> to vector<1x32xf32>
    %c0_64 = arith.constant 0 : index
    %c0_65 = arith.constant 0 : index
    %c0_66 = arith.constant 0 : index
    %162 = vector.load %arg13[%c0_64, %c0_65, %c0_66] : memref<1x1x32xf32, #tpu.memory_space<vmem>>, vector<1x1x32xf32>
    %163 = vector.shape_cast %162 : vector<1x1x32xf32> to vector<1x32xf32>
    %cst_67 = arith.constant dense<0.000000e+00> : vector<16xf32>
    %164 = vector.multi_reduction <add>, %159, %cst_67 [1] : vector<16x32xf32> to vector<16xf32>
    %165 = vector.shape_cast %164 : vector<16xf32> to vector<16x1xf32>
    %cst_68 = arith.constant 3.200000e+01 : f32
    %166 = vector.broadcast %cst_68 : f32 to vector<16x1xf32>
    %167 = arith.divf %165, %166 : vector<16x1xf32>
    %168 = vector.broadcast %167 : vector<16x1xf32> to vector<16x32xf32>
    %169 = arith.subf %159, %168 : vector<16x32xf32>
    %170 = arith.mulf %169, %169 : vector<16x32xf32>
    %cst_69 = arith.constant dense<0.000000e+00> : vector<16xf32>
    %171 = vector.multi_reduction <add>, %170, %cst_69 [1] : vector<16x32xf32> to vector<16xf32>
    %172 = vector.shape_cast %171 : vector<16xf32> to vector<16x1xf32>
    %cst_70 = arith.constant 3.200000e+01 : f32
    %173 = vector.broadcast %cst_70 : f32 to vector<16x1xf32>
    %174 = arith.divf %172, %173 : vector<16x1xf32>
    %175 = vector.broadcast %167 : vector<16x1xf32> to vector<16x32xf32>
    %176 = arith.subf %159, %175 : vector<16x32xf32>
    %cst_71 = arith.constant 9.99999974E-6 : f32
    %177 = vector.broadcast %cst_71 : f32 to vector<16x1xf32>
    %178 = arith.addf %174, %177 : vector<16x1xf32>
    %179 = math.rsqrt %178 : vector<16x1xf32>
    %180 = vector.broadcast %179 : vector<16x1xf32> to vector<16x32xf32>
    %181 = arith.mulf %176, %180 : vector<16x32xf32>
    %182 = vector.broadcast %161 : vector<1x32xf32> to vector<16x32xf32>
    %183 = arith.mulf %181, %182 : vector<16x32xf32>
    %184 = vector.broadcast %163 : vector<1x32xf32> to vector<16x32xf32>
    %185 = arith.addf %183, %184 : vector<16x32xf32>
    %c0_72 = arith.constant 0 : index
    %c0_73 = arith.constant 0 : index
    %186 = vector.load %arg17[%c0_72, %c0_73] : memref<16x32xf32, #tpu.memory_space<vmem>>, vector<16x32xf32>
    tpu.vector_store %arg17[%c0_72, %c0_73], %185 {strides = array<i32>} : memref<16x32xf32, #tpu.memory_space<vmem>>, vector<16x32xf32>,
    %c1_i32 = arith.constant 1 : i32
    %187 = arith.cmpi eq, %arg0, %c1_i32 : i32
    %188 = arith.extui %187 : i1 to i32
    %c0_i32_74 = arith.constant 0 : i32
    %189 = arith.cmpi ne, %188, %c0_i32_74 : i32
    scf.if %189 {
      %190 = vector.shape_cast %185 : vector<16x32xf32> to vector<2x8x32xf32>
      %191 = vector.extract_strided_slice %190 {offsets = [0, 0, 0], sizes = [2, 1, 32], strides = [1, 1, 1]} : vector<2x8x32xf32> to vector<2x1x32xf32>
      %192 = vector.shape_cast %191 : vector<2x1x32xf32> to vector<2x32xf32>
      %193 = arith.truncf %192 : vector<2x32xf32> to vector<2x32xbf16>
      %c0_75 = arith.constant 0 : index
      %c0_76 = arith.constant 0 : index
      %194 = vector.load %arg14[%c0_75, %c0_76] : memref<32x5xbf16, #tpu.memory_space<vmem>>, vector<32x5xbf16>
      %cst_77 = arith.constant dense<0.000000e+00> : vector<2x5xf32>
      %195 = tpu.matmul %193, %194, %cst_77 {dimension_numbers = #tpu.dot_dimension_numbers<[1], [0], [0], [1], [0, 0, 1, 1], [], []>} : vector<2x32xbf16>, vector<32x5xbf16>, vector<2x5xf32> -> vector<2x5xf32>
      %c0_78 = arith.constant 0 : index
      %c0_79 = arith.constant 0 : index
      %196 = vector.load %arg15[%c0_78, %c0_79] : memref<1x5xf32, #tpu.memory_space<vmem>>, vector<1x5xf32>
      %197 = vector.broadcast %196 : vector<1x5xf32> to vector<2x5xf32>
      %198 = arith.addf %195, %197 : vector<2x5xf32>
      %c0_80 = arith.constant 0 : index
      %c0_81 = arith.constant 0 : index
      %199 = vector.load %arg16[%c0_80, %c0_81] : memref<2x5xf32, #tpu.memory_space<vmem>>, vector<2x5xf32>
      tpu.vector_store %arg16[%c0_80, %c0_81], %198 {strides = array<i32>} : memref<2x5xf32, #tpu.memory_space<vmem>>, vector<2x5xf32>,
    } else {
    }
    return
  }
  func.func @transform_0(%arg0: i32) -> (i32, i32, i32) {
    %c0_i32 = arith.constant 0 : i32
    %c0_i32_0 = arith.constant 0 : i32
    %c0_i32_1 = arith.constant 0 : i32
    %c0_i32_2 = arith.constant 0 : i32
    return %c0_i32, %c0_i32_0, %c0_i32_1 : i32, i32, i32
  }
  func.func @transform_1(%arg0: i32) -> (i32, i32, i32) {
    %c0_i32 = arith.constant 0 : i32
    %c0_i32_0 = arith.constant 0 : i32
    %c0_i32_1 = arith.constant 0 : i32
    return %arg0, %c0_i32, %c0_i32_0 : i32, i32, i32
  }
  func.func @transform_2(%arg0: i32) -> (i32, i32, i32) {
    %c0_i32 = arith.constant 0 : i32
    %c0_i32_0 = arith.constant 0 : i32
    %c0_i32_1 = arith.constant 0 : i32
    return %arg0, %c0_i32, %c0_i32_0 : i32, i32, i32
  }
  func.func @transform_3(%arg0: i32) -> (i32, i32, i32) {
    %c0_i32 = arith.constant 0 : i32
    %c0_i32_0 = arith.constant 0 : i32
    %c0_i32_1 = arith.constant 0 : i32
    return %arg0, %c0_i32, %c0_i32_0 : i32, i32, i32
  }
  func.func @transform_4(%arg0: i32) -> (i32, i32, i32) {
    %c0_i32 = arith.constant 0 : i32
    %c0_i32_0 = arith.constant 0 : i32
    %c0_i32_1 = arith.constant 0 : i32
    return %arg0, %c0_i32, %c0_i32_0 : i32, i32, i32
  }
  func.func @transform_5(%arg0: i32) -> (i32, i32, i32) {
    %c0_i32 = arith.constant 0 : i32
    %c0_i32_0 = arith.constant 0 : i32
    %c0_i32_1 = arith.constant 0 : i32
    return %arg0, %c0_i32, %c0_i32_0 : i32, i32, i32
  }
  func.func @transform_6(%arg0: i32) -> (i32, i32, i32) {
    %c0_i32 = arith.constant 0 : i32
    %c0_i32_0 = arith.constant 0 : i32
    %c0_i32_1 = arith.constant 0 : i32
    return %arg0, %c0_i32, %c0_i32_0 : i32, i32, i32
  }
  func.func @transform_7(%arg0: i32) -> (i32, i32, i32) {
    %c0_i32 = arith.constant 0 : i32
    %c0_i32_0 = arith.constant 0 : i32
    %c0_i32_1 = arith.constant 0 : i32
    return %arg0, %c0_i32, %c0_i32_0 : i32, i32, i32
  }
  func.func @transform_8(%arg0: i32) -> (i32, i32, i32) {
    %c0_i32 = arith.constant 0 : i32
    %c0_i32_0 = arith.constant 0 : i32
    %c0_i32_1 = arith.constant 0 : i32
    return %arg0, %c0_i32, %c0_i32_0 : i32, i32, i32
  }
  func.func @transform_9(%arg0: i32) -> (i32, i32, i32) {
    %c0_i32 = arith.constant 0 : i32
    %c0_i32_0 = arith.constant 0 : i32
    %c0_i32_1 = arith.constant 0 : i32
    return %arg0, %c0_i32, %c0_i32_0 : i32, i32, i32
  }
  func.func @transform_10(%arg0: i32) -> (i32, i32, i32) {
    %c0_i32 = arith.constant 0 : i32
    %c0_i32_0 = arith.constant 0 : i32
    %c0_i32_1 = arith.constant 0 : i32
    return %arg0, %c0_i32, %c0_i32_0 : i32, i32, i32
  }
  func.func @transform_11(%arg0: i32) -> (i32, i32, i32) {
    %c0_i32 = arith.constant 0 : i32
    %c0_i32_0 = arith.constant 0 : i32
    %c0_i32_1 = arith.constant 0 : i32
    return %arg0, %c0_i32, %c0_i32_0 : i32, i32, i32
  }
  func.func @transform_12(%arg0: i32) -> (i32, i32, i32) {
    %c0_i32 = arith.constant 0 : i32
    %c0_i32_0 = arith.constant 0 : i32
    %c0_i32_1 = arith.constant 0 : i32
    return %arg0, %c0_i32, %c0_i32_0 : i32, i32, i32
  }
  func.func @transform_13(%arg0: i32) -> (i32, i32) {
    %c0_i32 = arith.constant 0 : i32
    %c0_i32_0 = arith.constant 0 : i32
    %c0_i32_1 = arith.constant 0 : i32
    return %c0_i32, %c0_i32_0 : i32, i32
  }
  func.func @transform_14(%arg0: i32) -> (i32, i32) {
    %c0_i32 = arith.constant 0 : i32
    %c0_i32_0 = arith.constant 0 : i32
    %c0_i32_1 = arith.constant 0 : i32
    return %c0_i32, %c0_i32_0 : i32, i32
  }
  func.func @transform_15(%arg0: i32) -> (i32, i32) {
    %c0_i32 = arith.constant 0 : i32
    %c0_i32_0 = arith.constant 0 : i32
    %c0_i32_1 = arith.constant 0 : i32
    return %c0_i32, %c0_i32_0 : i32, i32
  }
}

</mosaic_0001>

<llo_original>
// kernel: end_to_end_forward.2
$region0: #{end_to_end_forward.2}
  #allocation0 [shape = 'u32[]', space=smem, size = 0x4, offset = 0x4, fixed_abs, tag = 'smem constant byte address 0x4 - core index']
  #allocation1 [shape = 'u32[144,128]{1,0:T(1,128)}', space=vmem, size = 0x12000, scoped, tag = 'internal scratch']
  %s0 = inlined_call_operand.vmem [shape: f32[16,96], index: 0, kind: input, shape index: {}]
  %s1 = inlined_call_operand.vmem [shape: bf16[96,8], index: 1, kind: input, shape index: {}]
  %s2 = inlined_call_operand.vmem [shape: f32[1,8], index: 2, kind: input, shape index: {}]
  %s3 = inlined_call_operand.vmem [shape: bf16[8,32], index: 3, kind: input, shape index: {}]
  %s4 = inlined_call_operand.vmem [shape: f32[1,32], index: 4, kind: input, shape index: {}]
  %s5 = inlined_call_operand.vmem [shape: f32[1,8,32], index: 5, kind: input, shape index: {}]
  %s6 = inlined_call_operand.vmem [shape: f32[2,8,32], index: 6, kind: output, shape index: {}]
  %s7 = sld [smem:[#allocation0]]
  $region34: #{end_to_end_forward.2} parent=0
    _
  %s9 = ssub.s32 1, %s7
  %s10 = scalar_select 0, %s9, %s7
  // Predicated region
  $region2: #{end_to_end_forward.2} parent=0 // pred_check
    _
  $region3: #{end_to_end_forward.2} parent=0 // pred_check_branch
    %12 = sbr.rel (0) target = $region5
  $region4: #{end_to_end_forward.2} parent=0 // pred_region
    _
  $region5: #{end_to_end_forward.2} parent=0 // pred_fallthru
    _
  // Predicated region
  $region6: #{end_to_end_forward.2} parent=0 // pred_check
    _
  $region7: #{end_to_end_forward.2} parent=0 // pred_check_branch
    %14 = sbr.rel (0) target = $region9
  $region8: #{end_to_end_forward.2} parent=0 // pred_region
    _
  $region9: #{end_to_end_forward.2} parent=0 // pred_fallthru
    _
  // Predicated region
  $region10: #{end_to_end_forward.2} parent=0 // pred_check
    _
  $region11: #{end_to_end_forward.2} parent=0 // pred_check_branch
    %16 = sbr.rel (0) target = $region13
  $region12: #{end_to_end_forward.2} parent=0 // pred_region
    _
  $region13: #{end_to_end_forward.2} parent=0 // pred_fallthru
    _
  // Predicated region
  $region14: #{end_to_end_forward.2} parent=0 // pred_check
    _
  $region15: #{end_to_end_forward.2} parent=0 // pred_check_branch
    %18 = sbr.rel (0) target = $region17
  $region16: #{end_to_end_forward.2} parent=0 // pred_region
    _
  $region17: #{end_to_end_forward.2} parent=0 // pred_fallthru
    _
  // Predicated region
  $region18: #{end_to_end_forward.2} parent=0 // pred_check
    _
  $region19: #{end_to_end_forward.2} parent=0 // pred_check_branch
    %20 = sbr.rel (0) target = $region21
  $region20: #{end_to_end_forward.2} parent=0 // pred_region
    _
  $region21: #{end_to_end_forward.2} parent=0 // pred_fallthru
    _
  // Predicated region
  $region22: #{end_to_end_forward.2} parent=0 // pred_check
    _
  $region23: #{end_to_end_forward.2} parent=0 // pred_check_branch
    %22 = sbr.rel (0) target = $region25
  $region24: #{end_to_end_forward.2} parent=0 // pred_region
    _
  $region25: #{end_to_end_forward.2} parent=0 // pred_fallthru
    _
  %v24 = vld [vmem:[%s0] sm:$0xff]
  %v25 = vld [vmem:[%s0 + $0x8] sm:$0xff]
  %v26 = vpack.c.bf16 %v25, %v24
  %v27 = vld [vmem:[%s1] sm:$0xf]
  %v28 = vld [vmem:[%s1 + $0x4] sm:$0xf]
  %v29 = vld [vmem:[%s1 + $0x8] sm:$0xf]
  %v30 = vld [vmem:[%s1 + $0xc] sm:$0xf]
  %v31 = vld [vmem:[%s1 + $0x10] sm:$0xf]
  %v32 = vld [vmem:[%s1 + $0x14] sm:$0xf]
  %v33 = vld [vmem:[%s1 + $0x18] sm:$0xf]
  %v34 = vld [vmem:[%s1 + $0x1c] sm:$0xf]
  %v35 = vld [vmem:[%s1 + $0x20] sm:$0xf]
  %v36 = vld [vmem:[%s1 + $0x24] sm:$0xf]
  %v37 = vld [vmem:[%s1 + $0x28] sm:$0xf]
  %v38 = vld [vmem:[%s1 + $0x2c] sm:$0xf]
  %v39 = vld [vmem:[%s2] sm:$0x1]
  %v41 = vlaneseq
  %v42 = vshrl.u32 %v41, 7
  %v43 = vsub.s32 0, %v42
  %v44 = vrot.slane %v39, %v43
  %v58 = vunpack.c.l.b16 %v27
  %v59 = vunpack.c.l.b16 %v28
  %v60 = vunpack.c.l.b16 %v29
  %v61 = vunpack.c.l.b16 %v30
  %v62 = vunpack.c.l.b16 %v31
  %v63 = vunpack.c.l.b16 %v32
  %v64 = vunpack.c.l.b16 %v33
  %v65 = vunpack.c.l.b16 %v34
  %v66 = vunpack.c.l.b16 %v35
  %v67 = vunpack.c.l.b16 %v36
  %v68 = vunpack.c.l.b16 %v37
  %v69 = vunpack.c.l.b16 %v38
  %v70 = vpack.c.b16 %v59, %v58
  %v71 = vpack.c.b16 %v61, %v60
  %v72 = vpack.c.b16 %v63, %v62
  %v73 = vpack.c.b16 %v65, %v64
  %v74 = vpack.c.b16 %v67, %v66
  %v75 = vpack.c.b16 %v69, %v68
  %vm82 = vcmask 785408
  %v84 = vsel %vm82, %v26, 0
  %86 = vmatprep.subr.bf16.mxu0 0
  %87 = vmatpush1.bf16.msra.mxu0 0
  %88 = vmatprep.subr.bf16.mxu0 0
  %89 = vmatpush1.bf16.msra.mxu0 0
  %90 = vmatprep.subr.bf16.mxu0 0
  %91 = vmatpush1.bf16.msra.mxu0 %v75
  %92 = vmatprep.subr.bf16.mxu0 0
  %93 = vmatpush1.bf16.msra.mxu0 %v74
  %94 = vmatprep.subr.bf16.mxu0 0
  %95 = vmatpush1.bf16.msra.mxu0 %v73
  %96 = vmatprep.subr.bf16.mxu0 0
  %97 = vmatpush1.bf16.msra.mxu0 %v72
  %98 = vmatprep.subr.bf16.mxu0 0
  %99 = vmatpush1.bf16.msra.mxu0 %v71
  %100 = vmatprep.subr.bf16.mxu0 0
  %101 = vmatpush1.bf16.msra.mxu0 %v70
  %102 = vmatprep.subr.bf16.mxu0 0
  %103 = vmatpush2.bf16.msra.mxu0 0
  %104 = vmatprep.subr.bf16.mxu0 0
  %105 = vmatpush2.bf16.msra.mxu0 0
  %106 = vmatprep.subr.bf16.mxu0 0
  %107 = vmatpush2.bf16.msra.mxu0 0
  %108 = vmatprep.subr.bf16.mxu0 0
  %109 = vmatpush2.bf16.msra.mxu0 0
  %110 = vmatprep.subr.bf16.mxu0 0
  %111 = vmatpush2.bf16.msra.mxu0 0
  %112 = vmatprep.subr.bf16.mxu0 0
  %113 = vmatpush2.bf16.msra.mxu0 0
  %114 = vmatprep.subr.bf16.mxu0 0
  %115 = vmatpush2.bf16.msra.mxu0 0
  %116 = vmatprep.subr.bf16.mxu0 0
  %117 = vmatpush2.bf16.msra.mxu0 0
  %118 = vmatprep.mubr.bf16.mxu0 0
  %119 = vmatmul.mubr.bf16.gmra.mxu0 %v84
  %v120 = vpop.f32.mrf.mxu0
  %v121 = vadd.f32 %v44, %v120
  %v122 = vpop.f32.mrf.mxu0
  %v123 = vpop.f32.mrf.mxu0
  %v124 = vadd.f32 %v44, %v123
  %v125 = vpop.f32.mrf.mxu0
  %126 = vdwg.mxu0
  %v127 = vmax.f32 %v121, 0.0
  %v128 = vmax.f32 %v124, 0.0
  %v129 = vpack.c.bf16 %v128, %v127
  %v130 = vld [vmem:[%s3] sm:$0xf]
  %v131 = vld [vmem:[%s4] sm:$0x1]
  %v133 = vlaneseq
  %v134 = vshrl.u32 %v133, 7
  %v135 = vsub.s32 0, %v134
  %v136 = vrot.slane %v131, %v135
  %vm138 = vcmask 64512
  %v140 = vsel %vm138, %v129, 0
  %vm142 = vcmask 1043456
  %v144 = vsel %vm142, %v130, 0
  %146 = vmatprep.subr.bf16.mxu0 0
  %147 = vmatpush1.bf16.msra.mxu0 0
  %148 = vmatprep.subr.bf16.mxu0 0
  %149 = vmatpush1.bf16.msra.mxu0 0
  %150 = vmatprep.subr.bf16.mxu0 0
  %151 = vmatpush1.bf16.msra.mxu0 0
  %152 = vmatprep.subr.bf16.mxu0 0
  %153 = vmatpush1.bf16.msra.mxu0 0
  %154 = vmatprep.subr.bf16.mxu0 0
  %155 = vmatpush1.bf16.msra.mxu0 0
  %156 = vmatprep.subr.bf16.mxu0 0
  %157 = vmatpush1.bf16.msra.mxu0 0
  %158 = vmatprep.subr.bf16.mxu0 0
  %159 = vmatpush1.bf16.msra.mxu0 0
  %160 = vmatprep.subr.bf16.mxu0 0
  %161 = vmatpush1.bf16.msra.mxu0 %v144
  %162 = vmatprep.subr.bf16.mxu0 0
  %163 = vmatpush2.bf16.msra.mxu0 0
  %164 = vmatprep.subr.bf16.mxu0 0
  %165 = vmatpush2.bf16.msra.mxu0 0
  %166 = vmatprep.subr.bf16.mxu0 0
  %167 = vmatpush2.bf16.msra.mxu0 0
  %168 = vmatprep.subr.bf16.mxu0 0
  %169 = vmatpush2.bf16.msra.mxu0 0
  %170 = vmatprep.subr.bf16.mxu0 0
  %171 = vmatpush2.bf16.msra.mxu0 0
  %172 = vmatprep.subr.bf16.mxu0 0
  %173 = vmatpush2.bf16.msra.mxu0 0
  %174 = vmatprep.subr.bf16.mxu0 0
  %175 = vmatpush2.bf16.msra.mxu0 0
  %176 = vmatprep.subr.bf16.mxu0 0
  %177 = vmatpush2.bf16.msra.mxu0 0
  %178 = vmatprep.mubr.bf16.mxu0 0
  %179 = vmatmul.mubr.bf16.gmra.mxu0 %v140
  %v180 = vpop.f32.mrf.mxu0
  %v181 = vadd.f32 %v136, %v180
  %v182 = vpop.f32.mrf.mxu0
  %v183 = vpop.f32.mrf.mxu0
  %v184 = vadd.f32 %v136, %v183
  %v185 = vpop.f32.mrf.mxu0
  %186 = vdwg.mxu0
  %v187 = vlaneseq
  %v188 = vshrl.u32 %v187, 7
  %v189 = vadd.s32 %v188, 8
  %vm190 = vcmp.lt.s32.totalorder %v188, 0
  %v191 = vsub.s32 0, %v188
  %v192 = vsel %vm190, %v191, %v188
  %v193 = vshrl.u32 %v192, 3
  %v194 = vand.u32 %v192, 7
  %v195 = vsub.s32 0, %v194
  %v196 = vsel %vm190, %v195, %v194
  %vm197 = vcmp.lt.s32.totalorder %v189, 0
  %v198 = vsub.s32 0, %v189
  %v199 = vsel %vm197, %v198, %v189
  %v200 = vshrl.u32 %v199, 3
  %v201 = vand.u32 %v199, 7
  %v202 = vsub.s32 0, %v201
  %v203 = vsel %vm197, %v202, %v201
  %vm204 = vcmp.ne.s32.totalorder %v196, 0
  %vm205 = vcmp.ne.s32.totalorder %v203, 0
  %vm206 = vcmp.lt.s32.totalorder %v196, 0
  %vm207 = vcmp.lt.s32.totalorder %v203, 0
  %vm208 = vmand %vm206, %vm204
  %vm209 = vmand %vm207, %vm205
  %v210 = vadd.s32 %v196, 8
  %v211 = vadd.s32 %v203, 8
  %v212 = vsel %vm208, %v210, %v196
  %v213 = vsel %vm209, %v211, %v203
  %vm214 = vcmp.ne.s32.totalorder %v212, 0
  %vm215 = vcmp.ne.s32.totalorder %v213, 0
  %v216 = vsel %vm214, 1, 0
  %v217 = vsel %vm215, 1, 0
  %v218 = vcvt.s32.f32 %v216
  %v219 = vcvt.s32.f32 %v217
  %v220 = vmul.f32 %v181, %v218
  %v221 = vmul.f32 %v184, %v219
  %v222 = vld [vmem:[%s5] sm:$0xff]
  %v223 = vadd.f32 %v220, %v222
  %v224 = vadd.f32 %v221, %v222
  %vm225 = vcmask 261120
  %226 = vst.msk [vmem:[%s6] sm:$0xff] %vm225, %v223
  %227 = vst.msk [vmem:[%s6 + $0x8] sm:$0xff] %vm225, %v224
  // Predicated region
  $region26: #{end_to_end_forward.2} parent=0 // pred_check
    _
  $region27: #{end_to_end_forward.2} parent=0 // pred_check_branch
    %229 = sbr.rel (0) target = $region29
  $region28: #{end_to_end_forward.2} parent=0 // pred_region
    _
  $region29: #{end_to_end_forward.2} parent=0 // pred_fallthru
    _
  // Predicated region
  $region30: #{end_to_end_forward.2} parent=0 // pred_check
    _
  $region31: #{end_to_end_forward.2} parent=0 // pred_check_branch
    %231 = sbr.rel (0) target = $region33
  $region32: #{end_to_end_forward.2} parent=0 // pred_region
    _
  $region33: #{end_to_end_forward.2} parent=0 // pred_fallthru
    _

// kernel: end_to_end_forward.3
$region0: #{end_to_end_forward.3}
  #allocation0 [shape = 'u32[]', space=smem, size = 0x4, offset = 0x4, fixed_abs, tag = 'smem constant byte address 0x4 - core index']
  #allocation1 [shape = 'u32[144,128]{1,0:T(1,128)}', space=vmem, size = 0x12000, scoped, tag = 'internal scratch']
  #allocation2 [shape = 'f32[16,32]{1,0:T(8,128)}', space=vmem, size = 0x2000, scoped, tag = 'scratch operand']
  %s0 = inlined_call_operand.vmem [shape: f32[2,8,32], index: 0, kind: input, shape index: {}]
  %s1 = inlined_call_operand.vmem [shape: bf16[2,32,96], index: 1, kind: input, shape index: {}]
  %s2 = inlined_call_operand.vmem [shape: f32[2,1,96], index: 2, kind: input, shape index: {}]
  %s3 = inlined_call_operand.vmem [shape: bf16[2,32,32], index: 3, kind: input, shape index: {}]
  %s4 = inlined_call_operand.vmem [shape: f32[2,1,32], index: 4, kind: input, shape index: {}]
  %s5 = inlined_call_operand.vmem [shape: f32[2,1,32], index: 5, kind: input, shape index: {}]
  %s6 = inlined_call_operand.vmem [shape: f32[2,1,32], index: 6, kind: input, shape index: {}]
  %s7 = inlined_call_operand.vmem [shape: bf16[2,32,2048], index: 7, kind: input, shape index: {}]
  %s8 = inlined_call_operand.vmem [shape: f32[2,1,2048], index: 8, kind: input, shape index: {}]
  %s9 = inlined_call_operand.vmem [shape: bf16[2,2048,32], index: 9, kind: input, shape index: {}]
  %s10 = inlined_call_operand.vmem [shape: f32[2,1,32], index: 10, kind: input, shape index: {}]
  %s11 = inlined_call_operand.vmem [shape: f32[2,1,32], index: 11, kind: input, shape index: {}]
  %s12 = inlined_call_operand.vmem [shape: f32[2,1,32], index: 12, kind: input, shape index: {}]
  %s13 = inlined_call_operand.vmem [shape: bf16[32,5], index: 13, kind: input, shape index: {}]
  %s14 = inlined_call_operand.vmem [shape: f32[1,5], index: 14, kind: input, shape index: {}]
  %s15 = inlined_call_operand.hbm [shape: f32[2,5], index: 15, kind: output, shape index: {}]
  %s16 = sld [smem:[#allocation0]]
  $region101: #{end_to_end_forward.3} parent=0
    _
  %s18 = ssub.s32 1, %s16
  %s19 = scalar_select 0, %s18, %s16
  $region1: #{end_to_end_forward.3} parent=0
    #allocation3 [shape = 'u8[1024]{0}', space=vmem, size = 0x400, scoped, tag = 'output window, operand 0, single buffered']
    #allocation4 [shape = 's32[2]{0}', space=sflag, size = 0x8, scoped, tag = 'scoped memory for end_to_end_forward.3']
    %20 = vsyncpa [#allocation4], 0
    loop: start=0, step=1, limit=4
    $region2: #{end_to_end_forward.3} parent=1 // loop_pre_header
      _
    $region3: #{end_to_end_forward.3} parent=1 // loop_header
      %s22 = sphi 0, %s26
      %p23 = scmp.ge.s32.totalorder %s22, 4
      %s30 = sphi 0, %s30
      %s32 = sphi 0, %s30
      %s33 = sphi 0, %s32
      %s47 = sphi 0, %s33
      %s53 = sphi 0, %s55
      %s56 = sphi 0, %s53
      %s57 = sphi 0, %s56
      %s73 = sphi 0, %s57
      %s79 = sphi 0, %s81
      %s82 = sphi 0, %s79
      %s83 = sphi 0, %s82
      %s99 = sphi 0, %s83
      %s105 = sphi 0, %s107
      %s108 = sphi 0, %s105
      %s109 = sphi 0, %s108
      %s125 = sphi 0, %s109
      %s131 = sphi 0, %s133
      %s134 = sphi 0, %s131
      %s135 = sphi 0, %s134
      %s151 = sphi 0, %s135
      %s157 = sphi 0, %s159
      %s160 = sphi 0, %s157
      %s161 = sphi 0, %s160
      %s177 = sphi 0, %s161
      %s183 = sphi 0, %s185
      %s186 = sphi 0, %s183
      %s187 = sphi 0, %s186
      %s203 = sphi 0, %s187
      %s209 = sphi 0, %s211
      %s212 = sphi 0, %s209
      %s213 = sphi 0, %s212
      %s229 = sphi 0, %s213
      %s235 = sphi 0, %s237
      %s238 = sphi 0, %s235
      %s239 = sphi 0, %s238
      %s255 = sphi 0, %s239
      %s261 = sphi 0, %s263
      %s264 = sphi 0, %s261
      %s265 = sphi 0, %s264
      %s281 = sphi 0, %s265
      %s287 = sphi 0, %s289
      %s290 = sphi 0, %s287
      %s291 = sphi 0, %s290
      %s307 = sphi 0, %s291
      %s313 = sphi 0, %s315
      %s316 = sphi 0, %s313
      %s317 = sphi 0, %s316
      %s333 = sphi 0, %s317
      %s339 = sphi 0, %s341
      %s342 = sphi 0, %s339
      %s343 = sphi 0, %s342
      %s359 = sphi 0, %s343
      %s363 = sphi 0, %s363
      %s365 = sphi 0, %s363
      %s366 = sphi 0, %s365
      %s380 = sphi 0, %s366
      %s384 = sphi 0, %s384
      %s386 = sphi 0, %s384
      %s387 = sphi 0, %s386
      %s401 = sphi 0, %s387
      %s405 = sphi 0, %s405
      %s407 = sphi 0, %s405
      %s408 = sphi 0, %s407
      %s422 = sphi 0, %s408
    $region4: #{end_to_end_forward.3} parent=1 // loop_header_branch
      %25 = sbr.rel (%p23) target = $region8
    $region5: #{end_to_end_forward.3} parent=1 // loop_body
      %s27 = ssub.s32 %s22, 1
      %s28 = ssub.s32 %s22, 2
      %s29 = sadd.s32 %s22, 1
      %s31 = sadd.s32 %s30, 1
      %p34 = scmp.eq.s32.totalorder %s22, 1
      %p35 = scmp.ne.s32.totalorder %s30, %s32
      %p36 = scmp.eq.s32.totalorder %s22, 0
      %p37 = por %p35, %p36
      %p38 = scmp.ne.s32.totalorder %s30, %s32
      %p39 = scmp.eq.s32.totalorder %s27, 1
      %p40 = por %p38, %p39
      %p41 = scmp.ne.s32.totalorder %s32, %s33
      %p42 = scmp.eq.s32.totalorder %s27, 0
      %p43 = por %p41, %p42
      %p44 = scmp.ne.s32.totalorder %s32, %s33
      %p45 = scmp.eq.s32.totalorder %s28, 1
      %p46 = por %p44, %p45
      %p48 = scmp.ne.s32.totalorder %s33, %s47
      %p49 = scmp.eq.s32.totalorder %s28, 0
      %p50 = por %p48, %p49
      %s51 = ssub.s32 %s22, %s29
      %p52 = scmp.eq.s32.totalorder %s51, 0
      %s54 = sadd.s32 %s53, 1
      %s55 = scalar_select %p52, %s53, %s54
      %p58 = pneg %p52
      %p59 = scmp.eq.s32.totalorder %s22, 1
      %p60 = por %p58, %p59
      %p61 = scmp.ne.s32.totalorder %s53, %s56
      %p62 = scmp.eq.s32.totalorder %s22, 0
      %p63 = por %p61, %p62
      %p64 = scmp.ne.s32.totalorder %s53, %s56
      %p65 = scmp.eq.s32.totalorder %s27, 1
      %p66 = por %p64, %p65
      %p67 = scmp.ne.s32.totalorder %s56, %s57
      %p68 = scmp.eq.s32.totalorder %s27, 0
      %p69 = por %p67, %p68
      %p70 = scmp.ne.s32.totalorder %s56, %s57
      %p71 = scmp.eq.s32.totalorder %s28, 1
      %p72 = por %p70, %p71
      %p74 = scmp.ne.s32.totalorder %s57, %s73
      %p75 = scmp.eq.s32.totalorder %s28, 0
      %p76 = por %p74, %p75
      %s77 = ssub.s32 %s22, %s29
      %p78 = scmp.eq.s32.totalorder %s77, 0
      %s80 = sadd.s32 %s79, 1
      %s81 = scalar_select %p78, %s79, %s80
      %p84 = pneg %p78
      %p85 = scmp.eq.s32.totalorder %s22, 1
      %p86 = por %p84, %p85
      %p87 = scmp.ne.s32.totalorder %s79, %s82
      %p88 = scmp.eq.s32.totalorder %s22, 0
      %p89 = por %p87, %p88
      %p90 = scmp.ne.s32.totalorder %s79, %s82
      %p91 = scmp.eq.s32.totalorder %s27, 1
      %p92 = por %p90, %p91
      %p93 = scmp.ne.s32.totalorder %s82, %s83
      %p94 = scmp.eq.s32.totalorder %s27, 0
      %p95 = por %p93, %p94
      %p96 = scmp.ne.s32.totalorder %s82, %s83
      %p97 = scmp.eq.s32.totalorder %s28, 1
      %p98 = por %p96, %p97
      %p100 = scmp.ne.s32.totalorder %s83, %s99
      %p101 = scmp.eq.s32.totalorder %s28, 0
      %p102 = por %p100, %p101
      %s103 = ssub.s32 %s22, %s29
      %p104 = scmp.eq.s32.totalorder %s103, 0
      %s106 = sadd.s32 %s105, 1
      %s107 = scalar_select %p104, %s105, %s106
      %p110 = pneg %p104
      %p111 = scmp.eq.s32.totalorder %s22, 1
      %p112 = por %p110, %p111
      %p113 = scmp.ne.s32.totalorder %s105, %s108
      %p114 = scmp.eq.s32.totalorder %s22, 0
      %p115 = por %p113, %p114
      %p116 = scmp.ne.s32.totalorder %s105, %s108
      %p117 = scmp.eq.s32.totalorder %s27, 1
      %p118 = por %p116, %p117
      %p119 = scmp.ne.s32.totalorder %s108, %s109
      %p120 = scmp.eq.s32.totalorder %s27, 0
      %p121 = por %p119, %p120
      %p122 = scmp.ne.s32.totalorder %s108, %s109
      %p123 = scmp.eq.s32.totalorder %s28, 1
      %p124 = por %p122, %p123
      %p126 = scmp.ne.s32.totalorder %s109, %s125
      %p127 = scmp.eq.s32.totalorder %s28, 0
      %p128 = por %p126, %p127
      %s129 = ssub.s32 %s22, %s29
      %p130 = scmp.eq.s32.totalorder %s129, 0
      %s132 = sadd.s32 %s131, 1
      %s133 = scalar_select %p130, %s131, %s132
      %p136 = pneg %p130
      %p137 = scmp.eq.s32.totalorder %s22, 1
      %p138 = por %p136, %p137
      %p139 = scmp.ne.s32.totalorder %s131, %s134
      %p140 = scmp.eq.s32.totalorder %s22, 0
      %p141 = por %p139, %p140
      %p142 = scmp.ne.s32.totalorder %s131, %s134
      %p143 = scmp.eq.s32.totalorder %s27, 1
      %p144 = por %p142, %p143
      %p145 = scmp.ne.s32.totalorder %s134, %s135
      %p146 = scmp.eq.s32.totalorder %s27, 0
      %p147 = por %p145, %p146
      %p148 = scmp.ne.s32.totalorder %s134, %s135
      %p149 = scmp.eq.s32.totalorder %s28, 1
      %p150 = por %p148, %p149
      %p152 = scmp.ne.s32.totalorder %s135, %s151
      %p153 = scmp.eq.s32.totalorder %s28, 0
      %p154 = por %p152, %p153
      %s155 = ssub.s32 %s22, %s29
      %p156 = scmp.eq.s32.totalorder %s155, 0
      %s158 = sadd.s32 %s157, 1
      %s159 = scalar_select %p156, %s157, %s158
      %p162 = pneg %p156
      %p163 = scmp.eq.s32.totalorder %s22, 1
      %p164 = por %p162, %p163
      %p165 = scmp.ne.s32.totalorder %s157, %s160
      %p166 = scmp.eq.s32.totalorder %s22, 0
      %p167 = por %p165, %p166
      %p168 = scmp.ne.s32.totalorder %s157, %s160
      %p169 = scmp.eq.s32.totalorder %s27, 1
      %p170 = por %p168, %p169
      %p171 = scmp.ne.s32.totalorder %s160, %s161
      %p172 = scmp.eq.s32.totalorder %s27, 0
      %p173 = por %p171, %p172
      %p174 = scmp.ne.s32.totalorder %s160, %s161
      %p175 = scmp.eq.s32.totalorder %s28, 1
      %p176 = por %p174, %p175
      %p178 = scmp.ne.s32.totalorder %s161, %s177
      %p179 = scmp.eq.s32.totalorder %s28, 0
      %p180 = por %p178, %p179
      %s181 = ssub.s32 %s22, %s29
      %p182 = scmp.eq.s32.totalorder %s181, 0
      %s184 = sadd.s32 %s183, 1
      %s185 = scalar_select %p182, %s183, %s184
      %p188 = pneg %p182
      %p189 = scmp.eq.s32.totalorder %s22, 1
      %p190 = por %p188, %p189
      %p191 = scmp.ne.s32.totalorder %s183, %s186
      %p192 = scmp.eq.s32.totalorder %s22, 0
      %p193 = por %p191, %p192
      %p194 = scmp.ne.s32.totalorder %s183, %s186
      %p195 = scmp.eq.s32.totalorder %s27, 1
      %p196 = por %p194, %p195
      %p197 = scmp.ne.s32.totalorder %s186, %s187
      %p198 = scmp.eq.s32.totalorder %s27, 0
      %p199 = por %p197, %p198
      %p200 = scmp.ne.s32.totalorder %s186, %s187
      %p201 = scmp.eq.s32.totalorder %s28, 1
      %p202 = por %p200, %p201
      %p204 = scmp.ne.s32.totalorder %s187, %s203
      %p205 = scmp.eq.s32.totalorder %s28, 0
      %p206 = por %p204, %p205
      %s207 = ssub.s32 %s22, %s29
      %p208 = scmp.eq.s32.totalorder %s207, 0
      %s210 = sadd.s32 %s209, 1
      %s211 = scalar_select %p208, %s209, %s210
      %p214 = pneg %p208
      %p215 = scmp.eq.s32.totalorder %s22, 1
      %p216 = por %p214, %p215
      %p217 = scmp.ne.s32.totalorder %s209, %s212
      %p218 = scmp.eq.s32.totalorder %s22, 0
      %p219 = por %p217, %p218
      %p220 = scmp.ne.s32.totalorder %s209, %s212
      %p221 = scmp.eq.s32.totalorder %s27, 1
      %p222 = por %p220, %p221
      %p223 = scmp.ne.s32.totalorder %s212, %s213
      %p224 = scmp.eq.s32.totalorder %s27, 0
      %p225 = por %p223, %p224
      %p226 = scmp.ne.s32.totalorder %s212, %s213
      %p227 = scmp.eq.s32.totalorder %s28, 1
      %p228 = por %p226, %p227
      %p230 = scmp.ne.s32.totalorder %s213, %s229
      %p231 = scmp.eq.s32.totalorder %s28, 0
      %p232 = por %p230, %p231
      %s233 = ssub.s32 %s22, %s29
      %p234 = scmp.eq.s32.totalorder %s233, 0
      %s236 = sadd.s32 %s235, 1
      %s237 = scalar_select %p234, %s235, %s236
      %p240 = pneg %p234
      %p241 = scmp.eq.s32.totalorder %s22, 1
      %p242 = por %p240, %p241
      %p243 = scmp.ne.s32.totalorder %s235, %s238
      %p244 = scmp.eq.s32.totalorder %s22, 0
      %p245 = por %p243, %p244
      %p246 = scmp.ne.s32.totalorder %s235, %s238
      %p247 = scmp.eq.s32.totalorder %s27, 1
      %p248 = por %p246, %p247
      %p249 = scmp.ne.s32.totalorder %s238, %s239
      %p250 = scmp.eq.s32.totalorder %s27, 0
      %p251 = por %p249, %p250
      %p252 = scmp.ne.s32.totalorder %s238, %s239
      %p253 = scmp.eq.s32.totalorder %s28, 1
      %p254 = por %p252, %p253
      %p256 = scmp.ne.s32.totalorder %s239, %s255
      %p257 = scmp.eq.s32.totalorder %s28, 0
      %p258 = por %p256, %p257
      %s259 = ssub.s32 %s22, %s29
      %p260 = scmp.eq.s32.totalorder %s259, 0
      %s262 = sadd.s32 %s261, 1
      %s263 = scalar_select %p260, %s261, %s262
      %p266 = pneg %p260
      %p267 = scmp.eq.s32.totalorder %s22, 1
      %p268 = por %p266, %p267
      %p269 = scmp.ne.s32.totalorder %s261, %s264
      %p270 = scmp.eq.s32.totalorder %s22, 0
      %p271 = por %p269, %p270
      %p272 = scmp.ne.s32.totalorder %s261, %s264
      %p273 = scmp.eq.s32.totalorder %s27, 1
      %p274 = por %p272, %p273
      %p275 = scmp.ne.s32.totalorder %s264, %s265
      %p276 = scmp.eq.s32.totalorder %s27, 0
      %p277 = por %p275, %p276
      %p278 = scmp.ne.s32.totalorder %s264, %s265
      %p279 = scmp.eq.s32.totalorder %s28, 1
      %p280 = por %p278, %p279
      %p282 = scmp.ne.s32.totalorder %s265, %s281
      %p283 = scmp.eq.s32.totalorder %s28, 0
      %p284 = por %p282, %p283
      %s285 = ssub.s32 %s22, %s29
      %p286 = scmp.eq.s32.totalorder %s285, 0
      %s288 = sadd.s32 %s287, 1
      %s289 = scalar_select %p286, %s287, %s288
      %p292 = pneg %p286
      %p293 = scmp.eq.s32.totalorder %s22, 1
      %p294 = por %p292, %p293
      %p295 = scmp.ne.s32.totalorder %s287, %s290
      %p296 = scmp.eq.s32.totalorder %s22, 0
      %p297 = por %p295, %p296
      %p298 = scmp.ne.s32.totalorder %s287, %s290
      %p299 = scmp.eq.s32.totalorder %s27, 1
      %p300 = por %p298, %p299
      %p301 = scmp.ne.s32.totalorder %s290, %s291
      %p302 = scmp.eq.s32.totalorder %s27, 0
      %p303 = por %p301, %p302
      %p304 = scmp.ne.s32.totalorder %s290, %s291
      %p305 = scmp.eq.s32.totalorder %s28, 1
      %p306 = por %p304, %p305
      %p308 = scmp.ne.s32.totalorder %s291, %s307
      %p309 = scmp.eq.s32.totalorder %s28, 0
      %p310 = por %p308, %p309
      %s311 = ssub.s32 %s22, %s29
      %p312 = scmp.eq.s32.totalorder %s311, 0
      %s314 = sadd.s32 %s313, 1
      %s315 = scalar_select %p312, %s313, %s314
      %p318 = pneg %p312
      %p319 = scmp.eq.s32.totalorder %s22, 1
      %p320 = por %p318, %p319
      %p321 = scmp.ne.s32.totalorder %s313, %s316
      %p322 = scmp.eq.s32.totalorder %s22, 0
      %p323 = por %p321, %p322
      %p324 = scmp.ne.s32.totalorder %s313, %s316
      %p325 = scmp.eq.s32.totalorder %s27, 1
      %p326 = por %p324, %p325
      %p327 = scmp.ne.s32.totalorder %s316, %s317
      %p328 = scmp.eq.s32.totalorder %s27, 0
      %p329 = por %p327, %p328
      %p330 = scmp.ne.s32.totalorder %s316, %s317
      %p331 = scmp.eq.s32.totalorder %s28, 1
      %p332 = por %p330, %p331
      %p334 = scmp.ne.s32.totalorder %s317, %s333
      %p335 = scmp.eq.s32.totalorder %s28, 0
      %p336 = por %p334, %p335
      %s337 = ssub.s32 %s22, %s29
      %p338 = scmp.eq.s32.totalorder %s337, 0
      %s340 = sadd.s32 %s339, 1
      %s341 = scalar_select %p338, %s339, %s340
      %p344 = pneg %p338
      %p345 = scmp.eq.s32.totalorder %s22, 1
      %p346 = por %p344, %p345
      %p347 = scmp.ne.s32.totalorder %s339, %s342
      %p348 = scmp.eq.s32.totalorder %s22, 0
      %p349 = por %p347, %p348
      %p350 = scmp.ne.s32.totalorder %s339, %s342
      %p351 = scmp.eq.s32.totalorder %s27, 1
      %p352 = por %p350, %p351
      %p353 = scmp.ne.s32.totalorder %s342, %s343
      %p354 = scmp.eq.s32.totalorder %s27, 0
      %p355 = por %p353, %p354
      %p356 = scmp.ne.s32.totalorder %s342, %s343
      %p357 = scmp.eq.s32.totalorder %s28, 1
      %p358 = por %p356, %p357
      %p360 = scmp.ne.s32.totalorder %s343, %s359
      %p361 = scmp.eq.s32.totalorder %s28, 0
      %p362 = por %p360, %p361
      %s364 = sadd.s32 %s363, 1
      %p367 = scmp.eq.s32.totalorder %s22, 1
      %p368 = scmp.ne.s32.totalorder %s363, %s365
      %p369 = scmp.eq.s32.totalorder %s22, 0
      %p370 = por %p368, %p369
      %p371 = scmp.ne.s32.totalorder %s363, %s365
      %p372 = scmp.eq.s32.totalorder %s27, 1
      %p373 = por %p371, %p372
      %p374 = scmp.ne.s32.totalorder %s365, %s366
      %p375 = scmp.eq.s32.totalorder %s27, 0
      %p376 = por %p374, %p375
      %p377 = scmp.ne.s32.totalorder %s365, %s366
      %p378 = scmp.eq.s32.totalorder %s28, 1
      %p379 = por %p377, %p378
      %p381 = scmp.ne.s32.totalorder %s366, %s380
      %p382 = scmp.eq.s32.totalorder %s28, 0
      %p383 = por %p381, %p382
      %s385 = sadd.s32 %s384, 1
      %p388 = scmp.eq.s32.totalorder %s22, 1
      %p389 = scmp.ne.s32.totalorder %s384, %s386
      %p390 = scmp.eq.s32.totalorder %s22, 0
      %p391 = por %p389, %p390
      %p392 = scmp.ne.s32.totalorder %s384, %s386
      %p393 = scmp.eq.s32.totalorder %s27, 1
      %p394 = por %p392, %p393
      %p395 = scmp.ne.s32.totalorder %s386, %s387
      %p396 = scmp.eq.s32.totalorder %s27, 0
      %p397 = por %p395, %p396
      %p398 = scmp.ne.s32.totalorder %s386, %s387
      %p399 = scmp.eq.s32.totalorder %s28, 1
      %p400 = por %p398, %p399
      %p402 = scmp.ne.s32.totalorder %s387, %s401
      %p403 = scmp.eq.s32.totalorder %s28, 0
      %p404 = por %p402, %p403
      %s406 = sadd.s32 %s405, 1
      %p409 = scmp.eq.s32.totalorder %s22, 1
      %p410 = scmp.ne.s32.totalorder %s405, %s407
      %p411 = scmp.eq.s32.totalorder %s22, 0
      %p412 = por %p410, %p411
      %p413 = scmp.ne.s32.totalorder %s405, %s407
      %p414 = scmp.eq.s32.totalorder %s27, 1
      %p415 = por %p413, %p414
      %p416 = scmp.ne.s32.totalorder %s407, %s408
      %p417 = scmp.eq.s32.totalorder %s27, 0
      %p418 = por %p416, %p417
      %p419 = scmp.ne.s32.totalorder %s407, %s408
      %p420 = scmp.eq.s32.totalorder %s28, 1
      %p421 = por %p419, %p420
      %p423 = scmp.ne.s32.totalorder %s408, %s422
      %p424 = scmp.eq.s32.totalorder %s28, 0
      %p425 = por %p423, %p424
      %p426 = scmp.le.s32.totalorder 1, %s22
      %p427 = scmp.lt.s32.totalorder %s22, 3
      %p428 = pnand %p426, %p427
      %p429 = pneg %p428
      // Predicated region
      $region9: #{end_to_end_forward.3} parent=5 // pred_check
        _
      $region10: #{end_to_end_forward.3} parent=5 // pred_check_branch
        %431 = sbr.rel (%p428) target = $region12
      $region11: #{end_to_end_forward.3} parent=5 // pred_region
        %s432 = ssub.s32 %s22, 1
        // Predicated region
        $region13: #{end_to_end_forward.3} parent=11 // pred_check
          %p433 = pneg %p43
        $region14: #{end_to_end_forward.3} parent=11 // pred_check_branch
          %435 = sbr.rel (%p433) target = $region16
        $region15: #{end_to_end_forward.3} parent=11 // pred_region
          _
        $region16: #{end_to_end_forward.3} parent=11 // pred_fallthru
          _
        // Predicated region
        $region17: #{end_to_end_forward.3} parent=11 // pred_check
          %p436 = pneg %p376
        $region18: #{end_to_end_forward.3} parent=11 // pred_check_branch
          %438 = sbr.rel (%p436) target = $region20
        $region19: #{end_to_end_forward.3} parent=11 // pred_region
          _
        $region20: #{end_to_end_forward.3} parent=11 // pred_fallthru
          _
        // Predicated region
        $region21: #{end_to_end_forward.3} parent=11 // pred_check
          %p439 = pneg %p397
        $region22: #{end_to_end_forward.3} parent=11 // pred_check_branch
          %441 = sbr.rel (%p439) target = $region24
        $region23: #{end_to_end_forward.3} parent=11 // pred_region
          _
        $region24: #{end_to_end_forward.3} parent=11 // pred_fallthru
          _
      $region12: #{end_to_end_forward.3} parent=5 // pred_fallthru
        _
      %p442 = scmp.lt.s32.totalorder %s22, 2
      // Predicated region
      $region25: #{end_to_end_forward.3} parent=5 // pred_check
        %p443 = pneg %p442
      $region26: #{end_to_end_forward.3} parent=5 // pred_check_branch
        %445 = sbr.rel (%p443) target = $region28
      $region27: #{end_to_end_forward.3} parent=5 // pred_region
        // Predicated region
        $region29: #{end_to_end_forward.3} parent=27 // pred_check
          %p446 = pneg %p63
        $region30: #{end_to_end_forward.3} parent=27 // pred_check_branch
          %448 = sbr.rel (%p446) target = $region32
        $region31: #{end_to_end_forward.3} parent=27 // pred_region
          %p449 = scmp.lt.s32.totalorder %s22, 1
          %s450 = scalar_select %p449, %s22, 1
          %s451 = smul.addr %s450, 4
          %s452 = smul.addr %s451, 4
          %s453 = scalar_lea.vmem %s1, %s452
        $region32: #{end_to_end_forward.3} parent=27 // pred_fallthru
          _
        // Predicated region
        $region33: #{end_to_end_forward.3} parent=27 // pred_check
          %p454 = pneg %p89
        $region34: #{end_to_end_forward.3} parent=27 // pred_check_branch
          %456 = sbr.rel (%p454) target = $region36
        $region35: #{end_to_end_forward.3} parent=27 // pred_region
          %p457 = scmp.lt.s32.totalorder %s22, 1
          %s458 = scalar_select %p457, %s22, 1
          %s459 = scalar_lea.vmem %s2, %s458
        $region36: #{end_to_end_forward.3} parent=27 // pred_fallthru
          _
        // Predicated region
        $region37: #{end_to_end_forward.3} parent=27 // pred_check
          %p460 = pneg %p115
        $region38: #{end_to_end_forward.3} parent=27 // pred_check_branch
          %462 = sbr.rel (%p460) target = $region40
        $region39: #{end_to_end_forward.3} parent=27 // pred_region
          %p463 = scmp.lt.s32.totalorder %s22, 1
          %s464 = scalar_select %p463, %s22, 1
          %s465 = smul.addr %s464, 4
          %s466 = smul.addr %s465, 4
          %s467 = scalar_lea.vmem %s3, %s466
        $region40: #{end_to_end_forward.3} parent=27 // pred_fallthru
          _
        // Predicated region
        $region41: #{end_to_end_forward.3} parent=27 // pred_check
          %p468 = pneg %p141
        $region42: #{end_to_end_forward.3} parent=27 // pred_check_branch
          %470 = sbr.rel (%p468) target = $region44
        $region43: #{end_to_end_forward.3} parent=27 // pred_region
          %p471 = scmp.lt.s32.totalorder %s22, 1
          %s472 = scalar_select %p471, %s22, 1
          %s473 = scalar_lea.vmem %s4, %s472
        $region44: #{end_to_end_forward.3} parent=27 // pred_fallthru
          _
        // Predicated region
        $region45: #{end_to_end_forward.3} parent=27 // pred_check
          %p474 = pneg %p167
        $region46: #{end_to_end_forward.3} parent=27 // pred_check_branch
          %476 = sbr.rel (%p474) target = $region48
        $region47: #{end_to_end_forward.3} parent=27 // pred_region
          %p477 = scmp.lt.s32.totalorder %s22, 1
          %s478 = scalar_select %p477, %s22, 1
          %s479 = scalar_lea.vmem %s5, %s478
        $region48: #{end_to_end_forward.3} parent=27 // pred_fallthru
          _
        // Predicated region
        $region49: #{end_to_end_forward.3} parent=27 // pred_check
          %p480 = pneg %p193
        $region50: #{end_to_end_forward.3} parent=27 // pred_check_branch
          %482 = sbr.rel (%p480) target = $region52
        $region51: #{end_to_end_forward.3} parent=27 // pred_region
          %p483 = scmp.lt.s32.totalorder %s22, 1
          %s484 = scalar_select %p483, %s22, 1
          %s485 = scalar_lea.vmem %s6, %s484
        $region52: #{end_to_end_forward.3} parent=27 // pred_fallthru
          _
        // Predicated region
        $region53: #{end_to_end_forward.3} parent=27 // pred_check
          %p486 = pneg %p219
        $region54: #{end_to_end_forward.3} parent=27 // pred_check_branch
          %488 = sbr.rel (%p486) target = $region56
        $region55: #{end_to_end_forward.3} parent=27 // pred_region
          %p489 = scmp.lt.s32.totalorder %s22, 1
          %s490 = scalar_select %p489, %s22, 1
          %s491 = smul.addr %s490, 64
          %s492 = smul.addr %s491, 4
          %s493 = scalar_lea.vmem %s7, %s492
        $region56: #{end_to_end_forward.3} parent=27 // pred_fallthru
          _
        // Predicated region
        $region57: #{end_to_end_forward.3} parent=27 // pred_check
          %p494 = pneg %p245
        $region58: #{end_to_end_forward.3} parent=27 // pred_check_branch
          %496 = sbr.rel (%p494) target = $region60
        $region59: #{end_to_end_forward.3} parent=27 // pred_region
          %p497 = scmp.lt.s32.totalorder %s22, 1
          %s498 = scalar_select %p497, %s22, 1
          %s499 = smul.addr %s498, 16
          %s500 = scalar_lea.vmem %s8, %s499
        $region60: #{end_to_end_forward.3} parent=27 // pred_fallthru
          _
        // Predicated region
        $region61: #{end_to_end_forward.3} parent=27 // pred_check
          %p501 = pneg %p271
        $region62: #{end_to_end_forward.3} parent=27 // pred_check_branch
          %503 = sbr.rel (%p501) target = $region64
        $region63: #{end_to_end_forward.3} parent=27 // pred_region
          %p504 = scmp.lt.s32.totalorder %s22, 1
          %s505 = scalar_select %p504, %s22, 1
          %s506 = smul.addr %s505, 256
          %s507 = smul.addr %s506, 4
          %s508 = scalar_lea.vmem %s9, %s507
        $region64: #{end_to_end_forward.3} parent=27 // pred_fallthru
          _
        // Predicated region
        $region65: #{end_to_end_forward.3} parent=27 // pred_check
          %p509 = pneg %p297
        $region66: #{end_to_end_forward.3} parent=27 // pred_check_branch
          %511 = sbr.rel (%p509) target = $region68
        $region67: #{end_to_end_forward.3} parent=27 // pred_region
          %p512 = scmp.lt.s32.totalorder %s22, 1
          %s513 = scalar_select %p512, %s22, 1
          %s514 = scalar_lea.vmem %s10, %s513
        $region68: #{end_to_end_forward.3} parent=27 // pred_fallthru
          _
        // Predicated region
        $region69: #{end_to_end_forward.3} parent=27 // pred_check
          %p515 = pneg %p323
        $region70: #{end_to_end_forward.3} parent=27 // pred_check_branch
          %517 = sbr.rel (%p515) target = $region72
        $region71: #{end_to_end_forward.3} parent=27 // pred_region
          %p518 = scmp.lt.s32.totalorder %s22, 1
          %s519 = scalar_select %p518, %s22, 1
          %s520 = scalar_lea.vmem %s11, %s519
        $region72: #{end_to_end_forward.3} parent=27 // pred_fallthru
          _
        // Predicated region
        $region73: #{end_to_end_forward.3} parent=27 // pred_check
          %p521 = pneg %p349
        $region74: #{end_to_end_forward.3} parent=27 // pred_check_branch
          %523 = sbr.rel (%p521) target = $region76
        $region75: #{end_to_end_forward.3} parent=27 // pred_region
          %p524 = scmp.lt.s32.totalorder %s22, 1
          %s525 = scalar_select %p524, %s22, 1
          %s526 = scalar_lea.vmem %s12, %s525
        $region76: #{end_to_end_forward.3} parent=27 // pred_fallthru
          _
      $region28: #{end_to_end_forward.3} parent=5 // pred_fallthru
        _
      %p527 = scmp.le.s32.totalorder 1, %s22
      %p528 = scmp.lt.s32.totalorder %s22, 3
      %p529 = pnand %p527, %p528
      %p530 = pneg %p529
      // Predicated region
      $region77: #{end_to_end_forward.3} parent=5 // pred_check
        _
      $region78: #{end_to_end_forward.3} parent=5 // pred_check_branch
        %532 = sbr.rel (%p529) target = $region80
      $region79: #{end_to_end_forward.3} parent=5 // pred_region
        %s533 = ssub.s32 %s22, 1
        %p534 = pneg %p43
        %p535 = pneg %p40
        %p536 = scmp.lt.s32.totalorder %s27, 1
        %s537 = scalar_select %p536, %s27, 1
        %s538 = smul.addr %s537, 4
        %s539 = smul.addr %s538, 4
        %s540 = scalar_lea.vmem %s1, %s539
        %p541 = pneg %p69
        %p542 = pneg %p66
        %p543 = scmp.lt.s32.totalorder %s27, 1
        %s544 = scalar_select %p543, %s27, 1
        %s545 = scalar_lea.vmem %s2, %s544
        %p546 = pneg %p95
        %p547 = pneg %p92
        %p548 = scmp.lt.s32.totalorder %s27, 1
        %s549 = scalar_select %p548, %s27, 1
        %s550 = smul.addr %s549, 4
        %s551 = smul.addr %s550, 4
        %s552 = scalar_lea.vmem %s3, %s551
        %p553 = pneg %p121
        %p554 = pneg %p118
        %p555 = scmp.lt.s32.totalorder %s27, 1
        %s556 = scalar_select %p555, %s27, 1
        %s557 = scalar_lea.vmem %s4, %s556
        %p558 = pneg %p147
        %p559 = pneg %p144
        %p560 = scmp.lt.s32.totalorder %s27, 1
        %s561 = scalar_select %p560, %s27, 1
        %s562 = scalar_lea.vmem %s5, %s561
        %p563 = pneg %p173
        %p564 = pneg %p170
        %p565 = scmp.lt.s32.totalorder %s27, 1
        %s566 = scalar_select %p565, %s27, 1
        %s567 = scalar_lea.vmem %s6, %s566
        %p568 = pneg %p199
        %p569 = pneg %p196
        %p570 = scmp.lt.s32.totalorder %s27, 1
        %s571 = scalar_select %p570, %s27, 1
        %s572 = smul.addr %s571, 64
        %s573 = smul.addr %s572, 4
        %s574 = scalar_lea.vmem %s7, %s573
        %p575 = pneg %p225
        %p576 = pneg %p222
        %p577 = scmp.lt.s32.totalorder %s27, 1
        %s578 = scalar_select %p577, %s27, 1
        %s579 = smul.addr %s578, 16
        %s580 = scalar_lea.vmem %s8, %s579
        %p581 = pneg %p251
        %p582 = pneg %p248
        %p583 = scmp.lt.s32.totalorder %s27, 1
        %s584 = scalar_select %p583, %s27, 1
        %s585 = smul.addr %s584, 256
        %s586 = smul.addr %s585, 4
        %s587 = scalar_lea.vmem %s9, %s586
        %p588 = pneg %p277
        %p589 = pneg %p274
        %p590 = scmp.lt.s32.totalorder %s27, 1
        %s591 = scalar_select %p590, %s27, 1
        %s592 = scalar_lea.vmem %s10, %s591
        %p593 = pneg %p303
        %p594 = pneg %p300
        %p595 = scmp.lt.s32.totalorder %s27, 1
        %s596 = scalar_select %p595, %s27, 1
        %s597 = scalar_lea.vmem %s11, %s596
        %p598 = pneg %p329
        %p599 = pneg %p326
        %p600 = scmp.lt.s32.totalorder %s27, 1
        %s601 = scalar_select %p600, %s27, 1
        %s602 = scalar_lea.vmem %s12, %s601
        %p603 = pneg %p355
        %p604 = pneg %p352
        %p605 = pneg %p376
        %p606 = pneg %p373
        %p607 = pneg %p397
        %p608 = pneg %p394
        %p609 = pneg %p418
        %p610 = pneg %p415
        %p611 = scmp.lt.s32.totalorder %s27, 1
        %s612 = scalar_select %p611, %s27, 1
        %s613 = smul.addr %s612, 4
        %s614 = smul.addr %s613, 4
        %s615 = scalar_lea.vmem %s1, %s614
        %p616 = scmp.lt.s32.totalorder %s27, 1
        %s617 = scalar_select %p616, %s27, 1
        %s618 = scalar_lea.vmem %s2, %s617
        %p619 = scmp.lt.s32.totalorder %s27, 1
        %s620 = scalar_select %p619, %s27, 1
        %s621 = smul.addr %s620, 4
        %s622 = smul.addr %s621, 4
        %s623 = scalar_lea.vmem %s3, %s622
        %p624 = scmp.lt.s32.totalorder %s27, 1
        %s625 = scalar_select %p624, %s27, 1
        %s626 = scalar_lea.vmem %s4, %s625
        %p627 = scmp.lt.s32.totalorder %s27, 1
        %s628 = scalar_select %p627, %s27, 1
        %s629 = scalar_lea.vmem %s5, %s628
        %p630 = scmp.lt.s32.totalorder %s27, 1
        %s631 = scalar_select %p630, %s27, 1
        %s632 = scalar_lea.vmem %s6, %s631
        %p633 = scmp.lt.s32.totalorder %s27, 1
        %s634 = scalar_select %p633, %s27, 1
        %s635 = smul.addr %s634, 64
        %s636 = smul.addr %s635, 4
        %s637 = scalar_lea.vmem %s7, %s636
        %p638 = scmp.lt.s32.totalorder %s27, 1
        %s639 = scalar_select %p638, %s27, 1
        %s640 = smul.addr %s639, 16
        %s641 = scalar_lea.vmem %s8, %s640
        %p642 = scmp.lt.s32.totalorder %s27, 1
        %s643 = scalar_select %p642, %s27, 1
        %s644 = smul.addr %s643, 256
        %s645 = smul.addr %s644, 4
        %s646 = scalar_lea.vmem %s9, %s645
        %p647 = scmp.lt.s32.totalorder %s27, 1
        %s648 = scalar_select %p647, %s27, 1
        %s649 = scalar_lea.vmem %s10, %s648
        %p650 = scmp.lt.s32.totalorder %s27, 1
        %s651 = scalar_select %p650, %s27, 1
        %s652 = scalar_lea.vmem %s11, %s651
        %p653 = scmp.lt.s32.totalorder %s27, 1
        %s654 = scalar_select %p653, %s27, 1
        %s655 = scalar_lea.vmem %s12, %s654
        %p657 = scmp.eq.s32.totalorder %s27, 0
        // Predicated region
        $region81: #{end_to_end_forward.3} parent=79 // pred_check
          %p658 = pneg %p657
        $region82: #{end_to_end_forward.3} parent=79 // pred_check_branch
          %660 = sbr.rel (%p658) target = $region84
        $region83: #{end_to_end_forward.3} parent=79 // pred_region
          %v661 = vld [vmem:[%s0] sm:$0xff]
          %v662 = vld [vmem:[%s0 + $0x8] sm:$0xff]
          %vm663 = vcmask 261120
          %664 = vst.msk [vmem:[#allocation2] sm:$0xff] %vm663, %v661
          %665 = vst.msk [vmem:[#allocation2 + $0x8] sm:$0xff] %vm663, %v662
        $region84: #{end_to_end_forward.3} parent=79 // pred_fallthru
          _
        %v666 = vld [vmem:[#allocation2] sm:$0xff]
        %v667 = vld [vmem:[#allocation2 + $0x8] sm:$0xff]
        %v668 = vpack.c.bf16 %v667, %v666
        %v669 = vld [vmem:[%s615] sm:$0xf]
        %v670 = vld [vmem:[%s615 + $0x4] sm:$0xf]
        %v671 = vld [vmem:[%s615 + $0x8] sm:$0xf]
        %v672 = vld [vmem:[%s615 + $0xc] sm:$0xf]
        %v673 = vld [vmem:[%s618] sm:$0x1]
        %v675 = vlaneseq
        %v676 = vshrl.u32 %v675, 7
        %v677 = vsub.s32 0, %v676
        %v678 = vrot.slane %v673, %v677
        %v684 = vunpack.c.l.b16 %v669
        %v685 = vunpack.c.l.b16 %v670
        %v686 = vunpack.c.l.b16 %v671
        %v687 = vunpack.c.l.b16 %v672
        %v688 = vpack.c.b16 %v685, %v684
        %v689 = vpack.c.b16 %v687, %v686
        %vm692 = vcmask 261120
        %v694 = vsel %vm692, %v668, 0
        %696 = vmatprep.subr.bf16.mxu0 0
        %697 = vmatpush1.bf16.msra.mxu0 0
        %698 = vmatprep.subr.bf16.mxu0 0
        %699 = vmatpush1.bf16.msra.mxu0 0
        %700 = vmatprep.subr.bf16.mxu0 0
        %701 = vmatpush1.bf16.msra.mxu0 0
        %702 = vmatprep.subr.bf16.mxu0 0
        %703 = vmatpush1.bf16.msra.mxu0 0
        %704 = vmatprep.subr.bf16.mxu0 0
        %705 = vmatpush1.bf16.msra.mxu0 0
        %706 = vmatprep.subr.bf16.mxu0 0
        %707 = vmatpush1.bf16.msra.mxu0 0
        %708 = vmatprep.subr.bf16.mxu0 0
        %709 = vmatpush1.bf16.msra.mxu0 %v689
        %710 = vmatprep.subr.bf16.mxu0 0
        %711 = vmatpush1.bf16.msra.mxu0 %v688
        %712 = vmatprep.subr.bf16.mxu0 0
        %713 = vmatpush2.bf16.msra.mxu0 0
        %714 = vmatprep.subr.bf16.mxu0 0
        %715 = vmatpush2.bf16.msra.mxu0 0
        %716 = vmatprep.subr.bf16.mxu0 0
        %717 = vmatpush2.bf16.msra.mxu0 0
        %718 = vmatprep.subr.bf16.mxu0 0
        %719 = vmatpush2.bf16.msra.mxu0 0
        %720 = vmatprep.subr.bf16.mxu0 0
        %721 = vmatpush2.bf16.msra.mxu0 0
        %722 = vmatprep.subr.bf16.mxu0 0
        %723 = vmatpush2.bf16.msra.mxu0 0
        %724 = vmatprep.subr.bf16.mxu0 0
        %725 = vmatpush2.bf16.msra.mxu0 0
        %726 = vmatprep.subr.bf16.mxu0 0
        %727 = vmatpush2.bf16.msra.mxu0 0
        %728 = vmatprep.mubr.bf16.mxu0 0
        %729 = vmatmul.mubr.bf16.gmra.mxu0 %v694
        %v730 = vpop.f32.mrf.mxu0
        %v731 = vadd.f32 %v678, %v730
        %v732 = vpop.f32.mrf.mxu0
        %v733 = vpop.f32.mrf.mxu0
        %v734 = vadd.f32 %v678, %v733
        %v735 = vpop.f32.mrf.mxu0
        %736 = vdwg.mxu0
        %v737 = vpack.c.bf16 %v731, %v731
        %v738 = vpack.c.bf16 %v734, %v734
        %740 = vrot.lane.b32.xlu0 %v737, 96
        %v741 = vpop.permute.xlu0 %740
        %vm742 = vcmask 64512
        %v744 = vsel %vm742, %v737, 0
        %v747 = vsel %vm742, %v741, 0
        %749 = vmatprep.subr.bf16.mxu0 0
        %750 = vmatpush1.bf16.xpose.msra.mxu0 0
        %751 = vmatprep.subr.bf16.mxu0 0
        %752 = vmatpush1.bf16.xpose.msra.mxu0 0
        %753 = vmatprep.subr.bf16.mxu0 0
        %754 = vmatpush1.bf16.xpose.msra.mxu0 0
        %755 = vmatprep.subr.bf16.mxu0 0
        %756 = vmatpush1.bf16.xpose.msra.mxu0 0
        %757 = vmatprep.subr.bf16.mxu0 0
        %758 = vmatpush1.bf16.xpose.msra.mxu0 0
        %759 = vmatprep.subr.bf16.mxu0 0
        %760 = vmatpush1.bf16.xpose.msra.mxu0 0
        %761 = vmatprep.subr.bf16.mxu0 0
        %762 = vmatpush1.bf16.xpose.msra.mxu0 0
        %763 = vmatprep.subr.bf16.mxu0 0
        %764 = vmatpush1.bf16.xpose.msra.mxu0 %v747
        %765 = vmatprep.subr.bf16.mxu0 0
        %766 = vmatpush2.bf16.xpose.msra.mxu0 0
        %767 = vmatprep.subr.bf16.mxu0 0
        %768 = vmatpush2.bf16.xpose.msra.mxu0 0
        %769 = vmatprep.subr.bf16.mxu0 0
        %770 = vmatpush2.bf16.xpose.msra.mxu0 0
        %771 = vmatprep.subr.bf16.mxu0 0
        %772 = vmatpush2.bf16.xpose.msra.mxu0 0
        %773 = vmatprep.subr.bf16.mxu0 0
        %774 = vmatpush2.bf16.xpose.msra.mxu0 0
        %775 = vmatprep.subr.bf16.mxu0 0
        %776 = vmatpush2.bf16.xpose.msra.mxu0 0
        %777 = vmatprep.subr.bf16.mxu0 0
        %778 = vmatpush2.bf16.xpose.msra.mxu0 0
        %779 = vmatprep.subr.bf16.mxu0 0
        %780 = vmatpush2.bf16.xpose.msra.mxu0 0
        %781 = vmatprep.mubr.bf16.mxu0 0
        %782 = vmatmul.mubr.bf16.gmra.mxu0 %v744
        %v783 = vpop.f32.mrf.mxu0
        %v784 = vadd.f32 0.0, %v783
        %v785 = vpop.f32.mrf.mxu0
        %v786 = vpop.f32.mrf.mxu0
        %v787 = vpop.f32.mrf.mxu0
        %788 = vdwg.mxu0
        %790 = vrot.lane.b32.xlu0 %v738, 96
        %v791 = vpop.permute.xlu0 %790
        %v793 = vsel %vm742, %v738, 0
        %v796 = vsel %vm742, %v791, 0
        %798 = vmatprep.subr.bf16.mxu0 0
        %799 = vmatpush1.bf16.xpose.msra.mxu0 0
        %800 = vmatprep.subr.bf16.mxu0 0
        %801 = vmatpush1.bf16.xpose.msra.mxu0 0
        %802 = vmatprep.subr.bf16.mxu0 0
        %803 = vmatpush1.bf16.xpose.msra.mxu0 0
        %804 = vmatprep.subr.bf16.mxu0 0
        %805 = vmatpush1.bf16.xpose.msra.mxu0 0
        %806 = vmatprep.subr.bf16.mxu0 0
        %807 = vmatpush1.bf16.xpose.msra.mxu0 0
        %808 = vmatprep.subr.bf16.mxu0 0
        %809 = vmatpush1.bf16.xpose.msra.mxu0 0
        %810 = vmatprep.subr.bf16.mxu0 0
        %811 = vmatpush1.bf16.xpose.msra.mxu0 0
        %812 = vmatprep.subr.bf16.mxu0 0
        %813 = vmatpush1.bf16.xpose.msra.mxu0 %v796
        %814 = vmatprep.subr.bf16.mxu0 0
        %815 = vmatpush2.bf16.xpose.msra.mxu0 0
        %816 = vmatprep.subr.bf16.mxu0 0
        %817 = vmatpush2.bf16.xpose.msra.mxu0 0
        %818 = vmatprep.subr.bf16.mxu0 0
        %819 = vmatpush2.bf16.xpose.msra.mxu0 0
        %820 = vmatprep.subr.bf16.mxu0 0
        %821 = vmatpush2.bf16.xpose.msra.mxu0 0
        %822 = vmatprep.subr.bf16.mxu0 0
        %823 = vmatpush2.bf16.xpose.msra.mxu0 0
        %824 = vmatprep.subr.bf16.mxu0 0
        %825 = vmatpush2.bf16.xpose.msra.mxu0 0
        %826 = vmatprep.subr.bf16.mxu0 0
        %827 = vmatpush2.bf16.xpose.msra.mxu0 0
        %828 = vmatprep.subr.bf16.mxu0 0
        %829 = vmatpush2.bf16.xpose.msra.mxu0 0
        %830 = vmatprep.mubr.bf16.mxu0 0
        %831 = vmatmul.mubr.bf16.gmra.mxu0 %v793
        %v832 = vpop.f32.mrf.mxu0
        %v833 = vadd.f32 0.0, %v832
        %v834 = vpop.f32.mrf.mxu0
        %v835 = vpop.f32.mrf.mxu0
        %v836 = vpop.f32.mrf.mxu0
        %837 = vdwg.mxu0
        %v838 = vmul.f32 %v784, 0.35355338
        %v839 = vmul.f32 %v833, 0.35355338
        %v840 = vsel %vm742, %v838, -inf
        %841 = vmax.xlane.f32.xlu0 %v840
        %v842 = vpop.xlane.xlu0 %841
        %v843 = vsel %vm742, %v839, -inf
        %844 = vmax.xlane.f32.xlu0 %v843
        %v845 = vpop.xlane.xlu0 %844
        %v846 = vsub.f32 %v838, %v842
        %v847 = vsub.f32 %v839, %v845
        %v848 = vmul.f32 %v846, 1.442695
        %v849 = vpow.pop %v848
        %v850 = vmul.f32 %v847, 1.442695
        %v851 = vpow.pop %v850
        %v852 = vsel %vm742, %v849, 0.0
        %853 = vadd.xlane.f32.xlu0 %v852
        %v854 = vpop.xlane.xlu0 %853
        %v855 = vsel %vm742, %v851, 0.0
        %856 = vadd.xlane.f32.xlu0 %v855
        %v857 = vpop.xlane.xlu0 %856
        %v858 = vrcp.pop %v854
        %v859 = vmul.f32 %v849, %v858
        %v860 = vrcp.pop %v857
        %v861 = vmul.f32 %v851, %v860
        %v862 = vpack.c.bf16 %v859, %v859
        %v863 = vpack.c.bf16 %v861, %v861
        %864 = vrot.lane.b32.xlu0 %v737, 64
        %v865 = vpop.permute.xlu0 %864
        %v867 = vsel %vm742, %v862, 0
        %vm869 = vcmask 1043456
        %v871 = vsel %vm869, %v865, 0
        %873 = vmatprep.subr.bf16.mxu0 0
        %874 = vmatpush1.bf16.msra.mxu0 0
        %875 = vmatprep.subr.bf16.mxu0 0
        %876 = vmatpush1.bf16.msra.mxu0 0
        %877 = vmatprep.subr.bf16.mxu0 0
        %878 = vmatpush1.bf16.msra.mxu0 0
        %879 = vmatprep.subr.bf16.mxu0 0
        %880 = vmatpush1.bf16.msra.mxu0 0
        %881 = vmatprep.subr.bf16.mxu0 0
        %882 = vmatpush1.bf16.msra.mxu0 0
        %883 = vmatprep.subr.bf16.mxu0 0
        %884 = vmatpush1.bf16.msra.mxu0 0
        %885 = vmatprep.subr.bf16.mxu0 0
        %886 = vmatpush1.bf16.msra.mxu0 0
        %887 = vmatprep.subr.bf16.mxu0 0
        %888 = vmatpush1.bf16.msra.mxu0 %v871
        %889 = vmatprep.subr.bf16.mxu0 0
        %890 = vmatpush2.bf16.msra.mxu0 0
        %891 = vmatprep.subr.bf16.mxu0 0
        %892 = vmatpush2.bf16.msra.mxu0 0
        %893 = vmatprep.subr.bf16.mxu0 0
        %894 = vmatpush2.bf16.msra.mxu0 0
        %895 = vmatprep.subr.bf16.mxu0 0
        %896 = vmatpush2.bf16.msra.mxu0 0
        %897 = vmatprep.subr.bf16.mxu0 0
        %898 = vmatpush2.bf16.msra.mxu0 0
        %899 = vmatprep.subr.bf16.mxu0 0
        %900 = vmatpush2.bf16.msra.mxu0 0
        %901 = vmatprep.subr.bf16.mxu0 0
        %902 = vmatpush2.bf16.msra.mxu0 0
        %903 = vmatprep.subr.bf16.mxu0 0
        %904 = vmatpush2.bf16.msra.mxu0 0
        %905 = vmatprep.mubr.bf16.mxu0 0
        %906 = vmatmul.mubr.bf16.gmra.mxu0 %v867
        %v907 = vpop.f32.mrf.mxu0
        %v908 = vadd.f32 0.0, %v907
        %v909 = vpop.f32.mrf.mxu0
        %v910 = vpop.f32.mrf.mxu0
        %v911 = vpop.f32.mrf.mxu0
        %912 = vdwg.mxu0
        %913 = vrot.lane.b32.xlu0 %v738, 64
        %v914 = vpop.permute.xlu0 %913
        %v916 = vsel %vm742, %v863, 0
        %v919 = vsel %vm869, %v914, 0
        %921 = vmatprep.subr.bf16.mxu0 0
        %922 = vmatpush1.bf16.msra.mxu0 0
        %923 = vmatprep.subr.bf16.mxu0 0
        %924 = vmatpush1.bf16.msra.mxu0 0
        %925 = vmatprep.subr.bf16.mxu0 0
        %926 = vmatpush1.bf16.msra.mxu0 0
        %927 = vmatprep.subr.bf16.mxu0 0
        %928 = vmatpush1.bf16.msra.mxu0 0
        %929 = vmatprep.subr.bf16.mxu0 0
        %930 = vmatpush1.bf16.msra.mxu0 0
        %931 = vmatprep.subr.bf16.mxu0 0
        %932 = vmatpush1.bf16.msra.mxu0 0
        %933 = vmatprep.subr.bf16.mxu0 0
        %934 = vmatpush1.bf16.msra.mxu0 0
        %935 = vmatprep.subr.bf16.mxu0 0
        %936 = vmatpush1.bf16.msra.mxu0 %v919
        %937 = vmatprep.subr.bf16.mxu0 0
        %938 = vmatpush2.bf16.msra.mxu0 0
        %939 = vmatprep.subr.bf16.mxu0 0
        %940 = vmatpush2.bf16.msra.mxu0 0
        %941 = vmatprep.subr.bf16.mxu0 0
        %942 = vmatpush2.bf16.msra.mxu0 0
        %943 = vmatprep.subr.bf16.mxu0 0
        %944 = vmatpush2.bf16.msra.mxu0 0
        %945 = vmatprep.subr.bf16.mxu0 0
        %946 = vmatpush2.bf16.msra.mxu0 0
        %947 = vmatprep.subr.bf16.mxu0 0
        %948 = vmatpush2.bf16.msra.mxu0 0
        %949 = vmatprep.subr.bf16.mxu0 0
        %950 = vmatpush2.bf16.msra.mxu0 0
        %951 = vmatprep.subr.bf16.mxu0 0
        %952 = vmatpush2.bf16.msra.mxu0 0
        %953 = vmatprep.mubr.bf16.mxu0 0
        %954 = vmatmul.mubr.bf16.gmra.mxu0 %v916
        %v955 = vpop.f32.mrf.mxu0
        %v956 = vadd.f32 0.0, %v955
        %v957 = vpop.f32.mrf.mxu0
        %v958 = vpop.f32.mrf.mxu0
        %v959 = vpop.f32.mrf.mxu0
        %960 = vdwg.mxu0
        %961 = vrot.lane.b32.xlu0 %v737, 120
        %v962 = vpop.permute.xlu0 %961
        %963 = vrot.lane.b32.xlu0 %v737, 88
        %v964 = vpop.permute.xlu0 %963
        %v966 = vsel %vm742, %v962, 0
        %v969 = vsel %vm742, %v964, 0
        %971 = vmatprep.subr.bf16.mxu0 0
        %972 = vmatpush1.bf16.xpose.msra.mxu0 0
        %973 = vmatprep.subr.bf16.mxu0 0
        %974 = vmatpush1.bf16.xpose.msra.mxu0 0
        %975 = vmatprep.subr.bf16.mxu0 0
        %976 = vmatpush1.bf16.xpose.msra.mxu0 0
        %977 = vmatprep.subr.bf16.mxu0 0
        %978 = vmatpush1.bf16.xpose.msra.mxu0 0
        %979 = vmatprep.subr.bf16.mxu0 0
        %980 = vmatpush1.bf16.xpose.msra.mxu0 0
        %981 = vmatprep.subr.bf16.mxu0 0
        %982 = vmatpush1.bf16.xpose.msra.mxu0 0
        %983 = vmatprep.subr.bf16.mxu0 0
        %984 = vmatpush1.bf16.xpose.msra.mxu0 0
        %985 = vmatprep.subr.bf16.mxu0 0
        %986 = vmatpush1.bf16.xpose.msra.mxu0 %v969
        %987 = vmatprep.subr.bf16.mxu0 0
        %988 = vmatpush2.bf16.xpose.msra.mxu0 0
        %989 = vmatprep.subr.bf16.mxu0 0
        %990 = vmatpush2.bf16.xpose.msra.mxu0 0
        %991 = vmatprep.subr.bf16.mxu0 0
        %992 = vmatpush2.bf16.xpose.msra.mxu0 0
        %993 = vmatprep.subr.bf16.mxu0 0
        %994 = vmatpush2.bf16.xpose.msra.mxu0 0
        %995 = vmatprep.subr.bf16.mxu0 0
        %996 = vmatpush2.bf16.xpose.msra.mxu0 0
        %997 = vmatprep.subr.bf16.mxu0 0
        %998 = vmatpush2.bf16.xpose.msra.mxu0 0
        %999 = vmatprep.subr.bf16.mxu0 0
        %1000 = vmatpush2.bf16.xpose.msra.mxu0 0
        %1001 = vmatprep.subr.bf16.mxu0 0
        %1002 = vmatpush2.bf16.xpose.msra.mxu0 0
        %1003 = vmatprep.mubr.bf16.mxu0 0
        %1004 = vmatmul.mubr.bf16.gmra.mxu0 %v966
        %v1005 = vpop.f32.mrf.mxu0
        %v1006 = vadd.f32 0.0, %v1005
        %v1007 = vpop.f32.mrf.mxu0
        %v1008 = vpop.f32.mrf.mxu0
        %v1009 = vpop.f32.mrf.mxu0
        %1010 = vdwg.mxu0
        %1011 = vrot.lane.b32.xlu0 %v738, 120
        %v1012 = vpop.permute.xlu0 %1011
        %1013 = vrot.lane.b32.xlu0 %v738, 88
        %v1014 = vpop.permute.xlu0 %1013
        %v1016 = vsel %vm742, %v1012, 0
        %v1019 = vsel %vm742, %v1014, 0
        %1021 = vmatprep.subr.bf16.mxu0 0
        %1022 = vmatpush1.bf16.xpose.msra.mxu0 0
        %1023 = vmatprep.subr.bf16.mxu0 0
        %1024 = vmatpush1.bf16.xpose.msra.mxu0 0
        %1025 = vmatprep.subr.bf16.mxu0 0
        %1026 = vmatpush1.bf16.xpose.msra.mxu0 0
        %1027 = vmatprep.subr.bf16.mxu0 0
        %1028 = vmatpush1.bf16.xpose.msra.mxu0 0
        %1029 = vmatprep.subr.bf16.mxu0 0
        %1030 = vmatpush1.bf16.xpose.msra.mxu0 0
        %1031 = vmatprep.subr.bf16.mxu0 0
        %1032 = vmatpush1.bf16.xpose.msra.mxu0 0
        %1033 = vmatprep.subr.bf16.mxu0 0
        %1034 = vmatpush1.bf16.xpose.msra.mxu0 0
        %1035 = vmatprep.subr.bf16.mxu0 0
        %1036 = vmatpush1.bf16.xpose.msra.mxu0 %v1019
        %1037 = vmatprep.subr.bf16.mxu0 0
        %1038 = vmatpush2.bf16.xpose.msra.mxu0 0
        %1039 = vmatprep.subr.bf16.mxu0 0
        %1040 = vmatpush2.bf16.xpose.msra.mxu0 0
        %1041 = vmatprep.subr.bf16.mxu0 0
        %1042 = vmatpush2.bf16.xpose.msra.mxu0 0
        %1043 = vmatprep.subr.bf16.mxu0 0
        %1044 = vmatpush2.bf16.xpose.msra.mxu0 0
        %1045 = vmatprep.subr.bf16.mxu0 0
        %1046 = vmatpush2.bf16.xpose.msra.mxu0 0
        %1047 = vmatprep.subr.bf16.mxu0 0
        %1048 = vmatpush2.bf16.xpose.msra.mxu0 0
        %1049 = vmatprep.subr.bf16.mxu0 0
        %1050 = vmatpush2.bf16.xpose.msra.mxu0 0
        %1051 = vmatprep.subr.bf16.mxu0 0
        %1052 = vmatpush2.bf16.xpose.msra.mxu0 0
        %1053 = vmatprep.mubr.bf16.mxu0 0
        %1054 = vmatmul.mubr.bf16.gmra.mxu0 %v1016
        %v1055 = vpop.f32.mrf.mxu0
        %v1056 = vadd.f32 0.0, %v1055
        %v1057 = vpop.f32.mrf.mxu0
        %v1058 = vpop.f32.mrf.mxu0
        %v1059 = vpop.f32.mrf.mxu0
        %1060 = vdwg.mxu0
        %v1061 = vmul.f32 %v1006, 0.35355338
        %v1062 = vmul.f32 %v1056, 0.35355338
        %v1063 = vsel %vm742, %v1061, -inf
        %1064 = vmax.xlane.f32.xlu0 %v1063
        %v1065 = vpop.xlane.xlu0 %1064
        %v1066 = vsel %vm742, %v1062, -inf
        %1067 = vmax.xlane.f32.xlu0 %v1066
        %v1068 = vpop.xlane.xlu0 %1067
        %v1069 = vsub.f32 %v1061, %v1065
        %v1070 = vsub.f32 %v1062, %v1068
        %v1071 = vmul.f32 %v1069, 1.442695
        %v1072 = vpow.pop %v1071
        %v1073 = vmul.f32 %v1070, 1.442695
        %v1074 = vpow.pop %v1073
        %v1075 = vsel %vm742, %v1072, 0.0
        %1076 = vadd.xlane.f32.xlu0 %v1075
        %v1077 = vpop.xlane.xlu0 %1076
        %v1078 = vsel %vm742, %v1074, 0.0
        %1079 = vadd.xlane.f32.xlu0 %v1078
        %v1080 = vpop.xlane.xlu0 %1079
        %v1081 = vrcp.pop %v1077
        %v1082 = vmul.f32 %v1072, %v1081
        %v1083 = vrcp.pop %v1080
        %v1084 = vmul.f32 %v1074, %v1083
        %v1085 = vpack.c.bf16 %v1082, %v1082
        %v1086 = vpack.c.bf16 %v1084, %v1084
        %1087 = vrot.lane.b32.xlu0 %v737, 56
        %v1088 = vpop.permute.xlu0 %1087
        %v1090 = vsel %vm742, %v1085, 0
        %v1093 = vsel %vm869, %v1088, 0
        %1095 = vmatprep.subr.bf16.mxu0 0
        %1096 = vmatpush1.bf16.msra.mxu0 0
        %1097 = vmatprep.subr.bf16.mxu0 0
        %1098 = vmatpush1.bf16.msra.mxu0 0
        %1099 = vmatprep.subr.bf16.mxu0 0
        %1100 = vmatpush1.bf16.msra.mxu0 0
        %1101 = vmatprep.subr.bf16.mxu0 0
        %1102 = vmatpush1.bf16.msra.mxu0 0
        %1103 = vmatprep.subr.bf16.mxu0 0
        %1104 = vmatpush1.bf16.msra.mxu0 0
        %1105 = vmatprep.subr.bf16.mxu0 0
        %1106 = vmatpush1.bf16.msra.mxu0 0
        %1107 = vmatprep.subr.bf16.mxu0 0
        %1108 = vmatpush1.bf16.msra.mxu0 0
        %1109 = vmatprep.subr.bf16.mxu0 0
        %1110 = vmatpush1.bf16.msra.mxu0 %v1093
        %1111 = vmatprep.subr.bf16.mxu0 0
        %1112 = vmatpush2.bf16.msra.mxu0 0
        %1113 = vmatprep.subr.bf16.mxu0 0
        %1114 = vmatpush2.bf16.msra.mxu0 0
        %1115 = vmatprep.subr.bf16.mxu0 0
        %1116 = vmatpush2.bf16.msra.mxu0 0
        %1117 = vmatprep.subr.bf16.mxu0 0
        %1118 = vmatpush2.bf16.msra.mxu0 0
        %1119 = vmatprep.subr.bf16.mxu0 0
        %1120 = vmatpush2.bf16.msra.mxu0 0
        %1121 = vmatprep.subr.bf16.mxu0 0
        %1122 = vmatpush2.bf16.msra.mxu0 0
        %1123 = vmatprep.subr.bf16.mxu0 0
        %1124 = vmatpush2.bf16.msra.mxu0 0
        %1125 = vmatprep.subr.bf16.mxu0 0
        %1126 = vmatpush2.bf16.msra.mxu0 0
        %1127 = vmatprep.mubr.bf16.mxu0 0
        %1128 = vmatmul.mubr.bf16.gmra.mxu0 %v1090
        %v1129 = vpop.f32.mrf.mxu0
        %v1130 = vadd.f32 0.0, %v1129
        %v1131 = vpop.f32.mrf.mxu0
        %v1132 = vpop.f32.mrf.mxu0
        %v1133 = vpop.f32.mrf.mxu0
        %1134 = vdwg.mxu0
        %1135 = vrot.lane.b32.xlu0 %v738, 56
        %v1136 = vpop.permute.xlu0 %1135
        %v1138 = vsel %vm742, %v1086, 0
        %v1141 = vsel %vm869, %v1136, 0
        %1143 = vmatprep.subr.bf16.mxu0 0
        %1144 = vmatpush1.bf16.msra.mxu0 0
        %1145 = vmatprep.subr.bf16.mxu0 0
        %1146 = vmatpush1.bf16.msra.mxu0 0
        %1147 = vmatprep.subr.bf16.mxu0 0
        %1148 = vmatpush1.bf16.msra.mxu0 0
        %1149 = vmatprep.subr.bf16.mxu0 0
        %1150 = vmatpush1.bf16.msra.mxu0 0
        %1151 = vmatprep.subr.bf16.mxu0 0
        %1152 = vmatpush1.bf16.msra.mxu0 0
        %1153 = vmatprep.subr.bf16.mxu0 0
        %1154 = vmatpush1.bf16.msra.mxu0 0
        %1155 = vmatprep.subr.bf16.mxu0 0
        %1156 = vmatpush1.bf16.msra.mxu0 0
        %1157 = vmatprep.subr.bf16.mxu0 0
        %1158 = vmatpush1.bf16.msra.mxu0 %v1141
        %1159 = vmatprep.subr.bf16.mxu0 0
        %1160 = vmatpush2.bf16.msra.mxu0 0
        %1161 = vmatprep.subr.bf16.mxu0 0
        %1162 = vmatpush2.bf16.msra.mxu0 0
        %1163 = vmatprep.subr.bf16.mxu0 0
        %1164 = vmatpush2.bf16.msra.mxu0 0
        %1165 = vmatprep.subr.bf16.mxu0 0
        %1166 = vmatpush2.bf16.msra.mxu0 0
        %1167 = vmatprep.subr.bf16.mxu0 0
        %1168 = vmatpush2.bf16.msra.mxu0 0
        %1169 = vmatprep.subr.bf16.mxu0 0
        %1170 = vmatpush2.bf16.msra.mxu0 0
        %1171 = vmatprep.subr.bf16.mxu0 0
        %1172 = vmatpush2.bf16.msra.mxu0 0
        %1173 = vmatprep.subr.bf16.mxu0 0
        %1174 = vmatpush2.bf16.msra.mxu0 0
        %1175 = vmatprep.mubr.bf16.mxu0 0
        %1176 = vmatmul.mubr.bf16.gmra.mxu0 %v1138
        %v1177 = vpop.f32.mrf.mxu0
        %v1178 = vadd.f32 0.0, %v1177
        %v1179 = vpop.f32.mrf.mxu0
        %v1180 = vpop.f32.mrf.mxu0
        %v1181 = vpop.f32.mrf.mxu0
        %1182 = vdwg.mxu0
        %1183 = vrot.lane.b32.xlu0 %v737, 112
        %v1184 = vpop.permute.xlu0 %1183
        %1185 = vrot.lane.b32.xlu0 %v737, 80
        %v1186 = vpop.permute.xlu0 %1185
        %v1188 = vsel %vm742, %v1184, 0
        %v1191 = vsel %vm742, %v1186, 0
        %1193 = vmatprep.subr.bf16.mxu0 0
        %1194 = vmatpush1.bf16.xpose.msra.mxu0 0
        %1195 = vmatprep.subr.bf16.mxu0 0
        %1196 = vmatpush1.bf16.xpose.msra.mxu0 0
        %1197 = vmatprep.subr.bf16.mxu0 0
        %1198 = vmatpush1.bf16.xpose.msra.mxu0 0
        %1199 = vmatprep.subr.bf16.mxu0 0
        %1200 = vmatpush1.bf16.xpose.msra.mxu0 0
        %1201 = vmatprep.subr.bf16.mxu0 0
        %1202 = vmatpush1.bf16.xpose.msra.mxu0 0
        %1203 = vmatprep.subr.bf16.mxu0 0
        %1204 = vmatpush1.bf16.xpose.msra.mxu0 0
        %1205 = vmatprep.subr.bf16.mxu0 0
        %1206 = vmatpush1.bf16.xpose.msra.mxu0 0
        %1207 = vmatprep.subr.bf16.mxu0 0
        %1208 = vmatpush1.bf16.xpose.msra.mxu0 %v1191
        %1209 = vmatprep.subr.bf16.mxu0 0
        %1210 = vmatpush2.bf16.xpose.msra.mxu0 0
        %1211 = vmatprep.subr.bf16.mxu0 0
        %1212 = vmatpush2.bf16.xpose.msra.mxu0 0
        %1213 = vmatprep.subr.bf16.mxu0 0
        %1214 = vmatpush2.bf16.xpose.msra.mxu0 0
        %1215 = vmatprep.subr.bf16.mxu0 0
        %1216 = vmatpush2.bf16.xpose.msra.mxu0 0
        %1217 = vmatprep.subr.bf16.mxu0 0
        %1218 = vmatpush2.bf16.xpose.msra.mxu0 0
        %1219 = vmatprep.subr.bf16.mxu0 0
        %1220 = vmatpush2.bf16.xpose.msra.mxu0 0
        %1221 = vmatprep.subr.bf16.mxu0 0
        %1222 = vmatpush2.bf16.xpose.msra.mxu0 0
        %1223 = vmatprep.subr.bf16.mxu0 0
        %1224 = vmatpush2.bf16.xpose.msra.mxu0 0
        %1225 = vmatprep.mubr.bf16.mxu0 0
        %1226 = vmatmul.mubr.bf16.gmra.mxu0 %v1188
        %v1227 = vpop.f32.mrf.mxu0
        %v1228 = vadd.f32 0.0, %v1227
        %v1229 = vpop.f32.mrf.mxu0
        %v1230 = vpop.f32.mrf.mxu0
        %v1231 = vpop.f32.mrf.mxu0
        %1232 = vdwg.mxu0
        %1233 = vrot.lane.b32.xlu0 %v738, 112
        %v1234 = vpop.permute.xlu0 %1233
        %1235 = vrot.lane.b32.xlu0 %v738, 80
        %v1236 = vpop.permute.xlu0 %1235
        %v1238 = vsel %vm742, %v1234, 0
        %v1241 = vsel %vm742, %v1236, 0
        %1243 = vmatprep.subr.bf16.mxu0 0
        %1244 = vmatpush1.bf16.xpose.msra.mxu0 0
        %1245 = vmatprep.subr.bf16.mxu0 0
        %1246 = vmatpush1.bf16.xpose.msra.mxu0 0
        %1247 = vmatprep.subr.bf16.mxu0 0
        %1248 = vmatpush1.bf16.xpose.msra.mxu0 0
        %1249 = vmatprep.subr.bf16.mxu0 0
        %1250 = vmatpush1.bf16.xpose.msra.mxu0 0
        %1251 = vmatprep.subr.bf16.mxu0 0
        %1252 = vmatpush1.bf16.xpose.msra.mxu0 0
        %1253 = vmatprep.subr.bf16.mxu0 0
        %1254 = vmatpush1.bf16.xpose.msra.mxu0 0
        %1255 = vmatprep.subr.bf16.mxu0 0
        %1256 = vmatpush1.bf16.xpose.msra.mxu0 0
        %1257 = vmatprep.subr.bf16.mxu0 0
        %1258 = vmatpush1.bf16.xpose.msra.mxu0 %v1241
        %1259 = vmatprep.subr.bf16.mxu0 0
        %1260 = vmatpush2.bf16.xpose.msra.mxu0 0
        %1261 = vmatprep.subr.bf16.mxu0 0
        %1262 = vmatpush2.bf16.xpose.msra.mxu0 0
        %1263 = vmatprep.subr.bf16.mxu0 0
        %1264 = vmatpush2.bf16.xpose.msra.mxu0 0
        %1265 = vmatprep.subr.bf16.mxu0 0
        %1266 = vmatpush2.bf16.xpose.msra.mxu0 0
        %1267 = vmatprep.subr.bf16.mxu0 0
        %1268 = vmatpush2.bf16.xpose.msra.mxu0 0
        %1269 = vmatprep.subr.bf16.mxu0 0
        %1270 = vmatpush2.bf16.xpose.msra.mxu0 0
        %1271 = vmatprep.subr.bf16.mxu0 0
        %1272 = vmatpush2.bf16.xpose.msra.mxu0 0
        %1273 = vmatprep.subr.bf16.mxu0 0
        %1274 = vmatpush2.bf16.xpose.msra.mxu0 0
        %1275 = vmatprep.mubr.bf16.mxu0 0
        %1276 = vmatmul.mubr.bf16.gmra.mxu0 %v1238
        %v1277 = vpop.f32.mrf.mxu0
        %v1278 = vadd.f32 0.0, %v1277
        %v1279 = vpop.f32.mrf.mxu0
        %v1280 = vpop.f32.mrf.mxu0
        %v1281 = vpop.f32.mrf.mxu0
        %1282 = vdwg.mxu0
        %v1283 = vmul.f32 %v1228, 0.35355338
        %v1284 = vmul.f32 %v1278, 0.35355338
        %v1285 = vsel %vm742, %v1283, -inf
        %1286 = vmax.xlane.f32.xlu0 %v1285
        %v1287 = vpop.xlane.xlu0 %1286
        %v1288 = vsel %vm742, %v1284, -inf
        %1289 = vmax.xlane.f32.xlu0 %v1288
        %v1290 = vpop.xlane.xlu0 %1289
        %v1291 = vsub.f32 %v1283, %v1287
        %v1292 = vsub.f32 %v1284, %v1290
        %v1293 = vmul.f32 %v1291, 1.442695
        %v1294 = vpow.pop %v1293
        %v1295 = vmul.f32 %v1292, 1.442695
        %v1296 = vpow.pop %v1295
        %v1297 = vsel %vm742, %v1294, 0.0
        %1298 = vadd.xlane.f32.xlu0 %v1297
        %v1299 = vpop.xlane.xlu0 %1298
        %v1300 = vsel %vm742, %v1296, 0.0
        %1301 = vadd.xlane.f32.xlu0 %v1300
        %v1302 = vpop.xlane.xlu0 %1301
        %v1303 = vrcp.pop %v1299
        %v1304 = vmul.f32 %v1294, %v1303
        %v1305 = vrcp.pop %v1302
        %v1306 = vmul.f32 %v1296, %v1305
        %v1307 = vpack.c.bf16 %v1304, %v1304
        %v1308 = vpack.c.bf16 %v1306, %v1306
        %1309 = vrot.lane.b32.xlu0 %v737, 48
        %v1310 = vpop.permute.xlu0 %1309
        %v1312 = vsel %vm742, %v1307, 0
        %v1315 = vsel %vm869, %v1310, 0
        %1317 = vmatprep.subr.bf16.mxu0 0
        %1318 = vmatpush1.bf16.msra.mxu0 0
        %1319 = vmatprep.subr.bf16.mxu0 0
        %1320 = vmatpush1.bf16.msra.mxu0 0
        %1321 = vmatprep.subr.bf16.mxu0 0
        %1322 = vmatpush1.bf16.msra.mxu0 0
        %1323 = vmatprep.subr.bf16.mxu0 0
        %1324 = vmatpush1.bf16.msra.mxu0 0
        %1325 = vmatprep.subr.bf16.mxu0 0
        %1326 = vmatpush1.bf16.msra.mxu0 0
        %1327 = vmatprep.subr.bf16.mxu0 0
        %1328 = vmatpush1.bf16.msra.mxu0 0
        %1329 = vmatprep.subr.bf16.mxu0 0
        %1330 = vmatpush1.bf16.msra.mxu0 0
        %1331 = vmatprep.subr.bf16.mxu0 0
        %1332 = vmatpush1.bf16.msra.mxu0 %v1315
        %1333 = vmatprep.subr.bf16.mxu0 0
        %1334 = vmatpush2.bf16.msra.mxu0 0
        %1335 = vmatprep.subr.bf16.mxu0 0
        %1336 = vmatpush2.bf16.msra.mxu0 0
        %1337 = vmatprep.subr.bf16.mxu0 0
        %1338 = vmatpush2.bf16.msra.mxu0 0
        %1339 = vmatprep.subr.bf16.mxu0 0
        %1340 = vmatpush2.bf16.msra.mxu0 0
        %1341 = vmatprep.subr.bf16.mxu0 0
        %1342 = vmatpush2.bf16.msra.mxu0 0
        %1343 = vmatprep.subr.bf16.mxu0 0
        %1344 = vmatpush2.bf16.msra.mxu0 0
        %1345 = vmatprep.subr.bf16.mxu0 0
        %1346 = vmatpush2.bf16.msra.mxu0 0
        %1347 = vmatprep.subr.bf16.mxu0 0
        %1348 = vmatpush2.bf16.msra.mxu0 0
        %1349 = vmatprep.mubr.bf16.mxu0 0
        %1350 = vmatmul.mubr.bf16.gmra.mxu0 %v1312
        %v1351 = vpop.f32.mrf.mxu0
        %v1352 = vadd.f32 0.0, %v1351
        %v1353 = vpop.f32.mrf.mxu0
        %v1354 = vpop.f32.mrf.mxu0
        %v1355 = vpop.f32.mrf.mxu0
        %1356 = vdwg.mxu0
        %1357 = vrot.lane.b32.xlu0 %v738, 48
        %v1358 = vpop.permute.xlu0 %1357
        %v1360 = vsel %vm742, %v1308, 0
        %v1363 = vsel %vm869, %v1358, 0
        %1365 = vmatprep.subr.bf16.mxu0 0
        %1366 = vmatpush1.bf16.msra.mxu0 0
        %1367 = vmatprep.subr.bf16.mxu0 0
        %1368 = vmatpush1.bf16.msra.mxu0 0
        %1369 = vmatprep.subr.bf16.mxu0 0
        %1370 = vmatpush1.bf16.msra.mxu0 0
        %1371 = vmatprep.subr.bf16.mxu0 0
        %1372 = vmatpush1.bf16.msra.mxu0 0
        %1373 = vmatprep.subr.bf16.mxu0 0
        %1374 = vmatpush1.bf16.msra.mxu0 0
        %1375 = vmatprep.subr.bf16.mxu0 0
        %1376 = vmatpush1.bf16.msra.mxu0 0
        %1377 = vmatprep.subr.bf16.mxu0 0
        %1378 = vmatpush1.bf16.msra.mxu0 0
        %1379 = vmatprep.subr.bf16.mxu0 0
        %1380 = vmatpush1.bf16.msra.mxu0 %v1363
        %1381 = vmatprep.subr.bf16.mxu0 0
        %1382 = vmatpush2.bf16.msra.mxu0 0
        %1383 = vmatprep.subr.bf16.mxu0 0
        %1384 = vmatpush2.bf16.msra.mxu0 0
        %1385 = vmatprep.subr.bf16.mxu0 0
        %1386 = vmatpush2.bf16.msra.mxu0 0
        %1387 = vmatprep.subr.bf16.mxu0 0
        %1388 = vmatpush2.bf16.msra.mxu0 0
        %1389 = vmatprep.subr.bf16.mxu0 0
        %1390 = vmatpush2.bf16.msra.mxu0 0
        %1391 = vmatprep.subr.bf16.mxu0 0
        %1392 = vmatpush2.bf16.msra.mxu0 0
        %1393 = vmatprep.subr.bf16.mxu0 0
        %1394 = vmatpush2.bf16.msra.mxu0 0
        %1395 = vmatprep.subr.bf16.mxu0 0
        %1396 = vmatpush2.bf16.msra.mxu0 0
        %1397 = vmatprep.mubr.bf16.mxu0 0
        %1398 = vmatmul.mubr.bf16.gmra.mxu0 %v1360
        %v1399 = vpop.f32.mrf.mxu0
        %v1400 = vadd.f32 0.0, %v1399
        %v1401 = vpop.f32.mrf.mxu0
        %v1402 = vpop.f32.mrf.mxu0
        %v1403 = vpop.f32.mrf.mxu0
        %1404 = vdwg.mxu0
        %1405 = vrot.lane.b32.xlu0 %v737, 104
        %v1406 = vpop.permute.xlu0 %1405
        %1407 = vrot.lane.b32.xlu0 %v737, 72
        %v1408 = vpop.permute.xlu0 %1407
        %v1410 = vsel %vm742, %v1406, 0
        %v1413 = vsel %vm742, %v1408, 0
        %1415 = vmatprep.subr.bf16.mxu0 0
        %1416 = vmatpush1.bf16.xpose.msra.mxu0 0
        %1417 = vmatprep.subr.bf16.mxu0 0
        %1418 = vmatpush1.bf16.xpose.msra.mxu0 0
        %1419 = vmatprep.subr.bf16.mxu0 0
        %1420 = vmatpush1.bf16.xpose.msra.mxu0 0
        %1421 = vmatprep.subr.bf16.mxu0 0
        %1422 = vmatpush1.bf16.xpose.msra.mxu0 0
        %1423 = vmatprep.subr.bf16.mxu0 0
        %1424 = vmatpush1.bf16.xpose.msra.mxu0 0
        %1425 = vmatprep.subr.bf16.mxu0 0
        %1426 = vmatpush1.bf16.xpose.msra.mxu0 0
        %1427 = vmatprep.subr.bf16.mxu0 0
        %1428 = vmatpush1.bf16.xpose.msra.mxu0 0
        %1429 = vmatprep.subr.bf16.mxu0 0
        %1430 = vmatpush1.bf16.xpose.msra.mxu0 %v1413
        %1431 = vmatprep.subr.bf16.mxu0 0
        %1432 = vmatpush2.bf16.xpose.msra.mxu0 0
        %1433 = vmatprep.subr.bf16.mxu0 0
        %1434 = vmatpush2.bf16.xpose.msra.mxu0 0
        %1435 = vmatprep.subr.bf16.mxu0 0
        %1436 = vmatpush2.bf16.xpose.msra.mxu0 0
        %1437 = vmatprep.subr.bf16.mxu0 0
        %1438 = vmatpush2.bf16.xpose.msra.mxu0 0
        %1439 = vmatprep.subr.bf16.mxu0 0
        %1440 = vmatpush2.bf16.xpose.msra.mxu0 0
        %1441 = vmatprep.subr.bf16.mxu0 0
        %1442 = vmatpush2.bf16.xpose.msra.mxu0 0
        %1443 = vmatprep.subr.bf16.mxu0 0
        %1444 = vmatpush2.bf16.xpose.msra.mxu0 0
        %1445 = vmatprep.subr.bf16.mxu0 0
        %1446 = vmatpush2.bf16.xpose.msra.mxu0 0
        %1447 = vmatprep.mubr.bf16.mxu0 0
        %1448 = vmatmul.mubr.bf16.gmra.mxu0 %v1410
        %v1449 = vpop.f32.mrf.mxu0
        %v1450 = vadd.f32 0.0, %v1449
        %v1451 = vpop.f32.mrf.mxu0
        %v1452 = vpop.f32.mrf.mxu0
        %v1453 = vpop.f32.mrf.mxu0
        %1454 = vdwg.mxu0
        %1455 = vrot.lane.b32.xlu0 %v738, 104
        %v1456 = vpop.permute.xlu0 %1455
        %1457 = vrot.lane.b32.xlu0 %v738, 72
        %v1458 = vpop.permute.xlu0 %1457
        %v1460 = vsel %vm742, %v1456, 0
        %v1463 = vsel %vm742, %v1458, 0
        %1465 = vmatprep.subr.bf16.mxu0 0
        %1466 = vmatpush1.bf16.xpose.msra.mxu0 0
        %1467 = vmatprep.subr.bf16.mxu0 0
        %1468 = vmatpush1.bf16.xpose.msra.mxu0 0
        %1469 = vmatprep.subr.bf16.mxu0 0
        %1470 = vmatpush1.bf16.xpose.msra.mxu0 0
        %1471 = vmatprep.subr.bf16.mxu0 0
        %1472 = vmatpush1.bf16.xpose.msra.mxu0 0
        %1473 = vmatprep.subr.bf16.mxu0 0
        %1474 = vmatpush1.bf16.xpose.msra.mxu0 0
        %1475 = vmatprep.subr.bf16.mxu0 0
        %1476 = vmatpush1.bf16.xpose.msra.mxu0 0
        %1477 = vmatprep.subr.bf16.mxu0 0
        %1478 = vmatpush1.bf16.xpose.msra.mxu0 0
        %1479 = vmatprep.subr.bf16.mxu0 0
        %1480 = vmatpush1.bf16.xpose.msra.mxu0 %v1463
        %1481 = vmatprep.subr.bf16.mxu0 0
        %1482 = vmatpush2.bf16.xpose.msra.mxu0 0
        %1483 = vmatprep.subr.bf16.mxu0 0
        %1484 = vmatpush2.bf16.xpose.msra.mxu0 0
        %1485 = vmatprep.subr.bf16.mxu0 0
        %1486 = vmatpush2.bf16.xpose.msra.mxu0 0
        %1487 = vmatprep.subr.bf16.mxu0 0
        %1488 = vmatpush2.bf16.xpose.msra.mxu0 0
        %1489 = vmatprep.subr.bf16.mxu0 0
        %1490 = vmatpush2.bf16.xpose.msra.mxu0 0
        %1491 = vmatprep.subr.bf16.mxu0 0
        %1492 = vmatpush2.bf16.xpose.msra.mxu0 0
        %1493 = vmatprep.subr.bf16.mxu0 0
        %1494 = vmatpush2.bf16.xpose.msra.mxu0 0
        %1495 = vmatprep.subr.bf16.mxu0 0
        %1496 = vmatpush2.bf16.xpose.msra.mxu0 0
        %1497 = vmatprep.mubr.bf16.mxu0 0
        %1498 = vmatmul.mubr.bf16.gmra.mxu0 %v1460
        %v1499 = vpop.f32.mrf.mxu0
        %v1500 = vadd.f32 0.0, %v1499
        %v1501 = vpop.f32.mrf.mxu0
        %v1502 = vpop.f32.mrf.mxu0
        %v1503 = vpop.f32.mrf.mxu0
        %1504 = vdwg.mxu0
        %v1505 = vmul.f32 %v1450, 0.35355338
        %v1506 = vmul.f32 %v1500, 0.35355338
        %v1507 = vsel %vm742, %v1505, -inf
        %1508 = vmax.xlane.f32.xlu0 %v1507
        %v1509 = vpop.xlane.xlu0 %1508
        %v1510 = vsel %vm742, %v1506, -inf
        %1511 = vmax.xlane.f32.xlu0 %v1510
        %v1512 = vpop.xlane.xlu0 %1511
        %v1513 = vsub.f32 %v1505, %v1509
        %v1514 = vsub.f32 %v1506, %v1512
        %v1515 = vmul.f32 %v1513, 1.442695
        %v1516 = vpow.pop %v1515
        %v1517 = vmul.f32 %v1514, 1.442695
        %v1518 = vpow.pop %v1517
        %v1519 = vsel %vm742, %v1516, 0.0
        %1520 = vadd.xlane.f32.xlu0 %v1519
        %v1521 = vpop.xlane.xlu0 %1520
        %v1522 = vsel %vm742, %v1518, 0.0
        %1523 = vadd.xlane.f32.xlu0 %v1522
        %v1524 = vpop.xlane.xlu0 %1523
        %v1525 = vrcp.pop %v1521
        %v1526 = vmul.f32 %v1516, %v1525
        %v1527 = vrcp.pop %v1524
        %v1528 = vmul.f32 %v1518, %v1527
        %v1529 = vpack.c.bf16 %v1526, %v1526
        %v1530 = vpack.c.bf16 %v1528, %v1528
        %1531 = vrot.lane.b32.xlu0 %v737, 40
        %v1532 = vpop.permute.xlu0 %1531
        %v1534 = vsel %vm742, %v1529, 0
        %v1537 = vsel %vm869, %v1532, 0
        %1539 = vmatprep.subr.bf16.mxu0 0
        %1540 = vmatpush1.bf16.msra.mxu0 0
        %1541 = vmatprep.subr.bf16.mxu0 0
        %1542 = vmatpush1.bf16.msra.mxu0 0
        %1543 = vmatprep.subr.bf16.mxu0 0
        %1544 = vmatpush1.bf16.msra.mxu0 0
        %1545 = vmatprep.subr.bf16.mxu0 0
        %1546 = vmatpush1.bf16.msra.mxu0 0
        %1547 = vmatprep.subr.bf16.mxu0 0
        %1548 = vmatpush1.bf16.msra.mxu0 0
        %1549 = vmatprep.subr.bf16.mxu0 0
        %1550 = vmatpush1.bf16.msra.mxu0 0
        %1551 = vmatprep.subr.bf16.mxu0 0
        %1552 = vmatpush1.bf16.msra.mxu0 0
        %1553 = vmatprep.subr.bf16.mxu0 0
        %1554 = vmatpush1.bf16.msra.mxu0 %v1537
        %1555 = vmatprep.subr.bf16.mxu0 0
        %1556 = vmatpush2.bf16.msra.mxu0 0
        %1557 = vmatprep.subr.bf16.mxu0 0
        %1558 = vmatpush2.bf16.msra.mxu0 0
        %1559 = vmatprep.subr.bf16.mxu0 0
        %1560 = vmatpush2.bf16.msra.mxu0 0
        %1561 = vmatprep.subr.bf16.mxu0 0
        %1562 = vmatpush2.bf16.msra.mxu0 0
        %1563 = vmatprep.subr.bf16.mxu0 0
        %1564 = vmatpush2.bf16.msra.mxu0 0
        %1565 = vmatprep.subr.bf16.mxu0 0
        %1566 = vmatpush2.bf16.msra.mxu0 0
        %1567 = vmatprep.subr.bf16.mxu0 0
        %1568 = vmatpush2.bf16.msra.mxu0 0
        %1569 = vmatprep.subr.bf16.mxu0 0
        %1570 = vmatpush2.bf16.msra.mxu0 0
        %1571 = vmatprep.mubr.bf16.mxu0 0
        %1572 = vmatmul.mubr.bf16.gmra.mxu0 %v1534
        %v1573 = vpop.f32.mrf.mxu0
        %v1574 = vadd.f32 0.0, %v1573
        %v1575 = vpop.f32.mrf.mxu0
        %v1576 = vpop.f32.mrf.mxu0
        %v1577 = vpop.f32.mrf.mxu0
        %1578 = vdwg.mxu0
        %1579 = vrot.lane.b32.xlu0 %v738, 40
        %v1580 = vpop.permute.xlu0 %1579
        %v1582 = vsel %vm742, %v1530, 0
        %v1585 = vsel %vm869, %v1580, 0
        %1587 = vmatprep.subr.bf16.mxu0 0
        %1588 = vmatpush1.bf16.msra.mxu0 0
        %1589 = vmatprep.subr.bf16.mxu0 0
        %1590 = vmatpush1.bf16.msra.mxu0 0
        %1591 = vmatprep.subr.bf16.mxu0 0
        %1592 = vmatpush1.bf16.msra.mxu0 0
        %1593 = vmatprep.subr.bf16.mxu0 0
        %1594 = vmatpush1.bf16.msra.mxu0 0
        %1595 = vmatprep.subr.bf16.mxu0 0
        %1596 = vmatpush1.bf16.msra.mxu0 0
        %1597 = vmatprep.subr.bf16.mxu0 0
        %1598 = vmatpush1.bf16.msra.mxu0 0
        %1599 = vmatprep.subr.bf16.mxu0 0
        %1600 = vmatpush1.bf16.msra.mxu0 0
        %1601 = vmatprep.subr.bf16.mxu0 0
        %1602 = vmatpush1.bf16.msra.mxu0 %v1585
        %1603 = vmatprep.subr.bf16.mxu0 0
        %1604 = vmatpush2.bf16.msra.mxu0 0
        %1605 = vmatprep.subr.bf16.mxu0 0
        %1606 = vmatpush2.bf16.msra.mxu0 0
        %1607 = vmatprep.subr.bf16.mxu0 0
        %1608 = vmatpush2.bf16.msra.mxu0 0
        %1609 = vmatprep.subr.bf16.mxu0 0
        %1610 = vmatpush2.bf16.msra.mxu0 0
        %1611 = vmatprep.subr.bf16.mxu0 0
        %1612 = vmatpush2.bf16.msra.mxu0 0
        %1613 = vmatprep.subr.bf16.mxu0 0
        %1614 = vmatpush2.bf16.msra.mxu0 0
        %1615 = vmatprep.subr.bf16.mxu0 0
        %1616 = vmatpush2.bf16.msra.mxu0 0
        %1617 = vmatprep.subr.bf16.mxu0 0
        %1618 = vmatpush2.bf16.msra.mxu0 0
        %1619 = vmatprep.mubr.bf16.mxu0 0
        %1620 = vmatmul.mubr.bf16.gmra.mxu0 %v1582
        %v1621 = vpop.f32.mrf.mxu0
        %v1622 = vadd.f32 0.0, %v1621
        %v1623 = vpop.f32.mrf.mxu0
        %v1624 = vpop.f32.mrf.mxu0
        %v1625 = vpop.f32.mrf.mxu0
        %1626 = vdwg.mxu0
        %1629 = vrot.lane.b32.xlu0 %v1130, 8
        %v1630 = vpop.permute.xlu0 %1629
        %1631 = vrot.lane.b32.xlu0 %v1178, 8
        %v1632 = vpop.permute.xlu0 %1631
        %1637 = vrot.lane.b32.xlu0 %v1352, 16
        %v1638 = vpop.permute.xlu0 %1637
        %1639 = vrot.lane.b32.xlu0 %v1400, 16
        %v1640 = vpop.permute.xlu0 %1639
        %1645 = vrot.lane.b32.xlu0 %v1574, 24
        %v1646 = vpop.permute.xlu0 %1645
        %1647 = vrot.lane.b32.xlu0 %v1622, 24
        %v1648 = vpop.permute.xlu0 %1647
        %v1651 = vsel %vm742, %v908, %v1630
        %v1652 = vsel %vm742, %v956, %v1632
        %vm1653 = vcmask 130048
        %v1654 = vsel %vm1653, %v1651, %v1638
        %v1655 = vsel %vm1653, %v1652, %v1640
        %vm1656 = vcmask 195584
        %v1657 = vsel %vm1656, %v1654, %v1646
        %v1658 = vsel %vm1656, %v1655, %v1648
        %v1659 = vpack.c.bf16 %v1658, %v1657
        %v1660 = vld [vmem:[%s623] sm:$0xf]
        %v1661 = vld [vmem:[%s623 + $0x4] sm:$0xf]
        %v1662 = vld [vmem:[%s623 + $0x8] sm:$0xf]
        %v1663 = vld [vmem:[%s623 + $0xc] sm:$0xf]
        %v1664 = vld [vmem:[%s626] sm:$0x1]
        %v1666 = vlaneseq
        %v1667 = vshrl.u32 %v1666, 7
        %v1668 = vsub.s32 0, %v1667
        %v1669 = vrot.slane %v1664, %v1668
        %v1675 = vunpack.c.l.b16 %v1660
        %v1676 = vunpack.c.l.b16 %v1661
        %v1677 = vunpack.c.l.b16 %v1662
        %v1678 = vunpack.c.l.b16 %v1663
        %v1679 = vpack.c.b16 %v1676, %v1675
        %v1680 = vpack.c.b16 %v1678, %v1677
        %v1684 = vsel %vm692, %v1659, 0
        %1686 = vmatprep.subr.bf16.mxu0 0
        %1687 = vmatpush1.bf16.msra.mxu0 0
        %1688 = vmatprep.subr.bf16.mxu0 0
        %1689 = vmatpush1.bf16.msra.mxu0 0
        %1690 = vmatprep.subr.bf16.mxu0 0
        %1691 = vmatpush1.bf16.msra.mxu0 0
        %1692 = vmatprep.subr.bf16.mxu0 0
        %1693 = vmatpush1.bf16.msra.mxu0 0
        %1694 = vmatprep.subr.bf16.mxu0 0
        %1695 = vmatpush1.bf16.msra.mxu0 0
        %1696 = vmatprep.subr.bf16.mxu0 0
        %1697 = vmatpush1.bf16.msra.mxu0 0
        %1698 = vmatprep.subr.bf16.mxu0 0
        %1699 = vmatpush1.bf16.msra.mxu0 %v1680
        %1700 = vmatprep.subr.bf16.mxu0 0
        %1701 = vmatpush1.bf16.msra.mxu0 %v1679
        %1702 = vmatprep.subr.bf16.mxu0 0
        %1703 = vmatpush2.bf16.msra.mxu0 0
        %1704 = vmatprep.subr.bf16.mxu0 0
        %1705 = vmatpush2.bf16.msra.mxu0 0
        %1706 = vmatprep.subr.bf16.mxu0 0
        %1707 = vmatpush2.bf16.msra.mxu0 0
        %1708 = vmatprep.subr.bf16.mxu0 0
        %1709 = vmatpush2.bf16.msra.mxu0 0
        %1710 = vmatprep.subr.bf16.mxu0 0
        %1711 = vmatpush2.bf16.msra.mxu0 0
        %1712 = vmatprep.subr.bf16.mxu0 0
        %1713 = vmatpush2.bf16.msra.mxu0 0
        %1714 = vmatprep.subr.bf16.mxu0 0
        %1715 = vmatpush2.bf16.msra.mxu0 0
        %1716 = vmatprep.subr.bf16.mxu0 0
        %1717 = vmatpush2.bf16.msra.mxu0 0
        %1718 = vmatprep.mubr.bf16.mxu0 0
        %1719 = vmatmul.mubr.bf16.gmra.mxu0 %v1684
        %v1720 = vpop.f32.mrf.mxu0
        %v1721 = vadd.f32 %v1669, %v1720
        %v1722 = vpop.f32.mrf.mxu0
        %v1723 = vpop.f32.mrf.mxu0
        %v1724 = vadd.f32 %v1669, %v1723
        %v1725 = vpop.f32.mrf.mxu0
        %1726 = vdwg.mxu0
        %v1727 = vadd.f32 %v666, %v1721
        %v1728 = vadd.f32 %v667, %v1724
        %v1729 = vld [vmem:[%s629] sm:$0x1]
        %v1730 = vld [vmem:[%s632] sm:$0x1]
        %v1731 = vsel %vm692, %v1727, 0.0
        %1732 = vadd.xlane.f32.xlu0 %v1731
        %v1733 = vpop.xlane.xlu0 %1732
        %v1734 = vsel %vm692, %v1728, 0.0
        %1735 = vadd.xlane.f32.xlu0 %v1734
        %v1736 = vpop.xlane.xlu0 %1735
        %v1737 = vrcp.pop 32.0
        %v1738 = vmul.f32 %v1733, %v1737
        %v1739 = vmul.f32 %v1736, %v1737
        %v1740 = vsub.f32 %v1727, %v1738
        %v1741 = vsub.f32 %v1728, %v1739
        %v1742 = vmul.f32 %v1740, %v1740
        %v1743 = vmul.f32 %v1741, %v1741
        %v1744 = vsel %vm692, %v1742, 0.0
        %1745 = vadd.xlane.f32.xlu0 %v1744
        %v1746 = vpop.xlane.xlu0 %1745
        %v1747 = vsel %vm692, %v1743, 0.0
        %1748 = vadd.xlane.f32.xlu0 %v1747
        %v1749 = vpop.xlane.xlu0 %1748
        %v1750 = vmul.f32 %v1746, %v1737
        %v1751 = vmul.f32 %v1749, %v1737
        %v1752 = vadd.f32 %v1750, 1e-05
        %v1753 = vadd.f32 %v1751, 1e-05
        %v1754 = vrsqrt.pop %v1752
        %v1755 = vrsqrt.pop %v1753
        %v1756 = vmul.f32 %v1740, %v1754
        %v1757 = vmul.f32 %v1741, %v1755
        %v1759 = vlaneseq
        %v1760 = vshrl.u32 %v1759, 7
        %v1761 = vsub.s32 0, %v1760
        %v1762 = vrot.slane %v1729, %v1761
        %v1764 = vmul.f32 %v1756, %v1762
        %v1765 = vmul.f32 %v1757, %v1762
        %v1767 = vlaneseq
        %v1768 = vshrl.u32 %v1767, 7
        %v1769 = vsub.s32 0, %v1768
        %v1770 = vrot.slane %v1730, %v1769
        %v1772 = vadd.f32 %v1764, %v1770
        %v1773 = vadd.f32 %v1765, %v1770
        %v1774 = vpack.c.bf16 %v1773, %v1772
        %v1775 = vld [vmem:[%s637] sm:$0xff]
        %v1776 = vld [vmem:[%s637 + $0x8] sm:$0xff]
        %v1777 = vld [vmem:[%s637 + $0x10] sm:$0xff]
        %v1778 = vld [vmem:[%s637 + $0x18] sm:$0xff]
        %v1779 = vld [vmem:[%s637 + $0x20] sm:$0xff]
        %v1780 = vld [vmem:[%s637 + $0x28] sm:$0xff]
        %v1781 = vld [vmem:[%s637 + $0x30] sm:$0xff]
        %v1782 = vld [vmem:[%s637 + $0x38] sm:$0xff]
        %v1783 = vld [vmem:[%s637 + $0x40] sm:$0xff]
        %v1784 = vld [vmem:[%s637 + $0x48] sm:$0xff]
        %v1785 = vld [vmem:[%s637 + $0x50] sm:$0xff]
        %v1786 = vld [vmem:[%s637 + $0x58] sm:$0xff]
        %v1787 = vld [vmem:[%s637 + $0x60] sm:$0xff]
        %v1788 = vld [vmem:[%s637 + $0x68] sm:$0xff]
        %v1789 = vld [vmem:[%s637 + $0x70] sm:$0xff]
        %v1790 = vld [vmem:[%s637 + $0x78] sm:$0xff]
        %v1791 = vld [vmem:[%s637 + $0x80] sm:$0xff]
        %v1792 = vld [vmem:[%s637 + $0x88] sm:$0xff]
        %v1793 = vld [vmem:[%s637 + $0x90] sm:$0xff]
        %v1794 = vld [vmem:[%s637 + $0x98] sm:$0xff]
        %v1795 = vld [vmem:[%s637 + $0xa0] sm:$0xff]
        %v1796 = vld [vmem:[%s637 + $0xa8] sm:$0xff]
        %v1797 = vld [vmem:[%s637 + $0xb0] sm:$0xff]
        %v1798 = vld [vmem:[%s637 + $0xb8] sm:$0xff]
        %v1799 = vld [vmem:[%s637 + $0xc0] sm:$0xff]
        %v1800 = vld [vmem:[%s637 + $0xc8] sm:$0xff]
        %v1801 = vld [vmem:[%s637 + $0xd0] sm:$0xff]
        %v1802 = vld [vmem:[%s637 + $0xd8] sm:$0xff]
        %v1803 = vld [vmem:[%s637 + $0xe0] sm:$0xff]
        %v1804 = vld [vmem:[%s637 + $0xe8] sm:$0xff]
        %v1805 = vld [vmem:[%s637 + $0xf0] sm:$0xff]
        %v1806 = vld [vmem:[%s637 + $0xf8] sm:$0xff]
        %v1807 = vld [vmem:[%s641] sm:$0xff]
        %v1808 = vld [vmem:[%s641 + $0x8] sm:$0xff]
        %v1811 = vlaneseq
        %v1812 = vshrl.u32 %v1811, 7
        %v1813 = vsub.s32 0, %v1812
        %v1814 = vrot.slane %v1807, %v1813
        %v1815 = vlaneseq
        %v1816 = vshrl.u32 %v1815, 7
        %v1817 = vsub.s32 1, %v1816
        %v1818 = vrot.slane %v1807, %v1817
        %v1819 = vlaneseq
        %v1820 = vshrl.u32 %v1819, 7
        %v1821 = vsub.s32 2, %v1820
        %v1822 = vrot.slane %v1807, %v1821
        %v1823 = vlaneseq
        %v1824 = vshrl.u32 %v1823, 7
        %v1825 = vsub.s32 3, %v1824
        %v1826 = vrot.slane %v1807, %v1825
        %v1827 = vlaneseq
        %v1828 = vshrl.u32 %v1827, 7
        %v1829 = vsub.s32 4, %v1828
        %v1830 = vrot.slane %v1807, %v1829
        %v1831 = vlaneseq
        %v1832 = vshrl.u32 %v1831, 7
        %v1833 = vsub.s32 5, %v1832
        %v1834 = vrot.slane %v1807, %v1833
        %v1835 = vlaneseq
        %v1836 = vshrl.u32 %v1835, 7
        %v1837 = vsub.s32 6, %v1836
        %v1838 = vrot.slane %v1807, %v1837
        %v1839 = vlaneseq
        %v1840 = vshrl.u32 %v1839, 7
        %v1841 = vsub.s32 7, %v1840
        %v1842 = vrot.slane %v1807, %v1841
        %v1843 = vlaneseq
        %v1844 = vshrl.u32 %v1843, 7
        %v1845 = vsub.s32 0, %v1844
        %v1846 = vrot.slane %v1808, %v1845
        %v1847 = vlaneseq
        %v1848 = vshrl.u32 %v1847, 7
        %v1849 = vsub.s32 1, %v1848
        %v1850 = vrot.slane %v1808, %v1849
        %v1851 = vlaneseq
        %v1852 = vshrl.u32 %v1851, 7
        %v1853 = vsub.s32 2, %v1852
        %v1854 = vrot.slane %v1808, %v1853
        %v1855 = vlaneseq
        %v1856 = vshrl.u32 %v1855, 7
        %v1857 = vsub.s32 3, %v1856
        %v1858 = vrot.slane %v1808, %v1857
        %v1859 = vlaneseq
        %v1860 = vshrl.u32 %v1859, 7
        %v1861 = vsub.s32 4, %v1860
        %v1862 = vrot.slane %v1808, %v1861
        %v1863 = vlaneseq
        %v1864 = vshrl.u32 %v1863, 7
        %v1865 = vsub.s32 5, %v1864
        %v1866 = vrot.slane %v1808, %v1865
        %v1867 = vlaneseq
        %v1868 = vshrl.u32 %v1867, 7
        %v1869 = vsub.s32 6, %v1868
        %v1870 = vrot.slane %v1808, %v1869
        %v1871 = vlaneseq
        %v1872 = vshrl.u32 %v1871, 7
        %v1873 = vsub.s32 7, %v1872
        %v1874 = vrot.slane %v1808, %v1873
        %v1923 = vunpack.c.l.b16 %v1775
        %v1924 = vunpack.c.h.b16 %v1775
        %v1925 = vunpack.c.l.b16 %v1776
        %v1926 = vunpack.c.h.b16 %v1776
        %v1927 = vunpack.c.l.b16 %v1777
        %v1928 = vunpack.c.h.b16 %v1777
        %v1929 = vunpack.c.l.b16 %v1778
        %v1930 = vunpack.c.h.b16 %v1778
        %v1931 = vunpack.c.l.b16 %v1779
        %v1932 = vunpack.c.h.b16 %v1779
        %v1933 = vunpack.c.l.b16 %v1780
        %v1934 = vunpack.c.h.b16 %v1780
        %v1935 = vunpack.c.l.b16 %v1781
        %v1936 = vunpack.c.h.b16 %v1781
        %v1937 = vunpack.c.l.b16 %v1782
        %v1938 = vunpack.c.h.b16 %v1782
        %v1939 = vunpack.c.l.b16 %v1783
        %v1940 = vunpack.c.h.b16 %v1783
        %v1941 = vunpack.c.l.b16 %v1784
        %v1942 = vunpack.c.h.b16 %v1784
        %v1943 = vunpack.c.l.b16 %v1785
        %v1944 = vunpack.c.h.b16 %v1785
        %v1945 = vunpack.c.l.b16 %v1786
        %v1946 = vunpack.c.h.b16 %v1786
        %v1947 = vunpack.c.l.b16 %v1787
        %v1948 = vunpack.c.h.b16 %v1787
        %v1949 = vunpack.c.l.b16 %v1788
        %v1950 = vunpack.c.h.b16 %v1788
        %v1951 = vunpack.c.l.b16 %v1789
        %v1952 = vunpack.c.h.b16 %v1789
        %v1953 = vunpack.c.l.b16 %v1790
        %v1954 = vunpack.c.h.b16 %v1790
        %v1955 = vunpack.c.l.b16 %v1791
        %v1956 = vunpack.c.h.b16 %v1791
        %v1957 = vunpack.c.l.b16 %v1792
        %v1958 = vunpack.c.h.b16 %v1792
        %v1959 = vunpack.c.l.b16 %v1793
        %v1960 = vunpack.c.h.b16 %v1793
        %v1961 = vunpack.c.l.b16 %v1794
        %v1962 = vunpack.c.h.b16 %v1794
        %v1963 = vunpack.c.l.b16 %v1795
        %v1964 = vunpack.c.h.b16 %v1795
        %v1965 = vunpack.c.l.b16 %v1796
        %v1966 = vunpack.c.h.b16 %v1796
        %v1967 = vunpack.c.l.b16 %v1797
        %v1968 = vunpack.c.h.b16 %v1797
        %v1969 = vunpack.c.l.b16 %v1798
        %v1970 = vunpack.c.h.b16 %v1798
        %v1971 = vunpack.c.l.b16 %v1799
        %v1972 = vunpack.c.h.b16 %v1799
        %v1973 = vunpack.c.l.b16 %v1800
        %v1974 = vunpack.c.h.b16 %v1800
        %v1975 = vunpack.c.l.b16 %v1801
        %v1976 = vunpack.c.h.b16 %v1801
        %v1977 = vunpack.c.l.b16 %v1802
        %v1978 = vunpack.c.h.b16 %v1802
        %v1979 = vunpack.c.l.b16 %v1803
        %v1980 = vunpack.c.h.b16 %v1803
        %v1981 = vunpack.c.l.b16 %v1804
        %v1982 = vunpack.c.h.b16 %v1804
        %v1983 = vunpack.c.l.b16 %v1805
        %v1984 = vunpack.c.h.b16 %v1805
        %v1985 = vunpack.c.l.b16 %v1806
        %v1986 = vunpack.c.h.b16 %v1806
        %v1987 = vpack.c.b16 %v1939, %v1923
        %v1988 = vpack.c.b16 %v1940, %v1924
        %v1989 = vpack.c.b16 %v1941, %v1925
        %v1990 = vpack.c.b16 %v1942, %v1926
        %v1991 = vpack.c.b16 %v1943, %v1927
        %v1992 = vpack.c.b16 %v1944, %v1928
        %v1993 = vpack.c.b16 %v1945, %v1929
        %v1994 = vpack.c.b16 %v1946, %v1930
        %v1995 = vpack.c.b16 %v1947, %v1931
        %v1996 = vpack.c.b16 %v1948, %v1932
        %v1997 = vpack.c.b16 %v1949, %v1933
        %v1998 = vpack.c.b16 %v1950, %v1934
        %v1999 = vpack.c.b16 %v1951, %v1935
        %v2000 = vpack.c.b16 %v1952, %v1936
        %v2001 = vpack.c.b16 %v1953, %v1937
        %v2002 = vpack.c.b16 %v1954, %v1938
        %v2003 = vpack.c.b16 %v1971, %v1955
        %v2004 = vpack.c.b16 %v1972, %v1956
        %v2005 = vpack.c.b16 %v1973, %v1957
        %v2006 = vpack.c.b16 %v1974, %v1958
        %v2007 = vpack.c.b16 %v1975, %v1959
        %v2008 = vpack.c.b16 %v1976, %v1960
        %v2009 = vpack.c.b16 %v1977, %v1961
        %v2010 = vpack.c.b16 %v1978, %v1962
        %v2011 = vpack.c.b16 %v1979, %v1963
        %v2012 = vpack.c.b16 %v1980, %v1964
        %v2013 = vpack.c.b16 %v1981, %v1965
        %v2014 = vpack.c.b16 %v1982, %v1966
        %v2015 = vpack.c.b16 %v1983, %v1967
        %v2016 = vpack.c.b16 %v1984, %v1968
        %v2017 = vpack.c.b16 %v1985, %v1969
        %v2018 = vpack.c.b16 %v1986, %v1970
        %v2052 = vsel %vm692, %v1774, 0
        %2054 = vmatprep.subr.bf16.mxu0 0
        %2055 = vmatpush1.bf16.msra.mxu0 0
        %2056 = vmatprep.subr.bf16.mxu0 0
        %2057 = vmatpush1.bf16.msra.mxu0 0
        %2058 = vmatprep.subr.bf16.mxu0 0
        %2059 = vmatpush1.bf16.msra.mxu0 0
        %2060 = vmatprep.subr.bf16.mxu0 0
        %2061 = vmatpush1.bf16.msra.mxu0 0
        %2062 = vmatprep.subr.bf16.mxu0 0
        %2063 = vmatpush1.bf16.msra.mxu0 0
        %2064 = vmatprep.subr.bf16.mxu0 0
        %2065 = vmatpush1.bf16.msra.mxu0 0
        %2066 = vmatprep.subr.bf16.mxu0 %v2004
        %2067 = vmatpush1.bf16.msra.mxu0 %v2003
        %2068 = vmatprep.subr.bf16.mxu0 %v1988
        %2069 = vmatpush1.bf16.msra.mxu0 %v1987
        %2070 = vmatprep.subr.bf16.mxu0 0
        %2071 = vmatpush2.bf16.msra.mxu0 0
        %2072 = vmatprep.subr.bf16.mxu0 0
        %2073 = vmatpush2.bf16.msra.mxu0 0
        %2074 = vmatprep.subr.bf16.mxu0 0
        %2075 = vmatpush2.bf16.msra.mxu0 0
        %2076 = vmatprep.subr.bf16.mxu0 0
        %2077 = vmatpush2.bf16.msra.mxu0 0
        %2078 = vmatprep.subr.bf16.mxu0 0
        %2079 = vmatpush2.bf16.msra.mxu0 0
        %2080 = vmatprep.subr.bf16.mxu0 0
        %2081 = vmatpush2.bf16.msra.mxu0 0
        %2082 = vmatprep.subr.bf16.mxu0 0
        %2083 = vmatpush2.bf16.msra.mxu0 0
        %2084 = vmatprep.subr.bf16.mxu0 0
        %2085 = vmatpush2.bf16.msra.mxu0 0
        %2086 = vmatprep.mubr.bf16.mxu0 0
        %2087 = vmatmul.mubr.bf16.gmra.mxu0 %v2052
        %v2088 = vpop.f32.mrf.mxu0
        %v2089 = vadd.f32 %v1814, %v2088
        %v2090 = vpop.f32.mrf.mxu0
        %v2091 = vadd.f32 %v1818, %v2090
        %v2092 = vpop.f32.mrf.mxu0
        %v2093 = vadd.f32 %v1814, %v2092
        %v2094 = vpop.f32.mrf.mxu0
        %v2095 = vadd.f32 %v1818, %v2094
        %2096 = vdwg.mxu0
        %2097 = vmatprep.subr.bf16.mxu0 0
        %2098 = vmatpush1.bf16.msra.mxu0 0
        %2099 = vmatprep.subr.bf16.mxu0 0
        %2100 = vmatpush1.bf16.msra.mxu0 0
        %2101 = vmatprep.subr.bf16.mxu0 0
        %2102 = vmatpush1.bf16.msra.mxu0 0
        %2103 = vmatprep.subr.bf16.mxu0 0
        %2104 = vmatpush1.bf16.msra.mxu0 0
        %2105 = vmatprep.subr.bf16.mxu0 0
        %2106 = vmatpush1.bf16.msra.mxu0 0
        %2107 = vmatprep.subr.bf16.mxu0 0
        %2108 = vmatpush1.bf16.msra.mxu0 0
        %2109 = vmatprep.subr.bf16.mxu0 %v2006
        %2110 = vmatpush1.bf16.msra.mxu0 %v2005
        %2111 = vmatprep.subr.bf16.mxu0 %v1990
        %2112 = vmatpush1.bf16.msra.mxu0 %v1989
        %2113 = vmatprep.subr.bf16.mxu0 0
        %2114 = vmatpush2.bf16.msra.mxu0 0
        %2115 = vmatprep.subr.bf16.mxu0 0
        %2116 = vmatpush2.bf16.msra.mxu0 0
        %2117 = vmatprep.subr.bf16.mxu0 0
        %2118 = vmatpush2.bf16.msra.mxu0 0
        %2119 = vmatprep.subr.bf16.mxu0 0
        %2120 = vmatpush2.bf16.msra.mxu0 0
        %2121 = vmatprep.subr.bf16.mxu0 0
        %2122 = vmatpush2.bf16.msra.mxu0 0
        %2123 = vmatprep.subr.bf16.mxu0 0
        %2124 = vmatpush2.bf16.msra.mxu0 0
        %2125 = vmatprep.subr.bf16.mxu0 0
        %2126 = vmatpush2.bf16.msra.mxu0 0
        %2127 = vmatprep.subr.bf16.mxu0 0
        %2128 = vmatpush2.bf16.msra.mxu0 0
        %2129 = vmatprep.mubr.bf16.mxu0 0
        %2130 = vmatmul.mubr.bf16.gmra.mxu0 %v2052
        %v2131 = vpop.f32.mrf.mxu0
        %v2132 = vadd.f32 %v1822, %v2131
        %v2133 = vpop.f32.mrf.mxu0
        %v2134 = vadd.f32 %v1826, %v2133
        %v2135 = vpop.f32.mrf.mxu0
        %v2136 = vadd.f32 %v1822, %v2135
        %v2137 = vpop.f32.mrf.mxu0
        %v2138 = vadd.f32 %v1826, %v2137
        %2139 = vdwg.mxu0
        %2140 = vmatprep.subr.bf16.mxu0 0
        %2141 = vmatpush1.bf16.msra.mxu0 0
        %2142 = vmatprep.subr.bf16.mxu0 0
        %2143 = vmatpush1.bf16.msra.mxu0 0
        %2144 = vmatprep.subr.bf16.mxu0 0
        %2145 = vmatpush1.bf16.msra.mxu0 0
        %2146 = vmatprep.subr.bf16.mxu0 0
        %2147 = vmatpush1.bf16.msra.mxu0 0
        %2148 = vmatprep.subr.bf16.mxu0 0
        %2149 = vmatpush1.bf16.msra.mxu0 0
        %2150 = vmatprep.subr.bf16.mxu0 0
        %2151 = vmatpush1.bf16.msra.mxu0 0
        %2152 = vmatprep.subr.bf16.mxu0 %v2008
        %2153 = vmatpush1.bf16.msra.mxu0 %v2007
        %2154 = vmatprep.subr.bf16.mxu0 %v1992
        %2155 = vmatpush1.bf16.msra.mxu0 %v1991
        %2156 = vmatprep.subr.bf16.mxu0 0
        %2157 = vmatpush2.bf16.msra.mxu0 0
        %2158 = vmatprep.subr.bf16.mxu0 0
        %2159 = vmatpush2.bf16.msra.mxu0 0
        %2160 = vmatprep.subr.bf16.mxu0 0
        %2161 = vmatpush2.bf16.msra.mxu0 0
        %2162 = vmatprep.subr.bf16.mxu0 0
        %2163 = vmatpush2.bf16.msra.mxu0 0
        %2164 = vmatprep.subr.bf16.mxu0 0
        %2165 = vmatpush2.bf16.msra.mxu0 0
        %2166 = vmatprep.subr.bf16.mxu0 0
        %2167 = vmatpush2.bf16.msra.mxu0 0
        %2168 = vmatprep.subr.bf16.mxu0 0
        %2169 = vmatpush2.bf16.msra.mxu0 0
        %2170 = vmatprep.subr.bf16.mxu0 0
        %2171 = vmatpush2.bf16.msra.mxu0 0
        %2172 = vmatprep.mubr.bf16.mxu0 0
        %2173 = vmatmul.mubr.bf16.gmra.mxu0 %v2052
        %v2174 = vpop.f32.mrf.mxu0
        %v2175 = vadd.f32 %v1830, %v2174
        %v2176 = vpop.f32.mrf.mxu0
        %v2177 = vadd.f32 %v1834, %v2176
        %v2178 = vpop.f32.mrf.mxu0
        %v2179 = vadd.f32 %v1830, %v2178
        %v2180 = vpop.f32.mrf.mxu0
        %v2181 = vadd.f32 %v1834, %v2180
        %2182 = vdwg.mxu0
        %2183 = vmatprep.subr.bf16.mxu0 0
        %2184 = vmatpush1.bf16.msra.mxu0 0
        %2185 = vmatprep.subr.bf16.mxu0 0
        %2186 = vmatpush1.bf16.msra.mxu0 0
        %2187 = vmatprep.subr.bf16.mxu0 0
        %2188 = vmatpush1.bf16.msra.mxu0 0
        %2189 = vmatprep.subr.bf16.mxu0 0
        %2190 = vmatpush1.bf16.msra.mxu0 0
        %2191 = vmatprep.subr.bf16.mxu0 0
        %2192 = vmatpush1.bf16.msra.mxu0 0
        %2193 = vmatprep.subr.bf16.mxu0 0
        %2194 = vmatpush1.bf16.msra.mxu0 0
        %2195 = vmatprep.subr.bf16.mxu0 %v2010
        %2196 = vmatpush1.bf16.msra.mxu0 %v2009
        %2197 = vmatprep.subr.bf16.mxu0 %v1994
        %2198 = vmatpush1.bf16.msra.mxu0 %v1993
        %2199 = vmatprep.subr.bf16.mxu0 0
        %2200 = vmatpush2.bf16.msra.mxu0 0
        %2201 = vmatprep.subr.bf16.mxu0 0
        %2202 = vmatpush2.bf16.msra.mxu0 0
        %2203 = vmatprep.subr.bf16.mxu0 0
        %2204 = vmatpush2.bf16.msra.mxu0 0
        %2205 = vmatprep.subr.bf16.mxu0 0
        %2206 = vmatpush2.bf16.msra.mxu0 0
        %2207 = vmatprep.subr.bf16.mxu0 0
        %2208 = vmatpush2.bf16.msra.mxu0 0
        %2209 = vmatprep.subr.bf16.mxu0 0
        %2210 = vmatpush2.bf16.msra.mxu0 0
        %2211 = vmatprep.subr.bf16.mxu0 0
        %2212 = vmatpush2.bf16.msra.mxu0 0
        %2213 = vmatprep.subr.bf16.mxu0 0
        %2214 = vmatpush2.bf16.msra.mxu0 0
        %2215 = vmatprep.mubr.bf16.mxu0 0
        %2216 = vmatmul.mubr.bf16.gmra.mxu0 %v2052
        %v2217 = vpop.f32.mrf.mxu0
        %v2218 = vadd.f32 %v1838, %v2217
        %v2219 = vpop.f32.mrf.mxu0
        %v2220 = vadd.f32 %v1842, %v2219
        %v2221 = vpop.f32.mrf.mxu0
        %v2222 = vadd.f32 %v1838, %v2221
        %v2223 = vpop.f32.mrf.mxu0
        %v2224 = vadd.f32 %v1842, %v2223
        %2225 = vdwg.mxu0
        %2226 = vmatprep.subr.bf16.mxu0 0
        %2227 = vmatpush1.bf16.msra.mxu0 0
        %2228 = vmatprep.subr.bf16.mxu0 0
        %2229 = vmatpush1.bf16.msra.mxu0 0
        %2230 = vmatprep.subr.bf16.mxu0 0
        %2231 = vmatpush1.bf16.msra.mxu0 0
        %2232 = vmatprep.subr.bf16.mxu0 0
        %2233 = vmatpush1.bf16.msra.mxu0 0
        %2234 = vmatprep.subr.bf16.mxu0 0
        %2235 = vmatpush1.bf16.msra.mxu0 0
        %2236 = vmatprep.subr.bf16.mxu0 0
        %2237 = vmatpush1.bf16.msra.mxu0 0
        %2238 = vmatprep.subr.bf16.mxu0 %v2012
        %2239 = vmatpush1.bf16.msra.mxu0 %v2011
        %2240 = vmatprep.subr.bf16.mxu0 %v1996
        %2241 = vmatpush1.bf16.msra.mxu0 %v1995
        %2242 = vmatprep.subr.bf16.mxu0 0
        %2243 = vmatpush2.bf16.msra.mxu0 0
        %2244 = vmatprep.subr.bf16.mxu0 0
        %2245 = vmatpush2.bf16.msra.mxu0 0
        %2246 = vmatprep.subr.bf16.mxu0 0
        %2247 = vmatpush2.bf16.msra.mxu0 0
        %2248 = vmatprep.subr.bf16.mxu0 0
        %2249 = vmatpush2.bf16.msra.mxu0 0
        %2250 = vmatprep.subr.bf16.mxu0 0
        %2251 = vmatpush2.bf16.msra.mxu0 0
        %2252 = vmatprep.subr.bf16.mxu0 0
        %2253 = vmatpush2.bf16.msra.mxu0 0
        %2254 = vmatprep.subr.bf16.mxu0 0
        %2255 = vmatpush2.bf16.msra.mxu0 0
        %2256 = vmatprep.subr.bf16.mxu0 0
        %2257 = vmatpush2.bf16.msra.mxu0 0
        %2258 = vmatprep.mubr.bf16.mxu0 0
        %2259 = vmatmul.mubr.bf16.gmra.mxu0 %v2052
        %v2260 = vpop.f32.mrf.mxu0
        %v2261 = vadd.f32 %v1846, %v2260
        %v2262 = vpop.f32.mrf.mxu0
        %v2263 = vadd.f32 %v1850, %v2262
        %v2264 = vpop.f32.mrf.mxu0
        %v2265 = vadd.f32 %v1846, %v2264
        %v2266 = vpop.f32.mrf.mxu0
        %v2267 = vadd.f32 %v1850, %v2266
        %2268 = vdwg.mxu0
        %2269 = vmatprep.subr.bf16.mxu0 0
        %2270 = vmatpush1.bf16.msra.mxu0 0
        %2271 = vmatprep.subr.bf16.mxu0 0
        %2272 = vmatpush1.bf16.msra.mxu0 0
        %2273 = vmatprep.subr.bf16.mxu0 0
        %2274 = vmatpush1.bf16.msra.mxu0 0
        %2275 = vmatprep.subr.bf16.mxu0 0
        %2276 = vmatpush1.bf16.msra.mxu0 0
        %2277 = vmatprep.subr.bf16.mxu0 0
        %2278 = vmatpush1.bf16.msra.mxu0 0
        %2279 = vmatprep.subr.bf16.mxu0 0
        %2280 = vmatpush1.bf16.msra.mxu0 0
        %2281 = vmatprep.subr.bf16.mxu0 %v2014
        %2282 = vmatpush1.bf16.msra.mxu0 %v2013
        %2283 = vmatprep.subr.bf16.mxu0 %v1998
        %2284 = vmatpush1.bf16.msra.mxu0 %v1997
        %2285 = vmatprep.subr.bf16.mxu0 0
        %2286 = vmatpush2.bf16.msra.mxu0 0
        %2287 = vmatprep.subr.bf16.mxu0 0
        %2288 = vmatpush2.bf16.msra.mxu0 0
        %2289 = vmatprep.subr.bf16.mxu0 0
        %2290 = vmatpush2.bf16.msra.mxu0 0
        %2291 = vmatprep.subr.bf16.mxu0 0
        %2292 = vmatpush2.bf16.msra.mxu0 0
        %2293 = vmatprep.subr.bf16.mxu0 0
        %2294 = vmatpush2.bf16.msra.mxu0 0
        %2295 = vmatprep.subr.bf16.mxu0 0
        %2296 = vmatpush2.bf16.msra.mxu0 0
        %2297 = vmatprep.subr.bf16.mxu0 0
        %2298 = vmatpush2.bf16.msra.mxu0 0
        %2299 = vmatprep.subr.bf16.mxu0 0
        %2300 = vmatpush2.bf16.msra.mxu0 0
        %2301 = vmatprep.mubr.bf16.mxu0 0
        %2302 = vmatmul.mubr.bf16.gmra.mxu0 %v2052
        %v2303 = vpop.f32.mrf.mxu0
        %v2304 = vadd.f32 %v1854, %v2303
        %v2305 = vpop.f32.mrf.mxu0
        %v2306 = vadd.f32 %v1858, %v2305
        %v2307 = vpop.f32.mrf.mxu0
        %v2308 = vadd.f32 %v1854, %v2307
        %v2309 = vpop.f32.mrf.mxu0
        %v2310 = vadd.f32 %v1858, %v2309
        %2311 = vdwg.mxu0
        %2312 = vmatprep.subr.bf16.mxu0 0
        %2313 = vmatpush1.bf16.msra.mxu0 0
        %2314 = vmatprep.subr.bf16.mxu0 0
        %2315 = vmatpush1.bf16.msra.mxu0 0
        %2316 = vmatprep.subr.bf16.mxu0 0
        %2317 = vmatpush1.bf16.msra.mxu0 0
        %2318 = vmatprep.subr.bf16.mxu0 0
        %2319 = vmatpush1.bf16.msra.mxu0 0
        %2320 = vmatprep.subr.bf16.mxu0 0
        %2321 = vmatpush1.bf16.msra.mxu0 0
        %2322 = vmatprep.subr.bf16.mxu0 0
        %2323 = vmatpush1.bf16.msra.mxu0 0
        %2324 = vmatprep.subr.bf16.mxu0 %v2016
        %2325 = vmatpush1.bf16.msra.mxu0 %v2015
        %2326 = vmatprep.subr.bf16.mxu0 %v2000
        %2327 = vmatpush1.bf16.msra.mxu0 %v1999
        %2328 = vmatprep.subr.bf16.mxu0 0
        %2329 = vmatpush2.bf16.msra.mxu0 0
        %2330 = vmatprep.subr.bf16.mxu0 0
        %2331 = vmatpush2.bf16.msra.mxu0 0
        %2332 = vmatprep.subr.bf16.mxu0 0
        %2333 = vmatpush2.bf16.msra.mxu0 0
        %2334 = vmatprep.subr.bf16.mxu0 0
        %2335 = vmatpush2.bf16.msra.mxu0 0
        %2336 = vmatprep.subr.bf16.mxu0 0
        %2337 = vmatpush2.bf16.msra.mxu0 0
        %2338 = vmatprep.subr.bf16.mxu0 0
        %2339 = vmatpush2.bf16.msra.mxu0 0
        %2340 = vmatprep.subr.bf16.mxu0 0
        %2341 = vmatpush2.bf16.msra.mxu0 0
        %2342 = vmatprep.subr.bf16.mxu0 0
        %2343 = vmatpush2.bf16.msra.mxu0 0
        %2344 = vmatprep.mubr.bf16.mxu0 0
        %2345 = vmatmul.mubr.bf16.gmra.mxu0 %v2052
        %v2346 = vpop.f32.mrf.mxu0
        %v2347 = vadd.f32 %v1862, %v2346
        %v2348 = vpop.f32.mrf.mxu0
        %v2349 = vadd.f32 %v1866, %v2348
        %v2350 = vpop.f32.mrf.mxu0
        %v2351 = vadd.f32 %v1862, %v2350
        %v2352 = vpop.f32.mrf.mxu0
        %v2353 = vadd.f32 %v1866, %v2352
        %2354 = vdwg.mxu0
        %2355 = vmatprep.subr.bf16.mxu0 0
        %2356 = vmatpush1.bf16.msra.mxu0 0
        %2357 = vmatprep.subr.bf16.mxu0 0
        %2358 = vmatpush1.bf16.msra.mxu0 0
        %2359 = vmatprep.subr.bf16.mxu0 0
        %2360 = vmatpush1.bf16.msra.mxu0 0
        %2361 = vmatprep.subr.bf16.mxu0 0
        %2362 = vmatpush1.bf16.msra.mxu0 0
        %2363 = vmatprep.subr.bf16.mxu0 0
        %2364 = vmatpush1.bf16.msra.mxu0 0
        %2365 = vmatprep.subr.bf16.mxu0 0
        %2366 = vmatpush1.bf16.msra.mxu0 0
        %2367 = vmatprep.subr.bf16.mxu0 %v2018
        %2368 = vmatpush1.bf16.msra.mxu0 %v2017
        %2369 = vmatprep.subr.bf16.mxu0 %v2002
        %2370 = vmatpush1.bf16.msra.mxu0 %v2001
        %2371 = vmatprep.subr.bf16.mxu0 0
        %2372 = vmatpush2.bf16.msra.mxu0 0
        %2373 = vmatprep.subr.bf16.mxu0 0
        %2374 = vmatpush2.bf16.msra.mxu0 0
        %2375 = vmatprep.subr.bf16.mxu0 0
        %2376 = vmatpush2.bf16.msra.mxu0 0
        %2377 = vmatprep.subr.bf16.mxu0 0
        %2378 = vmatpush2.bf16.msra.mxu0 0
        %2379 = vmatprep.subr.bf16.mxu0 0
        %2380 = vmatpush2.bf16.msra.mxu0 0
        %2381 = vmatprep.subr.bf16.mxu0 0
        %2382 = vmatpush2.bf16.msra.mxu0 0
        %2383 = vmatprep.subr.bf16.mxu0 0
        %2384 = vmatpush2.bf16.msra.mxu0 0
        %2385 = vmatprep.subr.bf16.mxu0 0
        %2386 = vmatpush2.bf16.msra.mxu0 0
        %2387 = vmatprep.mubr.bf16.mxu0 0
        %2388 = vmatmul.mubr.bf16.gmra.mxu0 %v2052
        %v2389 = vpop.f32.mrf.mxu0
        %v2390 = vadd.f32 %v1870, %v2389
        %v2391 = vpop.f32.mrf.mxu0
        %v2392 = vadd.f32 %v1874, %v2391
        %v2393 = vpop.f32.mrf.mxu0
        %v2394 = vadd.f32 %v1870, %v2393
        %v2395 = vpop.f32.mrf.mxu0
        %v2396 = vadd.f32 %v1874, %v2395
        %2397 = vdwg.mxu0
        %v2398 = vmax.f32 %v2089, 0.0
        %v2399 = vmax.f32 %v2091, 0.0
        %v2400 = vmax.f32 %v2132, 0.0
        %v2401 = vmax.f32 %v2134, 0.0
        %v2402 = vmax.f32 %v2175, 0.0
        %v2403 = vmax.f32 %v2177, 0.0
        %v2404 = vmax.f32 %v2218, 0.0
        %v2405 = vmax.f32 %v2220, 0.0
        %v2406 = vmax.f32 %v2261, 0.0
        %v2407 = vmax.f32 %v2263, 0.0
        %v2408 = vmax.f32 %v2304, 0.0
        %v2409 = vmax.f32 %v2306, 0.0
        %v2410 = vmax.f32 %v2347, 0.0
        %v2411 = vmax.f32 %v2349, 0.0
        %v2412 = vmax.f32 %v2390, 0.0
        %v2413 = vmax.f32 %v2392, 0.0
        %v2414 = vmax.f32 %v2093, 0.0
        %v2415 = vmax.f32 %v2095, 0.0
        %v2416 = vmax.f32 %v2136, 0.0
        %v2417 = vmax.f32 %v2138, 0.0
        %v2418 = vmax.f32 %v2179, 0.0
        %v2419 = vmax.f32 %v2181, 0.0
        %v2420 = vmax.f32 %v2222, 0.0
        %v2421 = vmax.f32 %v2224, 0.0
        %v2422 = vmax.f32 %v2265, 0.0
        %v2423 = vmax.f32 %v2267, 0.0
        %v2424 = vmax.f32 %v2308, 0.0
        %v2425 = vmax.f32 %v2310, 0.0
        %v2426 = vmax.f32 %v2351, 0.0
        %v2427 = vmax.f32 %v2353, 0.0
        %v2428 = vmax.f32 %v2394, 0.0
        %v2429 = vmax.f32 %v2396, 0.0
        %v2430 = vpack.c.bf16 %v2414, %v2398
        %v2431 = vpack.c.bf16 %v2415, %v2399
        %v2432 = vpack.c.bf16 %v2416, %v2400
        %v2433 = vpack.c.bf16 %v2417, %v2401
        %v2434 = vpack.c.bf16 %v2418, %v2402
        %v2435 = vpack.c.bf16 %v2419, %v2403
        %v2436 = vpack.c.bf16 %v2420, %v2404
        %v2437 = vpack.c.bf16 %v2421, %v2405
        %v2438 = vpack.c.bf16 %v2422, %v2406
        %v2439 = vpack.c.bf16 %v2423, %v2407
        %v2440 = vpack.c.bf16 %v2424, %v2408
        %v2441 = vpack.c.bf16 %v2425, %v2409
        %v2442 = vpack.c.bf16 %v2426, %v2410
        %v2443 = vpack.c.bf16 %v2427, %v2411
        %v2444 = vpack.c.bf16 %v2428, %v2412
        %v2445 = vpack.c.bf16 %v2429, %v2413
        %v2446 = vld [vmem:[%s646] sm:$0xf]
        %v2447 = vld [vmem:[%s646 + $0x4] sm:$0xf]
        %v2448 = vld [vmem:[%s646 + $0x8] sm:$0xf]
        %v2449 = vld [vmem:[%s646 + $0xc] sm:$0xf]
        %v2450 = vld [vmem:[%s646 + $0x10] sm:$0xf]
        %v2451 = vld [vmem:[%s646 + $0x14] sm:$0xf]
        %v2452 = vld [vmem:[%s646 + $0x18] sm:$0xf]
        %v2453 = vld [vmem:[%s646 + $0x1c] sm:$0xf]
        %v2454 = vld [vmem:[%s646 + $0x20] sm:$0xf]
        %v2455 = vld [vmem:[%s646 + $0x24] sm:$0xf]
        %v2456 = vld [vmem:[%s646 + $0x28] sm:$0xf]
        %v2457 = vld [vmem:[%s646 + $0x2c] sm:$0xf]
        %v2458 = vld [vmem:[%s646 + $0x30] sm:$0xf]
        %v2459 = vld [vmem:[%s646 + $0x34] sm:$0xf]
        %v2460 = vld [vmem:[%s646 + $0x38] sm:$0xf]
        %v2461 = vld [vmem:[%s646 + $0x3c] sm:$0xf]
        %v2462 = vld [vmem:[%s646 + $0x40] sm:$0xf]
        %v2463 = vld [vmem:[%s646 + $0x44] sm:$0xf]
        %v2464 = vld [vmem:[%s646 + $0x48] sm:$0xf]
        %v2465 = vld [vmem:[%s646 + $0x4c] sm:$0xf]
        %v2466 = vld [vmem:[%s646 + $0x50] sm:$0xf]
        %v2467 = vld [vmem:[%s646 + $0x54] sm:$0xf]
        %v2468 = vld [vmem:[%s646 + $0x58] sm:$0xf]
        %v2469 = vld [vmem:[%s646 + $0x5c] sm:$0xf]
        %v2470 = vld [vmem:[%s646 + $0x60] sm:$0xf]
        %v2471 = vld [vmem:[%s646 + $0x64] sm:$0xf]
        %v2472 = vld [vmem:[%s646 + $0x68] sm:$0xf]
        %v2473 = vld [vmem:[%s646 + $0x6c] sm:$0xf]
        %v2474 = vld [vmem:[%s646 + $0x70] sm:$0xf]
        %v2475 = vld [vmem:[%s646 + $0x74] sm:$0xf]
        %v2476 = vld [vmem:[%s646 + $0x78] sm:$0xf]
        %v2477 = vld [vmem:[%s646 + $0x7c] sm:$0xf]
        %v2478 = vld [vmem:[%s646 + $0x80] sm:$0xf]
        %v2479 = vld [vmem:[%s646 + $0x84] sm:$0xf]
        %v2480 = vld [vmem:[%s646 + $0x88] sm:$0xf]
        %v2481 = vld [vmem:[%s646 + $0x8c] sm:$0xf]
        %v2482 = vld [vmem:[%s646 + $0x90] sm:$0xf]
        %v2483 = vld [vmem:[%s646 + $0x94] sm:$0xf]
        %v2484 = vld [vmem:[%s646 + $0x98] sm:$0xf]
        %v2485 = vld [vmem:[%s646 + $0x9c] sm:$0xf]
        %v2486 = vld [vmem:[%s646 + $0xa0] sm:$0xf]
        %v2487 = vld [vmem:[%s646 + $0xa4] sm:$0xf]
        %v2488 = vld [vmem:[%s646 + $0xa8] sm:$0xf]
        %v2489 = vld [vmem:[%s646 + $0xac] sm:$0xf]
        %v2490 = vld [vmem:[%s646 + $0xb0] sm:$0xf]
        %v2491 = vld [vmem:[%s646 + $0xb4] sm:$0xf]
        %v2492 = vld [vmem:[%s646 + $0xb8] sm:$0xf]
        %v2493 = vld [vmem:[%s646 + $0xbc] sm:$0xf]
        %v2494 = vld [vmem:[%s646 + $0xc0] sm:$0xf]
        %v2495 = vld [vmem:[%s646 + $0xc4] sm:$0xf]
        %v2496 = vld [vmem:[%s646 + $0xc8] sm:$0xf]
        %v2497 = vld [vmem:[%s646 + $0xcc] sm:$0xf]
        %v2498 = vld [vmem:[%s646 + $0xd0] sm:$0xf]
        %v2499 = vld [vmem:[%s646 + $0xd4] sm:$0xf]
        %v2500 = vld [vmem:[%s646 + $0xd8] sm:$0xf]
        %v2501 = vld [vmem:[%s646 + $0xdc] sm:$0xf]
        %v2502 = vld [vmem:[%s646 + $0xe0] sm:$0xf]
        %v2503 = vld [vmem:[%s646 + $0xe4] sm:$0xf]
        %v2504 = vld [vmem:[%s646 + $0xe8] sm:$0xf]
        %v2505 = vld [vmem:[%s646 + $0xec] sm:$0xf]
        %v2506 = vld [vmem:[%s646 + $0xf0] sm:$0xf]
        %v2507 = vld [vmem:[%s646 + $0xf4] sm:$0xf]
        %v2508 = vld [vmem:[%s646 + $0xf8] sm:$0xf]
        %v2509 = vld [vmem:[%s646 + $0xfc] sm:$0xf]
        %v2510 = vld [vmem:[%s646 + $0x100] sm:$0xf]
        %v2511 = vld [vmem:[%s646 + $0x104] sm:$0xf]
        %v2512 = vld [vmem:[%s646 + $0x108] sm:$0xf]
        %v2513 = vld [vmem:[%s646 + $0x10c] sm:$0xf]
        %v2514 = vld [vmem:[%s646 + $0x110] sm:$0xf]
        %v2515 = vld [vmem:[%s646 + $0x114] sm:$0xf]
        %v2516 = vld [vmem:[%s646 + $0x118] sm:$0xf]
        %v2517 = vld [vmem:[%s646 + $0x11c] sm:$0xf]
        %v2518 = vld [vmem:[%s646 + $0x120] sm:$0xf]
        %v2519 = vld [vmem:[%s646 + $0x124] sm:$0xf]
        %v2520 = vld [vmem:[%s646 + $0x128] sm:$0xf]
        %v2521 = vld [vmem:[%s646 + $0x12c] sm:$0xf]
        %v2522 = vld [vmem:[%s646 + $0x130] sm:$0xf]
        %v2523 = vld [vmem:[%s646 + $0x134] sm:$0xf]
        %v2524 = vld [vmem:[%s646 + $0x138] sm:$0xf]
        %v2525 = vld [vmem:[%s646 + $0x13c] sm:$0xf]
        %v2526 = vld [vmem:[%s646 + $0x140] sm:$0xf]
        %v2527 = vld [vmem:[%s646 + $0x144] sm:$0xf]
        %v2528 = vld [vmem:[%s646 + $0x148] sm:$0xf]
        %v2529 = vld [vmem:[%s646 + $0x14c] sm:$0xf]
        %v2530 = vld [vmem:[%s646 + $0x150] sm:$0xf]
        %v2531 = vld [vmem:[%s646 + $0x154] sm:$0xf]
        %v2532 = vld [vmem:[%s646 + $0x158] sm:$0xf]
        %v2533 = vld [vmem:[%s646 + $0x15c] sm:$0xf]
        %v2534 = vld [vmem:[%s646 + $0x160] sm:$0xf]
        %v2535 = vld [vmem:[%s646 + $0x164] sm:$0xf]
        %v2536 = vld [vmem:[%s646 + $0x168] sm:$0xf]
        %v2537 = vld [vmem:[%s646 + $0x16c] sm:$0xf]
        %v2538 = vld [vmem:[%s646 + $0x170] sm:$0xf]
        %v2539 = vld [vmem:[%s646 + $0x174] sm:$0xf]
        %v2540 = vld [vmem:[%s646 + $0x178] sm:$0xf]
        %v2541 = vld [vmem:[%s646 + $0x17c] sm:$0xf]
        %v2542 = vld [vmem:[%s646 + $0x180] sm:$0xf]
        %v2543 = vld [vmem:[%s646 + $0x184] sm:$0xf]
        %v2544 = vld [vmem:[%s646 + $0x188] sm:$0xf]
        %v2545 = vld [vmem:[%s646 + $0x18c] sm:$0xf]
        %v2546 = vld [vmem:[%s646 + $0x190] sm:$0xf]
        %v2547 = vld [vmem:[%s646 + $0x194] sm:$0xf]
        %v2548 = vld [vmem:[%s646 + $0x198] sm:$0xf]
        %v2549 = vld [vmem:[%s646 + $0x19c] sm:$0xf]
        %v2550 = vld [vmem:[%s646 + $0x1a0] sm:$0xf]
        %v2551 = vld [vmem:[%s646 + $0x1a4] sm:$0xf]
        %v2552 = vld [vmem:[%s646 + $0x1a8] sm:$0xf]
        %v2553 = vld [vmem:[%s646 + $0x1ac] sm:$0xf]
        %v2554 = vld [vmem:[%s646 + $0x1b0] sm:$0xf]
        %v2555 = vld [vmem:[%s646 + $0x1b4] sm:$0xf]
        %v2556 = vld [vmem:[%s646 + $0x1b8] sm:$0xf]
        %v2557 = vld [vmem:[%s646 + $0x1bc] sm:$0xf]
        %v2558 = vld [vmem:[%s646 + $0x1c0] sm:$0xf]
        %v2559 = vld [vmem:[%s646 + $0x1c4] sm:$0xf]
        %v2560 = vld [vmem:[%s646 + $0x1c8] sm:$0xf]
        %v2561 = vld [vmem:[%s646 + $0x1cc] sm:$0xf]
        %v2562 = vld [vmem:[%s646 + $0x1d0] sm:$0xf]
        %v2563 = vld [vmem:[%s646 + $0x1d4] sm:$0xf]
        %v2564 = vld [vmem:[%s646 + $0x1d8] sm:$0xf]
        %v2565 = vld [vmem:[%s646 + $0x1dc] sm:$0xf]
        %v2566 = vld [vmem:[%s646 + $0x1e0] sm:$0xf]
        %v2567 = vld [vmem:[%s646 + $0x1e4] sm:$0xf]
        %v2568 = vld [vmem:[%s646 + $0x1e8] sm:$0xf]
        %v2569 = vld [vmem:[%s646 + $0x1ec] sm:$0xf]
        %v2570 = vld [vmem:[%s646 + $0x1f0] sm:$0xf]
        %v2571 = vld [vmem:[%s646 + $0x1f4] sm:$0xf]
        %v2572 = vld [vmem:[%s646 + $0x1f8] sm:$0xf]
        %v2573 = vld [vmem:[%s646 + $0x1fc] sm:$0xf]
        %v2574 = vld [vmem:[%s646 + $0x200] sm:$0xf]
        %v2575 = vld [vmem:[%s646 + $0x204] sm:$0xf]
        %v2576 = vld [vmem:[%s646 + $0x208] sm:$0xf]
        %v2577 = vld [vmem:[%s646 + $0x20c] sm:$0xf]
        %v2578 = vld [vmem:[%s646 + $0x210] sm:$0xf]
        %v2579 = vld [vmem:[%s646 + $0x214] sm:$0xf]
        %v2580 = vld [vmem:[%s646 + $0x218] sm:$0xf]
        %v2581 = vld [vmem:[%s646 + $0x21c] sm:$0xf]
        %v2582 = vld [vmem:[%s646 + $0x220] sm:$0xf]
        %v2583 = vld [vmem:[%s646 + $0x224] sm:$0xf]
        %v2584 = vld [vmem:[%s646 + $0x228] sm:$0xf]
        %v2585 = vld [vmem:[%s646 + $0x22c] sm:$0xf]
        %v2586 = vld [vmem:[%s646 + $0x230] sm:$0xf]
        %v2587 = vld [vmem:[%s646 + $0x234] sm:$0xf]
        %v2588 = vld [vmem:[%s646 + $0x238] sm:$0xf]
        %v2589 = vld [vmem:[%s646 + $0x23c] sm:$0xf]
        %v2590 = vld [vmem:[%s646 + $0x240] sm:$0xf]
        %v2591 = vld [vmem:[%s646 + $0x244] sm:$0xf]
        %v2592 = vld [vmem:[%s646 + $0x248] sm:$0xf]
        %v2593 = vld [vmem:[%s646 + $0x24c] sm:$0xf]
        %v2594 = vld [vmem:[%s646 + $0x250] sm:$0xf]
        %v2595 = vld [vmem:[%s646 + $0x254] sm:$0xf]
        %v2596 = vld [vmem:[%s646 + $0x258] sm:$0xf]
        %v2597 = vld [vmem:[%s646 + $0x25c] sm:$0xf]
        %v2598 = vld [vmem:[%s646 + $0x260] sm:$0xf]
        %v2599 = vld [vmem:[%s646 + $0x264] sm:$0xf]
        %v2600 = vld [vmem:[%s646 + $0x268] sm:$0xf]
        %v2601 = vld [vmem:[%s646 + $0x26c] sm:$0xf]
        %v2602 = vld [vmem:[%s646 + $0x270] sm:$0xf]
        %v2603 = vld [vmem:[%s646 + $0x274] sm:$0xf]
        %v2604 = vld [vmem:[%s646 + $0x278] sm:$0xf]
        %v2605 = vld [vmem:[%s646 + $0x27c] sm:$0xf]
        %v2606 = vld [vmem:[%s646 + $0x280] sm:$0xf]
        %v2607 = vld [vmem:[%s646 + $0x284] sm:$0xf]
        %v2608 = vld [vmem:[%s646 + $0x288] sm:$0xf]
        %v2609 = vld [vmem:[%s646 + $0x28c] sm:$0xf]
        %v2610 = vld [vmem:[%s646 + $0x290] sm:$0xf]
        %v2611 = vld [vmem:[%s646 + $0x294] sm:$0xf]
        %v2612 = vld [vmem:[%s646 + $0x298] sm:$0xf]
        %v2613 = vld [vmem:[%s646 + $0x29c] sm:$0xf]
        %v2614 = vld [vmem:[%s646 + $0x2a0] sm:$0xf]
        %v2615 = vld [vmem:[%s646 + $0x2a4] sm:$0xf]
        %v2616 = vld [vmem:[%s646 + $0x2a8] sm:$0xf]
        %v2617 = vld [vmem:[%s646 + $0x2ac] sm:$0xf]
        %v2618 = vld [vmem:[%s646 + $0x2b0] sm:$0xf]
        %v2619 = vld [vmem:[%s646 + $0x2b4] sm:$0xf]
        %v2620 = vld [vmem:[%s646 + $0x2b8] sm:$0xf]
        %v2621 = vld [vmem:[%s646 + $0x2bc] sm:$0xf]
        %v2622 = vld [vmem:[%s646 + $0x2c0] sm:$0xf]
        %v2623 = vld [vmem:[%s646 + $0x2c4] sm:$0xf]
        %v2624 = vld [vmem:[%s646 + $0x2c8] sm:$0xf]
        %v2625 = vld [vmem:[%s646 + $0x2cc] sm:$0xf]
        %v2626 = vld [vmem:[%s646 + $0x2d0] sm:$0xf]
        %v2627 = vld [vmem:[%s646 + $0x2d4] sm:$0xf]
        %v2628 = vld [vmem:[%s646 + $0x2d8] sm:$0xf]
        %v2629 = vld [vmem:[%s646 + $0x2dc] sm:$0xf]
        %v2630 = vld [vmem:[%s646 + $0x2e0] sm:$0xf]
        %v2631 = vld [vmem:[%s646 + $0x2e4] sm:$0xf]
        %v2632 = vld [vmem:[%s646 + $0x2e8] sm:$0xf]
        %v2633 = vld [vmem:[%s646 + $0x2ec] sm:$0xf]
        %v2634 = vld [vmem:[%s646 + $0x2f0] sm:$0xf]
        %v2635 = vld [vmem:[%s646 + $0x2f4] sm:$0xf]
        %v2636 = vld [vmem:[%s646 + $0x2f8] sm:$0xf]
        %v2637 = vld [vmem:[%s646 + $0x2fc] sm:$0xf]
        %v2638 = vld [vmem:[%s646 + $0x300] sm:$0xf]
        %v2639 = vld [vmem:[%s646 + $0x304] sm:$0xf]
        %v2640 = vld [vmem:[%s646 + $0x308] sm:$0xf]
        %v2641 = vld [vmem:[%s646 + $0x30c] sm:$0xf]
        %v2642 = vld [vmem:[%s646 + $0x310] sm:$0xf]
        %v2643 = vld [vmem:[%s646 + $0x314] sm:$0xf]
        %v2644 = vld [vmem:[%s646 + $0x318] sm:$0xf]
        %v2645 = vld [vmem:[%s646 + $0x31c] sm:$0xf]
        %v2646 = vld [vmem:[%s646 + $0x320] sm:$0xf]
        %v2647 = vld [vmem:[%s646 + $0x324] sm:$0xf]
        %v2648 = vld [vmem:[%s646 + $0x328] sm:$0xf]
        %v2649 = vld [vmem:[%s646 + $0x32c] sm:$0xf]
        %v2650 = vld [vmem:[%s646 + $0x330] sm:$0xf]
        %v2651 = vld [vmem:[%s646 + $0x334] sm:$0xf]
        %v2652 = vld [vmem:[%s646 + $0x338] sm:$0xf]
        %v2653 = vld [vmem:[%s646 + $0x33c] sm:$0xf]
        %v2654 = vld [vmem:[%s646 + $0x340] sm:$0xf]
        %v2655 = vld [vmem:[%s646 + $0x344] sm:$0xf]
        %v2656 = vld [vmem:[%s646 + $0x348] sm:$0xf]
        %v2657 = vld [vmem:[%s646 + $0x34c] sm:$0xf]
        %v2658 = vld [vmem:[%s646 + $0x350] sm:$0xf]
        %v2659 = vld [vmem:[%s646 + $0x354] sm:$0xf]
        %v2660 = vld [vmem:[%s646 + $0x358] sm:$0xf]
        %v2661 = vld [vmem:[%s646 + $0x35c] sm:$0xf]
        %v2662 = vld [vmem:[%s646 + $0x360] sm:$0xf]
        %v2663 = vld [vmem:[%s646 + $0x364] sm:$0xf]
        %v2664 = vld [vmem:[%s646 + $0x368] sm:$0xf]
        %v2665 = vld [vmem:[%s646 + $0x36c] sm:$0xf]
        %v2666 = vld [vmem:[%s646 + $0x370] sm:$0xf]
        %v2667 = vld [vmem:[%s646 + $0x374] sm:$0xf]
        %v2668 = vld [vmem:[%s646 + $0x378] sm:$0xf]
        %v2669 = vld [vmem:[%s646 + $0x37c] sm:$0xf]
        %v2670 = vld [vmem:[%s646 + $0x380] sm:$0xf]
        %v2671 = vld [vmem:[%s646 + $0x384] sm:$0xf]
        %v2672 = vld [vmem:[%s646 + $0x388] sm:$0xf]
        %v2673 = vld [vmem:[%s646 + $0x38c] sm:$0xf]
        %v2674 = vld [vmem:[%s646 + $0x390] sm:$0xf]
        %v2675 = vld [vmem:[%s646 + $0x394] sm:$0xf]
        %v2676 = vld [vmem:[%s646 + $0x398] sm:$0xf]
        %v2677 = vld [vmem:[%s646 + $0x39c] sm:$0xf]
        %v2678 = vld [vmem:[%s646 + $0x3a0] sm:$0xf]
        %v2679 = vld [vmem:[%s646 + $0x3a4] sm:$0xf]
        %v2680 = vld [vmem:[%s646 + $0x3a8] sm:$0xf]
        %v2681 = vld [vmem:[%s646 + $0x3ac] sm:$0xf]
        %v2682 = vld [vmem:[%s646 + $0x3b0] sm:$0xf]
        %v2683 = vld [vmem:[%s646 + $0x3b4] sm:$0xf]
        %v2684 = vld [vmem:[%s646 + $0x3b8] sm:$0xf]
        %v2685 = vld [vmem:[%s646 + $0x3bc] sm:$0xf]
        %v2686 = vld [vmem:[%s646 + $0x3c0] sm:$0xf]
        %v2687 = vld [vmem:[%s646 + $0x3c4] sm:$0xf]
        %v2688 = vld [vmem:[%s646 + $0x3c8] sm:$0xf]
        %v2689 = vld [vmem:[%s646 + $0x3cc] sm:$0xf]
        %v2690 = vld [vmem:[%s646 + $0x3d0] sm:$0xf]
        %v2691 = vld [vmem:[%s646 + $0x3d4] sm:$0xf]
        %v2692 = vld [vmem:[%s646 + $0x3d8] sm:$0xf]
        %v2693 = vld [vmem:[%s646 + $0x3dc] sm:$0xf]
        %v2694 = vld [vmem:[%s646 + $0x3e0] sm:$0xf]
        %v2695 = vld [vmem:[%s646 + $0x3e4] sm:$0xf]
        %v2696 = vld [vmem:[%s646 + $0x3e8] sm:$0xf]
        %v2697 = vld [vmem:[%s646 + $0x3ec] sm:$0xf]
        %v2698 = vld [vmem:[%s646 + $0x3f0] sm:$0xf]
        %v2699 = vld [vmem:[%s646 + $0x3f4] sm:$0xf]
        %v2700 = vld [vmem:[%s646 + $0x3f8] sm:$0xf]
        %v2701 = vld [vmem:[%s646 + $0x3fc] sm:$0xf]
        %v2702 = vld [vmem:[%s649] sm:$0x1]
        %v2704 = vlaneseq
        %v2705 = vshrl.u32 %v2704, 7
        %v2706 = vsub.s32 0, %v2705
        %v2707 = vrot.slane %v2702, %v2706
        %v2965 = vunpack.c.l.b16 %v2446
        %v2966 = vunpack.c.l.b16 %v2447
        %v2967 = vunpack.c.l.b16 %v2448
        %v2968 = vunpack.c.l.b16 %v2449
        %v2969 = vunpack.c.l.b16 %v2450
        %v2970 = vunpack.c.l.b16 %v2451
        %v2971 = vunpack.c.l.b16 %v2452
        %v2972 = vunpack.c.l.b16 %v2453
        %v2973 = vunpack.c.l.b16 %v2454
        %v2974 = vunpack.c.l.b16 %v2455
        %v2975 = vunpack.c.l.b16 %v2456
        %v2976 = vunpack.c.l.b16 %v2457
        %v2977 = vunpack.c.l.b16 %v2458
        %v2978 = vunpack.c.l.b16 %v2459
        %v2979 = vunpack.c.l.b16 %v2460
        %v2980 = vunpack.c.l.b16 %v2461
        %v2981 = vunpack.c.l.b16 %v2462
        %v2982 = vunpack.c.l.b16 %v2463
        %v2983 = vunpack.c.l.b16 %v2464
        %v2984 = vunpack.c.l.b16 %v2465
        %v2985 = vunpack.c.l.b16 %v2466
        %v2986 = vunpack.c.l.b16 %v2467
        %v2987 = vunpack.c.l.b16 %v2468
        %v2988 = vunpack.c.l.b16 %v2469
        %v2989 = vunpack.c.l.b16 %v2470
        %v2990 = vunpack.c.l.b16 %v2471
        %v2991 = vunpack.c.l.b16 %v2472
        %v2992 = vunpack.c.l.b16 %v2473
        %v2993 = vunpack.c.l.b16 %v2474
        %v2994 = vunpack.c.l.b16 %v2475
        %v2995 = vunpack.c.l.b16 %v2476
        %v2996 = vunpack.c.l.b16 %v2477
        %v2997 = vunpack.c.l.b16 %v2478
        %v2998 = vunpack.c.l.b16 %v2479
        %v2999 = vunpack.c.l.b16 %v2480
        %v3000 = vunpack.c.l.b16 %v2481
        %v3001 = vunpack.c.l.b16 %v2482
        %v3002 = vunpack.c.l.b16 %v2483
        %v3003 = vunpack.c.l.b16 %v2484
        %v3004 = vunpack.c.l.b16 %v2485
        %v3005 = vunpack.c.l.b16 %v2486
        %v3006 = vunpack.c.l.b16 %v2487
        %v3007 = vunpack.c.l.b16 %v2488
        %v3008 = vunpack.c.l.b16 %v2489
        %v3009 = vunpack.c.l.b16 %v2490
        %v3010 = vunpack.c.l.b16 %v2491
        %v3011 = vunpack.c.l.b16 %v2492
        %v3012 = vunpack.c.l.b16 %v2493
        %v3013 = vunpack.c.l.b16 %v2494
        %v3014 = vunpack.c.l.b16 %v2495
        %v3015 = vunpack.c.l.b16 %v2496
        %v3016 = vunpack.c.l.b16 %v2497
        %v3017 = vunpack.c.l.b16 %v2498
        %v3018 = vunpack.c.l.b16 %v2499
        %v3019 = vunpack.c.l.b16 %v2500
        %v3020 = vunpack.c.l.b16 %v2501
        %v3021 = vunpack.c.l.b16 %v2502
        %v3022 = vunpack.c.l.b16 %v2503
        %v3023 = vunpack.c.l.b16 %v2504
        %v3024 = vunpack.c.l.b16 %v2505
        %v3025 = vunpack.c.l.b16 %v2506
        %v3026 = vunpack.c.l.b16 %v2507
        %v3027 = vunpack.c.l.b16 %v2508
        %v3028 = vunpack.c.l.b16 %v2509
        %v3029 = vunpack.c.l.b16 %v2510
        %v3030 = vunpack.c.l.b16 %v2511
        %v3031 = vunpack.c.l.b16 %v2512
        %v3032 = vunpack.c.l.b16 %v2513
        %v3033 = vunpack.c.l.b16 %v2514
        %v3034 = vunpack.c.l.b16 %v2515
        %v3035 = vunpack.c.l.b16 %v2516
        %v3036 = vunpack.c.l.b16 %v2517
        %v3037 = vunpack.c.l.b16 %v2518
        %v3038 = vunpack.c.l.b16 %v2519
        %v3039 = vunpack.c.l.b16 %v2520
        %v3040 = vunpack.c.l.b16 %v2521
        %v3041 = vunpack.c.l.b16 %v2522
        %v3042 = vunpack.c.l.b16 %v2523
        %v3043 = vunpack.c.l.b16 %v2524
        %v3044 = vunpack.c.l.b16 %v2525
        %v3045 = vunpack.c.l.b16 %v2526
        %v3046 = vunpack.c.l.b16 %v2527
        %v3047 = vunpack.c.l.b16 %v2528
        %v3048 = vunpack.c.l.b16 %v2529
        %v3049 = vunpack.c.l.b16 %v2530
        %v3050 = vunpack.c.l.b16 %v2531
        %v3051 = vunpack.c.l.b16 %v2532
        %v3052 = vunpack.c.l.b16 %v2533
        %v3053 = vunpack.c.l.b16 %v2534
        %v3054 = vunpack.c.l.b16 %v2535
        %v3055 = vunpack.c.l.b16 %v2536
        %v3056 = vunpack.c.l.b16 %v2537
        %v3057 = vunpack.c.l.b16 %v2538
        %v3058 = vunpack.c.l.b16 %v2539
        %v3059 = vunpack.c.l.b16 %v2540
        %v3060 = vunpack.c.l.b16 %v2541
        %v3061 = vunpack.c.l.b16 %v2542
        %v3062 = vunpack.c.l.b16 %v2543
        %v3063 = vunpack.c.l.b16 %v2544
        %v3064 = vunpack.c.l.b16 %v2545
        %v3065 = vunpack.c.l.b16 %v2546
        %v3066 = vunpack.c.l.b16 %v2547
        %v3067 = vunpack.c.l.b16 %v2548
        %v3068 = vunpack.c.l.b16 %v2549
        %v3069 = vunpack.c.l.b16 %v2550
        %v3070 = vunpack.c.l.b16 %v2551
        %v3071 = vunpack.c.l.b16 %v2552
        %v3072 = vunpack.c.l.b16 %v2553
        %v3073 = vunpack.c.l.b16 %v2554
        %v3074 = vunpack.c.l.b16 %v2555
        %v3075 = vunpack.c.l.b16 %v2556
        %v3076 = vunpack.c.l.b16 %v2557
        %v3077 = vunpack.c.l.b16 %v2558
        %v3078 = vunpack.c.l.b16 %v2559
        %v3079 = vunpack.c.l.b16 %v2560
        %v3080 = vunpack.c.l.b16 %v2561
        %v3081 = vunpack.c.l.b16 %v2562
        %v3082 = vunpack.c.l.b16 %v2563
        %v3083 = vunpack.c.l.b16 %v2564
        %v3084 = vunpack.c.l.b16 %v2565
        %v3085 = vunpack.c.l.b16 %v2566
        %v3086 = vunpack.c.l.b16 %v2567
        %v3087 = vunpack.c.l.b16 %v2568
        %v3088 = vunpack.c.l.b16 %v2569
        %v3089 = vunpack.c.l.b16 %v2570
        %v3090 = vunpack.c.l.b16 %v2571
        %v3091 = vunpack.c.l.b16 %v2572
        %v3092 = vunpack.c.l.b16 %v2573
        %v3093 = vunpack.c.l.b16 %v2574
        %v3094 = vunpack.c.l.b16 %v2575
        %v3095 = vunpack.c.l.b16 %v2576
        %v3096 = vunpack.c.l.b16 %v2577
        %v3097 = vunpack.c.l.b16 %v2578
        %v3098 = vunpack.c.l.b16 %v2579
        %v3099 = vunpack.c.l.b16 %v2580
        %v3100 = vunpack.c.l.b16 %v2581
        %v3101 = vunpack.c.l.b16 %v2582
        %v3102 = vunpack.c.l.b16 %v2583
        %v3103 = vunpack.c.l.b16 %v2584
        %v3104 = vunpack.c.l.b16 %v2585
        %v3105 = vunpack.c.l.b16 %v2586
        %v3106 = vunpack.c.l.b16 %v2587
        %v3107 = vunpack.c.l.b16 %v2588
        %v3108 = vunpack.c.l.b16 %v2589
        %v3109 = vunpack.c.l.b16 %v2590
        %v3110 = vunpack.c.l.b16 %v2591
        %v3111 = vunpack.c.l.b16 %v2592
        %v3112 = vunpack.c.l.b16 %v2593
        %v3113 = vunpack.c.l.b16 %v2594
        %v3114 = vunpack.c.l.b16 %v2595
        %v3115 = vunpack.c.l.b16 %v2596
        %v3116 = vunpack.c.l.b16 %v2597
        %v3117 = vunpack.c.l.b16 %v2598
        %v3118 = vunpack.c.l.b16 %v2599
        %v3119 = vunpack.c.l.b16 %v2600
        %v3120 = vunpack.c.l.b16 %v2601
        %v3121 = vunpack.c.l.b16 %v2602
        %v3122 = vunpack.c.l.b16 %v2603
        %v3123 = vunpack.c.l.b16 %v2604
        %v3124 = vunpack.c.l.b16 %v2605
        %v3125 = vunpack.c.l.b16 %v2606
        %v3126 = vunpack.c.l.b16 %v2607
        %v3127 = vunpack.c.l.b16 %v2608
        %v3128 = vunpack.c.l.b16 %v2609
        %v3129 = vunpack.c.l.b16 %v2610
        %v3130 = vunpack.c.l.b16 %v2611
        %v3131 = vunpack.c.l.b16 %v2612
        %v3132 = vunpack.c.l.b16 %v2613
        %v3133 = vunpack.c.l.b16 %v2614
        %v3134 = vunpack.c.l.b16 %v2615
        %v3135 = vunpack.c.l.b16 %v2616
        %v3136 = vunpack.c.l.b16 %v2617
        %v3137 = vunpack.c.l.b16 %v2618
        %v3138 = vunpack.c.l.b16 %v2619
        %v3139 = vunpack.c.l.b16 %v2620
        %v3140 = vunpack.c.l.b16 %v2621
        %v3141 = vunpack.c.l.b16 %v2622
        %v3142 = vunpack.c.l.b16 %v2623
        %v3143 = vunpack.c.l.b16 %v2624
        %v3144 = vunpack.c.l.b16 %v2625
        %v3145 = vunpack.c.l.b16 %v2626
        %v3146 = vunpack.c.l.b16 %v2627
        %v3147 = vunpack.c.l.b16 %v2628
        %v3148 = vunpack.c.l.b16 %v2629
        %v3149 = vunpack.c.l.b16 %v2630
        %v3150 = vunpack.c.l.b16 %v2631
        %v3151 = vunpack.c.l.b16 %v2632
        %v3152 = vunpack.c.l.b16 %v2633
        %v3153 = vunpack.c.l.b16 %v2634
        %v3154 = vunpack.c.l.b16 %v2635
        %v3155 = vunpack.c.l.b16 %v2636
        %v3156 = vunpack.c.l.b16 %v2637
        %v3157 = vunpack.c.l.b16 %v2638
        %v3158 = vunpack.c.l.b16 %v2639
        %v3159 = vunpack.c.l.b16 %v2640
        %v3160 = vunpack.c.l.b16 %v2641
        %v3161 = vunpack.c.l.b16 %v2642
        %v3162 = vunpack.c.l.b16 %v2643
        %v3163 = vunpack.c.l.b16 %v2644
        %v3164 = vunpack.c.l.b16 %v2645
        %v3165 = vunpack.c.l.b16 %v2646
        %v3166 = vunpack.c.l.b16 %v2647
        %v3167 = vunpack.c.l.b16 %v2648
        %v3168 = vunpack.c.l.b16 %v2649
        %v3169 = vunpack.c.l.b16 %v2650
        %v3170 = vunpack.c.l.b16 %v2651
        %v3171 = vunpack.c.l.b16 %v2652
        %v3172 = vunpack.c.l.b16 %v2653
        %v3173 = vunpack.c.l.b16 %v2654
        %v3174 = vunpack.c.l.b16 %v2655
        %v3175 = vunpack.c.l.b16 %v2656
        %v3176 = vunpack.c.l.b16 %v2657
        %v3177 = vunpack.c.l.b16 %v2658
        %v3178 = vunpack.c.l.b16 %v2659
        %v3179 = vunpack.c.l.b16 %v2660
        %v3180 = vunpack.c.l.b16 %v2661
        %v3181 = vunpack.c.l.b16 %v2662
        %v3182 = vunpack.c.l.b16 %v2663
        %v3183 = vunpack.c.l.b16 %v2664
        %v3184 = vunpack.c.l.b16 %v2665
        %v3185 = vunpack.c.l.b16 %v2666
        %v3186 = vunpack.c.l.b16 %v2667
        %v3187 = vunpack.c.l.b16 %v2668
        %v3188 = vunpack.c.l.b16 %v2669
        %v3189 = vunpack.c.l.b16 %v2670
        %v3190 = vunpack.c.l.b16 %v2671
        %v3191 = vunpack.c.l.b16 %v2672
        %v3192 = vunpack.c.l.b16 %v2673
        %v3193 = vunpack.c.l.b16 %v2674
        %v3194 = vunpack.c.l.b16 %v2675
        %v3195 = vunpack.c.l.b16 %v2676
        %v3196 = vunpack.c.l.b16 %v2677
        %v3197 = vunpack.c.l.b16 %v2678
        %v3198 = vunpack.c.l.b16 %v2679
        %v3199 = vunpack.c.l.b16 %v2680
        %v3200 = vunpack.c.l.b16 %v2681
        %v3201 = vunpack.c.l.b16 %v2682
        %v3202 = vunpack.c.l.b16 %v2683
        %v3203 = vunpack.c.l.b16 %v2684
        %v3204 = vunpack.c.l.b16 %v2685
        %v3205 = vunpack.c.l.b16 %v2686
        %v3206 = vunpack.c.l.b16 %v2687
        %v3207 = vunpack.c.l.b16 %v2688
        %v3208 = vunpack.c.l.b16 %v2689
        %v3209 = vunpack.c.l.b16 %v2690
        %v3210 = vunpack.c.l.b16 %v2691
        %v3211 = vunpack.c.l.b16 %v2692
        %v3212 = vunpack.c.l.b16 %v2693
        %v3213 = vunpack.c.l.b16 %v2694
        %v3214 = vunpack.c.l.b16 %v2695
        %v3215 = vunpack.c.l.b16 %v2696
        %v3216 = vunpack.c.l.b16 %v2697
        %v3217 = vunpack.c.l.b16 %v2698
        %v3218 = vunpack.c.l.b16 %v2699
        %v3219 = vunpack.c.l.b16 %v2700
        %v3220 = vunpack.c.l.b16 %v2701
        %v3221 = vpack.c.b16 %v2966, %v2965
        %v3222 = vpack.c.b16 %v2968, %v2967
        %v3223 = vpack.c.b16 %v2970, %v2969
        %v3224 = vpack.c.b16 %v2972, %v2971
        %v3225 = vpack.c.b16 %v2974, %v2973
        %v3226 = vpack.c.b16 %v2976, %v2975
        %v3227 = vpack.c.b16 %v2978, %v2977
        %v3228 = vpack.c.b16 %v2980, %v2979
        %v3229 = vpack.c.b16 %v2982, %v2981
        %v3230 = vpack.c.b16 %v2984, %v2983
        %v3231 = vpack.c.b16 %v2986, %v2985
        %v3232 = vpack.c.b16 %v2988, %v2987
        %v3233 = vpack.c.b16 %v2990, %v2989
        %v3234 = vpack.c.b16 %v2992, %v2991
        %v3235 = vpack.c.b16 %v2994, %v2993
        %v3236 = vpack.c.b16 %v2996, %v2995
        %v3237 = vpack.c.b16 %v2998, %v2997
        %v3238 = vpack.c.b16 %v3000, %v2999
        %v3239 = vpack.c.b16 %v3002, %v3001
        %v3240 = vpack.c.b16 %v3004, %v3003
        %v3241 = vpack.c.b16 %v3006, %v3005
        %v3242 = vpack.c.b16 %v3008, %v3007
        %v3243 = vpack.c.b16 %v3010, %v3009
        %v3244 = vpack.c.b16 %v3012, %v3011
        %v3245 = vpack.c.b16 %v3014, %v3013
        %v3246 = vpack.c.b16 %v3016, %v3015
        %v3247 = vpack.c.b16 %v3018, %v3017
        %v3248 = vpack.c.b16 %v3020, %v3019
        %v3249 = vpack.c.b16 %v3022, %v3021
        %v3250 = vpack.c.b16 %v3024, %v3023
        %v3251 = vpack.c.b16 %v3026, %v3025
        %v3252 = vpack.c.b16 %v3028, %v3027
        %v3253 = vpack.c.b16 %v3030, %v3029
        %v3254 = vpack.c.b16 %v3032, %v3031
        %v3255 = vpack.c.b16 %v3034, %v3033
        %v3256 = vpack.c.b16 %v3036, %v3035
        %v3257 = vpack.c.b16 %v3038, %v3037
        %v3258 = vpack.c.b16 %v3040, %v3039
        %v3259 = vpack.c.b16 %v3042, %v3041
        %v3260 = vpack.c.b16 %v3044, %v3043
        %v3261 = vpack.c.b16 %v3046, %v3045
        %v3262 = vpack.c.b16 %v3048, %v3047
        %v3263 = vpack.c.b16 %v3050, %v3049
        %v3264 = vpack.c.b16 %v3052, %v3051
        %v3265 = vpack.c.b16 %v3054, %v3053
        %v3266 = vpack.c.b16 %v3056, %v3055
        %v3267 = vpack.c.b16 %v3058, %v3057
        %v3268 = vpack.c.b16 %v3060, %v3059
        %v3269 = vpack.c.b16 %v3062, %v3061
        %v3270 = vpack.c.b16 %v3064, %v3063
        %v3271 = vpack.c.b16 %v3066, %v3065
        %v3272 = vpack.c.b16 %v3068, %v3067
        %v3273 = vpack.c.b16 %v3070, %v3069
        %v3274 = vpack.c.b16 %v3072, %v3071
        %v3275 = vpack.c.b16 %v3074, %v3073
        %v3276 = vpack.c.b16 %v3076, %v3075
        %v3277 = vpack.c.b16 %v3078, %v3077
        %v3278 = vpack.c.b16 %v3080, %v3079
        %v3279 = vpack.c.b16 %v3082, %v3081
        %v3280 = vpack.c.b16 %v3084, %v3083
        %v3281 = vpack.c.b16 %v3086, %v3085
        %v3282 = vpack.c.b16 %v3088, %v3087
        %v3283 = vpack.c.b16 %v3090, %v3089
        %v3284 = vpack.c.b16 %v3092, %v3091
        %v3285 = vpack.c.b16 %v3094, %v3093
        %v3286 = vpack.c.b16 %v3096, %v3095
        %v3287 = vpack.c.b16 %v3098, %v3097
        %v3288 = vpack.c.b16 %v3100, %v3099
        %v3289 = vpack.c.b16 %v3102, %v3101
        %v3290 = vpack.c.b16 %v3104, %v3103
        %v3291 = vpack.c.b16 %v3106, %v3105
        %v3292 = vpack.c.b16 %v3108, %v3107
        %v3293 = vpack.c.b16 %v3110, %v3109
        %v3294 = vpack.c.b16 %v3112, %v3111
        %v3295 = vpack.c.b16 %v3114, %v3113
        %v3296 = vpack.c.b16 %v3116, %v3115
        %v3297 = vpack.c.b16 %v3118, %v3117
        %v3298 = vpack.c.b16 %v3120, %v3119
        %v3299 = vpack.c.b16 %v3122, %v3121
        %v3300 = vpack.c.b16 %v3124, %v3123
        %v3301 = vpack.c.b16 %v3126, %v3125
        %v3302 = vpack.c.b16 %v3128, %v3127
        %v3303 = vpack.c.b16 %v3130, %v3129
        %v3304 = vpack.c.b16 %v3132, %v3131
        %v3305 = vpack.c.b16 %v3134, %v3133
        %v3306 = vpack.c.b16 %v3136, %v3135
        %v3307 = vpack.c.b16 %v3138, %v3137
        %v3308 = vpack.c.b16 %v3140, %v3139
        %v3309 = vpack.c.b16 %v3142, %v3141
        %v3310 = vpack.c.b16 %v3144, %v3143
        %v3311 = vpack.c.b16 %v3146, %v3145
        %v3312 = vpack.c.b16 %v3148, %v3147
        %v3313 = vpack.c.b16 %v3150, %v3149
        %v3314 = vpack.c.b16 %v3152, %v3151
        %v3315 = vpack.c.b16 %v3154, %v3153
        %v3316 = vpack.c.b16 %v3156, %v3155
        %v3317 = vpack.c.b16 %v3158, %v3157
        %v3318 = vpack.c.b16 %v3160, %v3159
        %v3319 = vpack.c.b16 %v3162, %v3161
        %v3320 = vpack.c.b16 %v3164, %v3163
        %v3321 = vpack.c.b16 %v3166, %v3165
        %v3322 = vpack.c.b16 %v3168, %v3167
        %v3323 = vpack.c.b16 %v3170, %v3169
        %v3324 = vpack.c.b16 %v3172, %v3171
        %v3325 = vpack.c.b16 %v3174, %v3173
        %v3326 = vpack.c.b16 %v3176, %v3175
        %v3327 = vpack.c.b16 %v3178, %v3177
        %v3328 = vpack.c.b16 %v3180, %v3179
        %v3329 = vpack.c.b16 %v3182, %v3181
        %v3330 = vpack.c.b16 %v3184, %v3183
        %v3331 = vpack.c.b16 %v3186, %v3185
        %v3332 = vpack.c.b16 %v3188, %v3187
        %v3333 = vpack.c.b16 %v3190, %v3189
        %v3334 = vpack.c.b16 %v3192, %v3191
        %v3335 = vpack.c.b16 %v3194, %v3193
        %v3336 = vpack.c.b16 %v3196, %v3195
        %v3337 = vpack.c.b16 %v3198, %v3197
        %v3338 = vpack.c.b16 %v3200, %v3199
        %v3339 = vpack.c.b16 %v3202, %v3201
        %v3340 = vpack.c.b16 %v3204, %v3203
        %v3341 = vpack.c.b16 %v3206, %v3205
        %v3342 = vpack.c.b16 %v3208, %v3207
        %v3343 = vpack.c.b16 %v3210, %v3209
        %v3344 = vpack.c.b16 %v3212, %v3211
        %v3345 = vpack.c.b16 %v3214, %v3213
        %v3346 = vpack.c.b16 %v3216, %v3215
        %v3347 = vpack.c.b16 %v3218, %v3217
        %v3348 = vpack.c.b16 %v3220, %v3219
        %3477 = vmatprep.subr.bf16.mxu0 0
        %3478 = vmatpush1.bf16.msra.mxu0 %v3228
        %3479 = vmatprep.subr.bf16.mxu0 0
        %3480 = vmatpush1.bf16.msra.mxu0 %v3227
        %3481 = vmatprep.subr.bf16.mxu0 0
        %3482 = vmatpush1.bf16.msra.mxu0 %v3226
        %3483 = vmatprep.subr.bf16.mxu0 0
        %3484 = vmatpush1.bf16.msra.mxu0 %v3225
        %3485 = vmatprep.subr.bf16.mxu0 0
        %3486 = vmatpush1.bf16.msra.mxu0 %v3224
        %3487 = vmatprep.subr.bf16.mxu0 0
        %3488 = vmatpush1.bf16.msra.mxu0 %v3223
        %3489 = vmatprep.subr.bf16.mxu0 0
        %3490 = vmatpush1.bf16.msra.mxu0 %v3222
        %3491 = vmatprep.subr.bf16.mxu0 0
        %3492 = vmatpush1.bf16.msra.mxu0 %v3221
        %3493 = vmatprep.subr.bf16.mxu0 0
        %3494 = vmatpush2.bf16.msra.mxu0 %v3236
        %3495 = vmatprep.subr.bf16.mxu0 0
        %3496 = vmatpush2.bf16.msra.mxu0 %v3235
        %3497 = vmatprep.subr.bf16.mxu0 0
        %3498 = vmatpush2.bf16.msra.mxu0 %v3234
        %3499 = vmatprep.subr.bf16.mxu0 0
        %3500 = vmatpush2.bf16.msra.mxu0 %v3233
        %3501 = vmatprep.subr.bf16.mxu0 0
        %3502 = vmatpush2.bf16.msra.mxu0 %v3232
        %3503 = vmatprep.subr.bf16.mxu0 0
        %3504 = vmatpush2.bf16.msra.mxu0 %v3231
        %3505 = vmatprep.subr.bf16.mxu0 0
        %3506 = vmatpush2.bf16.msra.mxu0 %v3230
        %3507 = vmatprep.subr.bf16.mxu0 0
        %3508 = vmatpush2.bf16.msra.mxu0 %v3229
        %3509 = vmatprep.mubr.bf16.mxu0 %v2431
        %3510 = vmatmul.mubr.bf16.gmra.mxu0 %v2430
        %v3511 = vpop.f32.mrf.mxu0
        %v3512 = vadd.f32 %v2707, %v3511
        %v3513 = vpop.f32.mrf.mxu0
        %v3514 = vpop.f32.mrf.mxu0
        %v3515 = vadd.f32 %v2707, %v3514
        %v3516 = vpop.f32.mrf.mxu0
        %3517 = vdwg.mxu0
        %3518 = vmatprep.subr.bf16.mxu0 0
        %3519 = vmatpush1.bf16.msra.mxu0 %v3244
        %3520 = vmatprep.subr.bf16.mxu0 0
        %3521 = vmatpush1.bf16.msra.mxu0 %v3243
        %3522 = vmatprep.subr.bf16.mxu0 0
        %3523 = vmatpush1.bf16.msra.mxu0 %v3242
        %3524 = vmatprep.subr.bf16.mxu0 0
        %3525 = vmatpush1.bf16.msra.mxu0 %v3241
        %3526 = vmatprep.subr.bf16.mxu0 0
        %3527 = vmatpush1.bf16.msra.mxu0 %v3240
        %3528 = vmatprep.subr.bf16.mxu0 0
        %3529 = vmatpush1.bf16.msra.mxu0 %v3239
        %3530 = vmatprep.subr.bf16.mxu0 0
        %3531 = vmatpush1.bf16.msra.mxu0 %v3238
        %3532 = vmatprep.subr.bf16.mxu0 0
        %3533 = vmatpush1.bf16.msra.mxu0 %v3237
        %3534 = vmatprep.subr.bf16.mxu0 0
        %3535 = vmatpush2.bf16.msra.mxu0 %v3252
        %3536 = vmatprep.subr.bf16.mxu0 0
        %3537 = vmatpush2.bf16.msra.mxu0 %v3251
        %3538 = vmatprep.subr.bf16.mxu0 0
        %3539 = vmatpush2.bf16.msra.mxu0 %v3250
        %3540 = vmatprep.subr.bf16.mxu0 0
        %3541 = vmatpush2.bf16.msra.mxu0 %v3249
        %3542 = vmatprep.subr.bf16.mxu0 0
        %3543 = vmatpush2.bf16.msra.mxu0 %v3248
        %3544 = vmatprep.subr.bf16.mxu0 0
        %3545 = vmatpush2.bf16.msra.mxu0 %v3247
        %3546 = vmatprep.subr.bf16.mxu0 0
        %3547 = vmatpush2.bf16.msra.mxu0 %v3246
        %3548 = vmatprep.subr.bf16.mxu0 0
        %3549 = vmatpush2.bf16.msra.mxu0 %v3245
        %3550 = vmatprep.mubr.bf16.mxu0 %v2433
        %3551 = vmatmul.mubr.bf16.gmra.mxu0 %v2432
        %v3552 = vpop.f32.mrf.mxu0
        %v3553 = vadd.f32 %v3512, %v3552
        %v3554 = vpop.f32.mrf.mxu0
        %v3555 = vpop.f32.mrf.mxu0
        %v3556 = vadd.f32 %v3515, %v3555
        %v3557 = vpop.f32.mrf.mxu0
        %3558 = vdwg.mxu0
        %3559 = vmatprep.subr.bf16.mxu0 0
        %3560 = vmatpush1.bf16.msra.mxu0 %v3260
        %3561 = vmatprep.subr.bf16.mxu0 0
        %3562 = vmatpush1.bf16.msra.mxu0 %v3259
        %3563 = vmatprep.subr.bf16.mxu0 0
        %3564 = vmatpush1.bf16.msra.mxu0 %v3258
        %3565 = vmatprep.subr.bf16.mxu0 0
        %3566 = vmatpush1.bf16.msra.mxu0 %v3257
        %3567 = vmatprep.subr.bf16.mxu0 0
        %3568 = vmatpush1.bf16.msra.mxu0 %v3256
        %3569 = vmatprep.subr.bf16.mxu0 0
        %3570 = vmatpush1.bf16.msra.mxu0 %v3255
        %3571 = vmatprep.subr.bf16.mxu0 0
        %3572 = vmatpush1.bf16.msra.mxu0 %v3254
        %3573 = vmatprep.subr.bf16.mxu0 0
        %3574 = vmatpush1.bf16.msra.mxu0 %v3253
        %3575 = vmatprep.subr.bf16.mxu0 0
        %3576 = vmatpush2.bf16.msra.mxu0 %v3268
        %3577 = vmatprep.subr.bf16.mxu0 0
        %3578 = vmatpush2.bf16.msra.mxu0 %v3267
        %3579 = vmatprep.subr.bf16.mxu0 0
        %3580 = vmatpush2.bf16.msra.mxu0 %v3266
        %3581 = vmatprep.subr.bf16.mxu0 0
        %3582 = vmatpush2.bf16.msra.mxu0 %v3265
        %3583 = vmatprep.subr.bf16.mxu0 0
        %3584 = vmatpush2.bf16.msra.mxu0 %v3264
        %3585 = vmatprep.subr.bf16.mxu0 0
        %3586 = vmatpush2.bf16.msra.mxu0 %v3263
        %3587 = vmatprep.subr.bf16.mxu0 0
        %3588 = vmatpush2.bf16.msra.mxu0 %v3262
        %3589 = vmatprep.subr.bf16.mxu0 0
        %3590 = vmatpush2.bf16.msra.mxu0 %v3261
        %3591 = vmatprep.mubr.bf16.mxu0 %v2435
        %3592 = vmatmul.mubr.bf16.gmra.mxu0 %v2434
        %v3593 = vpop.f32.mrf.mxu0
        %v3594 = vadd.f32 %v3553, %v3593
        %v3595 = vpop.f32.mrf.mxu0
        %v3596 = vpop.f32.mrf.mxu0
        %v3597 = vadd.f32 %v3556, %v3596
        %v3598 = vpop.f32.mrf.mxu0
        %3599 = vdwg.mxu0
        %3600 = vmatprep.subr.bf16.mxu0 0
        %3601 = vmatpush1.bf16.msra.mxu0 %v3276
        %3602 = vmatprep.subr.bf16.mxu0 0
        %3603 = vmatpush1.bf16.msra.mxu0 %v3275
        %3604 = vmatprep.subr.bf16.mxu0 0
        %3605 = vmatpush1.bf16.msra.mxu0 %v3274
        %3606 = vmatprep.subr.bf16.mxu0 0
        %3607 = vmatpush1.bf16.msra.mxu0 %v3273
        %3608 = vmatprep.subr.bf16.mxu0 0
        %3609 = vmatpush1.bf16.msra.mxu0 %v3272
        %3610 = vmatprep.subr.bf16.mxu0 0
        %3611 = vmatpush1.bf16.msra.mxu0 %v3271
        %3612 = vmatprep.subr.bf16.mxu0 0
        %3613 = vmatpush1.bf16.msra.mxu0 %v3270
        %3614 = vmatprep.subr.bf16.mxu0 0
        %3615 = vmatpush1.bf16.msra.mxu0 %v3269
        %3616 = vmatprep.subr.bf16.mxu0 0
        %3617 = vmatpush2.bf16.msra.mxu0 %v3284
        %3618 = vmatprep.subr.bf16.mxu0 0
        %3619 = vmatpush2.bf16.msra.mxu0 %v3283
        %3620 = vmatprep.subr.bf16.mxu0 0
        %3621 = vmatpush2.bf16.msra.mxu0 %v3282
        %3622 = vmatprep.subr.bf16.mxu0 0
        %3623 = vmatpush2.bf16.msra.mxu0 %v3281
        %3624 = vmatprep.subr.bf16.mxu0 0
        %3625 = vmatpush2.bf16.msra.mxu0 %v3280
        %3626 = vmatprep.subr.bf16.mxu0 0
        %3627 = vmatpush2.bf16.msra.mxu0 %v3279
        %3628 = vmatprep.subr.bf16.mxu0 0
        %3629 = vmatpush2.bf16.msra.mxu0 %v3278
        %3630 = vmatprep.subr.bf16.mxu0 0
        %3631 = vmatpush2.bf16.msra.mxu0 %v3277
        %3632 = vmatprep.mubr.bf16.mxu0 %v2437
        %3633 = vmatmul.mubr.bf16.gmra.mxu0 %v2436
        %v3634 = vpop.f32.mrf.mxu0
        %v3635 = vadd.f32 %v3594, %v3634
        %v3636 = vpop.f32.mrf.mxu0
        %v3637 = vpop.f32.mrf.mxu0
        %v3638 = vadd.f32 %v3597, %v3637
        %v3639 = vpop.f32.mrf.mxu0
        %3640 = vdwg.mxu0
        %3641 = vmatprep.subr.bf16.mxu0 0
        %3642 = vmatpush1.bf16.msra.mxu0 %v3292
        %3643 = vmatprep.subr.bf16.mxu0 0
        %3644 = vmatpush1.bf16.msra.mxu0 %v3291
        %3645 = vmatprep.subr.bf16.mxu0 0
        %3646 = vmatpush1.bf16.msra.mxu0 %v3290
        %3647 = vmatprep.subr.bf16.mxu0 0
        %3648 = vmatpush1.bf16.msra.mxu0 %v3289
        %3649 = vmatprep.subr.bf16.mxu0 0
        %3650 = vmatpush1.bf16.msra.mxu0 %v3288
        %3651 = vmatprep.subr.bf16.mxu0 0
        %3652 = vmatpush1.bf16.msra.mxu0 %v3287
        %3653 = vmatprep.subr.bf16.mxu0 0
        %3654 = vmatpush1.bf16.msra.mxu0 %v3286
        %3655 = vmatprep.subr.bf16.mxu0 0
        %3656 = vmatpush1.bf16.msra.mxu0 %v3285
        %3657 = vmatprep.subr.bf16.mxu0 0
        %3658 = vmatpush2.bf16.msra.mxu0 %v3300
        %3659 = vmatprep.subr.bf16.mxu0 0
        %3660 = vmatpush2.bf16.msra.mxu0 %v3299
        %3661 = vmatprep.subr.bf16.mxu0 0
        %3662 = vmatpush2.bf16.msra.mxu0 %v3298
        %3663 = vmatprep.subr.bf16.mxu0 0
        %3664 = vmatpush2.bf16.msra.mxu0 %v3297
        %3665 = vmatprep.subr.bf16.mxu0 0
        %3666 = vmatpush2.bf16.msra.mxu0 %v3296
        %3667 = vmatprep.subr.bf16.mxu0 0
        %3668 = vmatpush2.bf16.msra.mxu0 %v3295
        %3669 = vmatprep.subr.bf16.mxu0 0
        %3670 = vmatpush2.bf16.msra.mxu0 %v3294
        %3671 = vmatprep.subr.bf16.mxu0 0
        %3672 = vmatpush2.bf16.msra.mxu0 %v3293
        %3673 = vmatprep.mubr.bf16.mxu0 %v2439
        %3674 = vmatmul.mubr.bf16.gmra.mxu0 %v2438
        %v3675 = vpop.f32.mrf.mxu0
        %v3676 = vadd.f32 %v3635, %v3675
        %v3677 = vpop.f32.mrf.mxu0
        %v3678 = vpop.f32.mrf.mxu0
        %v3679 = vadd.f32 %v3638, %v3678
        %v3680 = vpop.f32.mrf.mxu0
        %3681 = vdwg.mxu0
        %3682 = vmatprep.subr.bf16.mxu0 0
        %3683 = vmatpush1.bf16.msra.mxu0 %v3308
        %3684 = vmatprep.subr.bf16.mxu0 0
        %3685 = vmatpush1.bf16.msra.mxu0 %v3307
        %3686 = vmatprep.subr.bf16.mxu0 0
        %3687 = vmatpush1.bf16.msra.mxu0 %v3306
        %3688 = vmatprep.subr.bf16.mxu0 0
        %3689 = vmatpush1.bf16.msra.mxu0 %v3305
        %3690 = vmatprep.subr.bf16.mxu0 0
        %3691 = vmatpush1.bf16.msra.mxu0 %v3304
        %3692 = vmatprep.subr.bf16.mxu0 0
        %3693 = vmatpush1.bf16.msra.mxu0 %v3303
        %3694 = vmatprep.subr.bf16.mxu0 0
        %3695 = vmatpush1.bf16.msra.mxu0 %v3302
        %3696 = vmatprep.subr.bf16.mxu0 0
        %3697 = vmatpush1.bf16.msra.mxu0 %v3301
        %3698 = vmatprep.subr.bf16.mxu0 0
        %3699 = vmatpush2.bf16.msra.mxu0 %v3316
        %3700 = vmatprep.subr.bf16.mxu0 0
        %3701 = vmatpush2.bf16.msra.mxu0 %v3315
        %3702 = vmatprep.subr.bf16.mxu0 0
        %3703 = vmatpush2.bf16.msra.mxu0 %v3314
        %3704 = vmatprep.subr.bf16.mxu0 0
        %3705 = vmatpush2.bf16.msra.mxu0 %v3313
        %3706 = vmatprep.subr.bf16.mxu0 0
        %3707 = vmatpush2.bf16.msra.mxu0 %v3312
        %3708 = vmatprep.subr.bf16.mxu0 0
        %3709 = vmatpush2.bf16.msra.mxu0 %v3311
        %3710 = vmatprep.subr.bf16.mxu0 0
        %3711 = vmatpush2.bf16.msra.mxu0 %v3310
        %3712 = vmatprep.subr.bf16.mxu0 0
        %3713 = vmatpush2.bf16.msra.mxu0 %v3309
        %3714 = vmatprep.mubr.bf16.mxu0 %v2441
        %3715 = vmatmul.mubr.bf16.gmra.mxu0 %v2440
        %v3716 = vpop.f32.mrf.mxu0
        %v3717 = vadd.f32 %v3676, %v3716
        %v3718 = vpop.f32.mrf.mxu0
        %v3719 = vpop.f32.mrf.mxu0
        %v3720 = vadd.f32 %v3679, %v3719
        %v3721 = vpop.f32.mrf.mxu0
        %3722 = vdwg.mxu0
        %3723 = vmatprep.subr.bf16.mxu0 0
        %3724 = vmatpush1.bf16.msra.mxu0 %v3324
        %3725 = vmatprep.subr.bf16.mxu0 0
        %3726 = vmatpush1.bf16.msra.mxu0 %v3323
        %3727 = vmatprep.subr.bf16.mxu0 0
        %3728 = vmatpush1.bf16.msra.mxu0 %v3322
        %3729 = vmatprep.subr.bf16.mxu0 0
        %3730 = vmatpush1.bf16.msra.mxu0 %v3321
        %3731 = vmatprep.subr.bf16.mxu0 0
        %3732 = vmatpush1.bf16.msra.mxu0 %v3320
        %3733 = vmatprep.subr.bf16.mxu0 0
        %3734 = vmatpush1.bf16.msra.mxu0 %v3319
        %3735 = vmatprep.subr.bf16.mxu0 0
        %3736 = vmatpush1.bf16.msra.mxu0 %v3318
        %3737 = vmatprep.subr.bf16.mxu0 0
        %3738 = vmatpush1.bf16.msra.mxu0 %v3317
        %3739 = vmatprep.subr.bf16.mxu0 0
        %3740 = vmatpush2.bf16.msra.mxu0 %v3332
        %3741 = vmatprep.subr.bf16.mxu0 0
        %3742 = vmatpush2.bf16.msra.mxu0 %v3331
        %3743 = vmatprep.subr.bf16.mxu0 0
        %3744 = vmatpush2.bf16.msra.mxu0 %v3330
        %3745 = vmatprep.subr.bf16.mxu0 0
        %3746 = vmatpush2.bf16.msra.mxu0 %v3329
        %3747 = vmatprep.subr.bf16.mxu0 0
        %3748 = vmatpush2.bf16.msra.mxu0 %v3328
        %3749 = vmatprep.subr.bf16.mxu0 0
        %3750 = vmatpush2.bf16.msra.mxu0 %v3327
        %3751 = vmatprep.subr.bf16.mxu0 0
        %3752 = vmatpush2.bf16.msra.mxu0 %v3326
        %3753 = vmatprep.subr.bf16.mxu0 0
        %3754 = vmatpush2.bf16.msra.mxu0 %v3325
        %3755 = vmatprep.mubr.bf16.mxu0 %v2443
        %3756 = vmatmul.mubr.bf16.gmra.mxu0 %v2442
        %v3757 = vpop.f32.mrf.mxu0
        %v3758 = vadd.f32 %v3717, %v3757
        %v3759 = vpop.f32.mrf.mxu0
        %v3760 = vpop.f32.mrf.mxu0
        %v3761 = vadd.f32 %v3720, %v3760
        %v3762 = vpop.f32.mrf.mxu0
        %3763 = vdwg.mxu0
        %3764 = vmatprep.subr.bf16.mxu0 0
        %3765 = vmatpush1.bf16.msra.mxu0 %v3340
        %3766 = vmatprep.subr.bf16.mxu0 0
        %3767 = vmatpush1.bf16.msra.mxu0 %v3339
        %3768 = vmatprep.subr.bf16.mxu0 0
        %3769 = vmatpush1.bf16.msra.mxu0 %v3338
        %3770 = vmatprep.subr.bf16.mxu0 0
        %3771 = vmatpush1.bf16.msra.mxu0 %v3337
        %3772 = vmatprep.subr.bf16.mxu0 0
        %3773 = vmatpush1.bf16.msra.mxu0 %v3336
        %3774 = vmatprep.subr.bf16.mxu0 0
        %3775 = vmatpush1.bf16.msra.mxu0 %v3335
        %3776 = vmatprep.subr.bf16.mxu0 0
        %3777 = vmatpush1.bf16.msra.mxu0 %v3334
        %3778 = vmatprep.subr.bf16.mxu0 0
        %3779 = vmatpush1.bf16.msra.mxu0 %v3333
        %3780 = vmatprep.subr.bf16.mxu0 0
        %3781 = vmatpush2.bf16.msra.mxu0 %v3348
        %3782 = vmatprep.subr.bf16.mxu0 0
        %3783 = vmatpush2.bf16.msra.mxu0 %v3347
        %3784 = vmatprep.subr.bf16.mxu0 0
        %3785 = vmatpush2.bf16.msra.mxu0 %v3346
        %3786 = vmatprep.subr.bf16.mxu0 0
        %3787 = vmatpush2.bf16.msra.mxu0 %v3345
        %3788 = vmatprep.subr.bf16.mxu0 0
        %3789 = vmatpush2.bf16.msra.mxu0 %v3344
        %3790 = vmatprep.subr.bf16.mxu0 0
        %3791 = vmatpush2.bf16.msra.mxu0 %v3343
        %3792 = vmatprep.subr.bf16.mxu0 0
        %3793 = vmatpush2.bf16.msra.mxu0 %v3342
        %3794 = vmatprep.subr.bf16.mxu0 0
        %3795 = vmatpush2.bf16.msra.mxu0 %v3341
        %3796 = vmatprep.mubr.bf16.mxu0 %v2445
        %3797 = vmatmul.mubr.bf16.gmra.mxu0 %v2444
        %v3798 = vpop.f32.mrf.mxu0
        %v3799 = vadd.f32 %v3758, %v3798
        %v3800 = vpop.f32.mrf.mxu0
        %v3801 = vpop.f32.mrf.mxu0
        %v3802 = vadd.f32 %v3761, %v3801
        %v3803 = vpop.f32.mrf.mxu0
        %3804 = vdwg.mxu0
        %v3805 = vadd.f32 %v1772, %v3799
        %v3806 = vadd.f32 %v1773, %v3802
        %v3807 = vld [vmem:[%s652] sm:$0x1]
        %v3808 = vld [vmem:[%s655] sm:$0x1]
        %v3809 = vsel %vm692, %v3805, 0.0
        %3810 = vadd.xlane.f32.xlu0 %v3809
        %v3811 = vpop.xlane.xlu0 %3810
        %v3812 = vsel %vm692, %v3806, 0.0
        %3813 = vadd.xlane.f32.xlu0 %v3812
        %v3814 = vpop.xlane.xlu0 %3813
        %v3815 = vmul.f32 %v3811, %v1737
        %v3816 = vmul.f32 %v3814, %v1737
        %v3817 = vsub.f32 %v3805, %v3815
        %v3818 = vsub.f32 %v3806, %v3816
        %v3819 = vmul.f32 %v3817, %v3817
        %v3820 = vmul.f32 %v3818, %v3818
        %v3821 = vsel %vm692, %v3819, 0.0
        %3822 = vadd.xlane.f32.xlu0 %v3821
        %v3823 = vpop.xlane.xlu0 %3822
        %v3824 = vsel %vm692, %v3820, 0.0
        %3825 = vadd.xlane.f32.xlu0 %v3824
        %v3826 = vpop.xlane.xlu0 %3825
        %v3827 = vmul.f32 %v3823, %v1737
        %v3828 = vmul.f32 %v3826, %v1737
        %v3829 = vadd.f32 %v3827, 1e-05
        %v3830 = vadd.f32 %v3828, 1e-05
        %v3831 = vrsqrt.pop %v3829
        %v3832 = vrsqrt.pop %v3830
        %v3833 = vmul.f32 %v3817, %v3831
        %v3834 = vmul.f32 %v3818, %v3832
        %v3836 = vlaneseq
        %v3837 = vshrl.u32 %v3836, 7
        %v3838 = vsub.s32 0, %v3837
        %v3839 = vrot.slane %v3807, %v3838
        %v3841 = vmul.f32 %v3833, %v3839
        %v3842 = vmul.f32 %v3834, %v3839
        %v3844 = vlaneseq
        %v3845 = vshrl.u32 %v3844, 7
        %v3846 = vsub.s32 0, %v3845
        %v3847 = vrot.slane %v3808, %v3846
        %v3849 = vadd.f32 %v3841, %v3847
        %v3850 = vadd.f32 %v3842, %v3847
        %3851 = vst.msk [vmem:[#allocation2] sm:$0xff] %vm692, %v3849
        %3852 = vst.msk [vmem:[#allocation2 + $0x8] sm:$0xff] %vm692, %v3850
        %p3853 = scmp.eq.s32.totalorder %s27, 1
        // Predicated region
        $region85: #{end_to_end_forward.3} parent=79 // pred_check
          %p3854 = pneg %p3853
        $region86: #{end_to_end_forward.3} parent=79 // pred_check_branch
          %3856 = sbr.rel (%p3854) target = $region88
        $region87: #{end_to_end_forward.3} parent=79 // pred_region
          %v3857 = vpack.c.bf16 %v3849, %v3849
          %v3858 = vpack.c.bf16 %v3850, %v3850
          %v3859 = vld [vmem:[%s13] sm:$0xf]
          %v3860 = vld [vmem:[%s13 + $0x4] sm:$0xf]
          %v3861 = vld [vmem:[%s13 + $0x8] sm:$0xf]
          %v3862 = vld [vmem:[%s13 + $0xc] sm:$0xf]
          %v3863 = vld [vmem:[%s14] sm:$0x1]
          %v3865 = vlaneseq
          %v3866 = vshrl.u32 %v3865, 7
          %v3867 = vsub.s32 0, %v3866
          %v3868 = vrot.slane %v3863, %v3867
          %v3872 = vunpack.c.l.b16 %v3857
          %v3873 = vunpack.c.l.b16 %v3858
          %v3874 = vrot.slane %v3873, 7
          %vm3875 = vcmask 1041409
          %v3876 = vsel %vm3875, %v3874, %v3872
          %v3877 = vpack.c.b16 %v3876, %v3876
          %v3882 = vunpack.c.l.b16 %v3859
          %v3883 = vunpack.c.l.b16 %v3860
          %v3884 = vunpack.c.l.b16 %v3861
          %v3885 = vunpack.c.l.b16 %v3862
          %v3886 = vpack.c.b16 %v3883, %v3882
          %v3887 = vpack.c.b16 %v3885, %v3884
          %v3891 = vsel %vm692, %v3877, 0
          %3893 = vmatprep.subr.bf16.mxu0 0
          %3894 = vmatpush1.bf16.msra.mxu0 0
          %3895 = vmatprep.subr.bf16.mxu0 0
          %3896 = vmatpush1.bf16.msra.mxu0 0
          %3897 = vmatprep.subr.bf16.mxu0 0
          %3898 = vmatpush1.bf16.msra.mxu0 0
          %3899 = vmatprep.subr.bf16.mxu0 0
          %3900 = vmatpush1.bf16.msra.mxu0 0
          %3901 = vmatprep.subr.bf16.mxu0 0
          %3902 = vmatpush1.bf16.msra.mxu0 0
          %3903 = vmatprep.subr.bf16.mxu0 0
          %3904 = vmatpush1.bf16.msra.mxu0 0
          %3905 = vmatprep.subr.bf16.mxu0 0
          %3906 = vmatpush1.bf16.msra.mxu0 %v3887
          %3907 = vmatprep.subr.bf16.mxu0 0
          %3908 = vmatpush1.bf16.msra.mxu0 %v3886
          %3909 = vmatprep.subr.bf16.mxu0 0
          %3910 = vmatpush2.bf16.msra.mxu0 0
          %3911 = vmatprep.subr.bf16.mxu0 0
          %3912 = vmatpush2.bf16.msra.mxu0 0
          %3913 = vmatprep.subr.bf16.mxu0 0
          %3914 = vmatpush2.bf16.msra.mxu0 0
          %3915 = vmatprep.subr.bf16.mxu0 0
          %3916 = vmatpush2.bf16.msra.mxu0 0
          %3917 = vmatprep.subr.bf16.mxu0 0
          %3918 = vmatpush2.bf16.msra.mxu0 0
          %3919 = vmatprep.subr.bf16.mxu0 0
          %3920 = vmatpush2.bf16.msra.mxu0 0
          %3921 = vmatprep.subr.bf16.mxu0 0
          %3922 = vmatpush2.bf16.msra.mxu0 0
          %3923 = vmatprep.subr.bf16.mxu0 0
          %3924 = vmatpush2.bf16.msra.mxu0 0
          %3925 = vmatprep.mubr.bf16.mxu0 0
          %3926 = vmatmul.mubr.bf16.gmra.mxu0 %v3891
          %v3927 = vpop.f32.mrf.mxu0
          %v3928 = vadd.f32 %v3868, %v3927
          %v3929 = vpop.f32.mrf.mxu0
          %v3930 = vpop.f32.mrf.mxu0
          %v3931 = vpop.f32.mrf.mxu0
          %3932 = vdwg.mxu0
          %vm3933 = vcmask 33792
          %3934 = vst.msk [vmem:[#allocation3] sm:$0x3] %vm3933, %v3928
        $region88: #{end_to_end_forward.3} parent=79 // pred_fallthru
          _
        // Predicated region
        $region89: #{end_to_end_forward.3} parent=79 // pred_check
          %p3935 = pneg %p415
        $region90: #{end_to_end_forward.3} parent=79 // pred_check_branch
          %3937 = sbr.rel (%p3935) target = $region92
        $region91: #{end_to_end_forward.3} parent=79 // pred_region
          %s3939 = ssub.s32 32, 32
          %3940 = vsyncadd [#allocation4], %s3939
          %s3942 = sshll.u32 [#allocation3], 4
          %s3943 = int_to_ptr.vmem [resolvable:$true] %s3942
          %3945 = dma.vmem_to_hbm [thread:$0]  %s3943, 32, %s15, [#allocation4]
        $region92: #{end_to_end_forward.3} parent=79 // pred_fallthru
          _
        // Predicated region
        $region93: #{end_to_end_forward.3} parent=79 // pred_check
          %p3946 = pneg %p415
        $region94: #{end_to_end_forward.3} parent=79 // pred_check_branch
          %3948 = sbr.rel (%p3946) target = $region96
        $region95: #{end_to_end_forward.3} parent=79 // pred_region
          %3949 = dma.done [#allocation4], 32
        $region96: #{end_to_end_forward.3} parent=79 // pred_fallthru
          _
      $region80: #{end_to_end_forward.3} parent=5 // pred_fallthru
        _
      %p3950 = scmp.le.s32.totalorder 2, %s22
      // Predicated region
      $region97: #{end_to_end_forward.3} parent=5 // pred_check
        %p3951 = pneg %p3950
      $region98: #{end_to_end_forward.3} parent=5 // pred_check_branch
        %3953 = sbr.rel (%p3951) target = $region100
      $region99: #{end_to_end_forward.3} parent=5 // pred_region
        %s3954 = ssub.s32 %s22, 2
      $region100: #{end_to_end_forward.3} parent=5 // pred_fallthru
        _
    $region6: #{end_to_end_forward.3} parent=1 // loop_footer
      %s26 = sadd.s32 1, %s22
    $region7: #{end_to_end_forward.3} parent=1 // loop_footer_branch
      %21 = sbr.rel target = $region3
    $region8: #{end_to_end_forward.3} parent=1 // loop_exit
      _
    %3955 = vsyncpa [#allocation4], 1
    %s3956 = scalar_lea.sflag [#allocation4], 1
    %3957 = vsyncpa %s3956, 1

</llo_original>
